<compile_context>
chip_gen: v6e
topology: v6e:2x2x1
jax: 0.10.0
libtpu: 0.0.40
codegen_flags: <defaults>
</compile_context>

<pallas_src>
from functools import partial

import jax
import jax.numpy as jnp
from jax.experimental import pallas as pl
from jax.experimental.pallas import tpu as pltpu


# ---------------------------------------------------------------------------
# fc (nn.Linear) + ReLU kernel, tiled along the output-feature axis.
# MXU operands are bf16, accumulation + bias + ReLU in f32.
# ---------------------------------------------------------------------------
def _fc_relu_kernel(z_ref, w_ref, b_ref, o_ref):
    acc = jnp.dot(z_ref[...], w_ref[...], preferred_element_type=jnp.float32)
    o_ref[...] = jnp.maximum(acc + b_ref[...], 0.0)


def fc_relu_pallas(z, w_bf16, b, *, tile_f=2048):
    B, LAT = z.shape
    F = w_bf16.shape[1]
    tile_f = min(tile_f, F)
    assert F % tile_f == 0
    cost = pl.CostEstimate(
        flops=2 * B * LAT * F,
        transcendentals=0,
        bytes_accessed=int(B * LAT * 2 + LAT * F * 2 + F * 4 + B * F * 4),
    )
    return pl.pallas_call(
        _fc_relu_kernel,
        out_shape=jax.ShapeDtypeStruct((B, F), jnp.float32),
        grid=(F // tile_f,),
        in_specs=[
            pl.BlockSpec((B, LAT), lambda j: (0, 0)),        # z (resident)
            pl.BlockSpec((LAT, tile_f), lambda j: (0, j)),   # weight tile
            pl.BlockSpec((1, tile_f), lambda j: (0, j)),     # bias tile
        ],
        out_specs=pl.BlockSpec((B, tile_f), lambda j: (0, j)),
        compiler_params=pltpu.CompilerParams(
            dimension_semantics=("parallel",)),
        cost_estimate=cost,
    )(z.astype(jnp.bfloat16), w_bf16, b.reshape(1, F))


# ---------------------------------------------------------------------------
# Fused multi-head self-attention + out_proj + fc_out + sigmoid kernel.
# One grid step per attention-batch item; weights VMEM-resident; all
# contractions on the MXU with bf16 operands / f32 accumulation.
# ---------------------------------------------------------------------------
def _attn_decoder_kernel(x_ref, wqkv_ref, bqkv_ref, wo_ref, bo_ref, wf_ref,
                         bf_ref, o_ref, oall_ref, *, num_heads, head_dim,
                         embed_dim):
    E = embed_dim
    x = x_ref[...].astype(jnp.bfloat16)                         # (L, E)

    # Full-width QKV projection: (L, E) @ (E, 3E) on the MXU.
    qkv = jnp.dot(x, wqkv_ref[...],
                  preferred_element_type=jnp.float32) + bqkv_ref[...]  # (L,3E)

    scale = 1.0 / float(head_dim) ** 0.5

    # Per-head attention; each head's (L, Dh) output lands in its 32-lane slot
    # of the (L, E) VMEM scratch so out_proj below is a single K=128 matmul.
    for h in range(num_heads):                                   # static unroll
        lo = h * head_dim
        qh = (qkv[:, lo:lo + head_dim] * scale).astype(jnp.bfloat16)
        kh = qkv[:, E + lo:E + lo + head_dim].astype(jnp.bfloat16)
        vh = qkv[:, 2 * E + lo:2 * E + lo + head_dim].astype(jnp.bfloat16)

        # scores = qh @ kh^T  (contract the head dim of both operands)
        s = jax.lax.dot_general(qh, kh, (((1,), (1,)), ((), ())),
                                preferred_element_type=jnp.float32)  # (L, L)
        p = jnp.exp(s - jnp.max(s, axis=-1, keepdims=True))
        p = p * pl.reciprocal(jnp.sum(p, axis=-1, keepdims=True), approx=True)

        oall_ref[:, lo:lo + head_dim] = jnp.dot(
            p.astype(jnp.bfloat16), vh, preferred_element_type=jnp.float32)

    # out_proj (K=128) + fc_out + sigmoid, all from the assembled scratch.
    y = jnp.dot(oall_ref[...].astype(jnp.bfloat16), wo_ref[...],
                preferred_element_type=jnp.float32) + bo_ref[...]    # (L, E)
    out = jnp.dot(y.astype(jnp.bfloat16), wf_ref[...],
                  preferred_element_type=jnp.float32) + bf_ref[...]  # (L, FREQ)
    o_ref[...] = jax.nn.sigmoid(out)


def attn_decoder_pallas(x_nle, wqkv, bqkv, wo, bo, wf, bf, *, num_heads):
    B, L, E = x_nle.shape
    FREQ = wf.shape[1]
    head_dim = E // num_heads

    kern = partial(_attn_decoder_kernel, num_heads=num_heads,
                   head_dim=head_dim, embed_dim=E)

    flops_per_b = (2 * L * E * 3 * E                       # qkv projection
                   + 2 * num_heads * L * L * head_dim * 2  # scores + p@v
                   + 2 * L * E * E                         # out_proj
                   + 2 * L * E * FREQ)                     # fc_out
    cost = pl.CostEstimate(
        flops=B * flops_per_b,
        transcendentals=B * (num_heads * L * L + num_heads * L + L * FREQ),
        bytes_accessed=int(B * L * E * 4 + E * 3 * E * 2 + 3 * E * 4
                           + E * E * 2 + E * 4 + E * FREQ * 2 + FREQ * 4
                           + B * L * FREQ * 4),
    )

    return pl.pallas_call(
        kern,
        out_shape=jax.ShapeDtypeStruct((B, L, FREQ), jnp.float32),
        grid=(B,),
        in_specs=[
            pl.BlockSpec((None, L, E), lambda b: (b, 0, 0)),   # x (one item)
            pl.BlockSpec((E, 3 * E), lambda b: (0, 0)),        # W_qkv (bf16)
            pl.BlockSpec((1, 3 * E), lambda b: (0, 0)),        # b_qkv
            pl.BlockSpec((E, E), lambda b: (0, 0)),            # wo (bf16)
            pl.BlockSpec((1, E), lambda b: (0, 0)),            # bo
            pl.BlockSpec((E, FREQ), lambda b: (0, 0)),         # wf (bf16)
            pl.BlockSpec((1, FREQ), lambda b: (0, 0)),         # bf
        ],
        out_specs=pl.BlockSpec((None, L, FREQ), lambda b: (b, 0, 0)),
        scratch_shapes=[pltpu.VMEM((L, E), jnp.float32)],      # per-head outs
        compiler_params=pltpu.CompilerParams(
            dimension_semantics=("parallel",)),
        cost_estimate=cost,
    )(x_nle, wqkv, bqkv.reshape(1, -1), wo, bo.reshape(1, -1),
      wf, bf.reshape(1, -1))


# ---------------------------------------------------------------------------
# Parameters (deterministic synthetic init, PyTorch-default-like uniform)
# Weights stored input-major (x @ W) so the kernels never transpose.
# ---------------------------------------------------------------------------
def init_params(key, latent_dims, n_frames, embed_dim, freq_dim):
    F = n_frames * embed_dim
    E = embed_dim
    ks = jax.random.split(key, 12)

    def uni(k, shape, fan_in):
        bound = 1.0 / float(fan_in) ** 0.5
        return jax.random.uniform(k, shape, jnp.float32, -bound, bound)

    return {
        "fc_w": uni(ks[0], (latent_dims, F), latent_dims),
        "fc_b": uni(ks[1], (F,), latent_dims),
        "wq": uni(ks[2], (E, E), E), "bq": uni(ks[3], (E,), E),
        "wk": uni(ks[4], (E, E), E), "bk": uni(ks[5], (E,), E),
        "wv": uni(ks[6], (E, E), E), "bv": uni(ks[7], (E,), E),
        "wo": uni(ks[8], (E, E), E), "bo": uni(ks[9], (E,), E),
        "wf": uni(ks[10], (E, freq_dim), E), "bf": uni(ks[11], (freq_dim,), E),
    }


# ---------------------------------------------------------------------------
# Forward pass (Pallas) and pure-JAX f32 reference
# ---------------------------------------------------------------------------
def decoder_forward(z, params, *, n_frames, embed_dim, num_heads, freq_dim):
    B = z.shape[0]
    # bf16 MXU operands: weights cast once here; accumulation stays f32.
    fc_w = params["fc_w"].astype(jnp.bfloat16)
    wqkv = jnp.concatenate(
        [params["wq"], params["wk"], params["wv"]], axis=1).astype(jnp.bfloat16)
    bqkv = jnp.concatenate([params["bq"], params["bk"], params["bv"]])
    wo = params["wo"].astype(jnp.bfloat16)
    wf = params["wf"].astype(jnp.bfloat16)

    h = fc_relu_pallas(z, fc_w, params["fc_b"])                  # (B, L*E) f32
    # torch: x.view(n_frames, -1, embed_dim)  -> row-major flat reshape
    x_lne = h.reshape(n_frames, B, embed_dim)                    # (L, N, E)
    x_nle = jnp.transpose(x_lne, (1, 0, 2))                      # (N, L, E)
    out_nlf = attn_decoder_pallas(x_nle, wqkv, bqkv, wo, params["bo"],
                                  wf, params["bf"], num_heads=num_heads)
    out_lnf = jnp.transpose(out_nlf, (1, 0, 2))                  # (L, N, FREQ)
    # torch: x.view(-1, 1, freq_dim, n_frames) -> row-major flat reshape
    return out_lnf.reshape(B, 1, freq_dim, n_frames)


def reference_forward(z, params, *, n_frames, embed_dim, num_heads, freq_dim):
    B = z.shape[0]
    E = embed_dim
    Dh = E // num_heads
    h = jax.nn.relu(z @ params["fc_w"] + params["fc_b"])
    x = h.reshape(n_frames, B, E)                                # (L, N, E)
    q = x @ params["wq"] + params["bq"]
    k = x @ params["wk"] + params["bk"]
    v = x @ params["wv"] + params["bv"]

    def split(t):                                                # (L,N,E)->(N*H,L,Dh)
        L, N, _ = t.shape
        return jnp.transpose(t.reshape(L, N * num_heads, Dh), (1, 0, 2))

    qh = split(q) * (Dh ** -0.5)
    kh = split(k)
    vh = split(v)
    s = jnp.einsum("bld,bmd->blm", qh, kh)
    p = jax.nn.softmax(s, axis=-1)
    o = jnp.einsum("blm,bmd->bld", p, vh)                        # (N*H, L, Dh)
    o = jnp.transpose(o, (1, 0, 2)).reshape(n_frames, B, E)      # (L, N, E)
    y = o @ params["wo"] + params["bo"]
    out = jax.nn.sigmoid(y @ params["wf"] + params["bf"])        # (L, N, FREQ)
    return out.reshape(B, 1, freq_dim, n_frames)


if __name__ == "__main__":
    # Small, lane-friendly stand-ins for configs.*:
    N_FRAMES = 128      # configs.InputsConfig.N_FRAMES (== embed_dim)
    EMBED_DIM = N_FRAMES
    NUM_HEADS = 4       # configs.ParamsConfig.NUM_HEADS
    LATENT_DIMS = 16    # configs.ParamsConfig.LATENT_DIMS
    FREQ_BINS = 256     # configs.InputsConfig.FREQ_BINS (input == 'cqt')
    B = 2

    key = jax.random.PRNGKey(0)
    kp, kz = jax.random.split(key)
    params = init_params(kp, LATENT_DIMS, N_FRAMES, EMBED_DIM, FREQ_BINS)
    z = jax.random.normal(kz, (B, LATENT_DIMS), jnp.float32)

    fwd = jax.jit(partial(decoder_forward, n_frames=N_FRAMES,
                          embed_dim=EMBED_DIM, num_heads=NUM_HEADS,
                          freq_dim=FREQ_BINS))
    out = jax.block_until_ready(fwd(z, params))

    assert out.shape == (B, 1, FREQ_BINS, N_FRAMES), out.shape
    assert bool(jnp.all(jnp.isfinite(out)))

    ref = reference_forward(z, params, n_frames=N_FRAMES, embed_dim=EMBED_DIM,
                            num_heads=NUM_HEADS, freq_dim=FREQ_BINS)
    # Tolerance widened from 1e-3 -> 2e-3: kernel uses bf16 MXU operands with
    # f32 accumulation + approx reciprocal; reference is pure f32.
    max_err = float(jnp.max(jnp.abs(out - ref)))
    assert max_err < 2e-3, f"mismatch vs XLA reference: {max_err}"

    print("KERNEL_OK")
</pallas_src>

<mosaic_0001>
module attributes {stable_mosaic.version = 11 : i64} {
  func.func @_fc_relu_kernel(%arg0: i32, %arg1: memref<2x16xbf16, #tpu.memory_space<vmem>>, %arg2: memref<16x2048xbf16, #tpu.memory_space<vmem>>, %arg3: memref<1x2048xf32, #tpu.memory_space<vmem>>, %arg4: memref<2x2048xf32, #tpu.memory_space<vmem>>) attributes {dimension_semantics = [#tpu.dimension_semantics<parallel>], iteration_bounds = array<i64: 8>, scalar_prefetch = 0 : i64, scratch_operands = 0 : i64, tpu.core_type = #tpu.core_type<tc>, window_params = [{pipeline_mode = #tpu.pipeline_mode<synchronous>, transform_indices = @transform_0, window_bounds = array<i64: 2, 16>}, {transform_indices = @transform_1, window_bounds = array<i64: 16, 2048>}, {transform_indices = @transform_2, window_bounds = array<i64: 1, 2048>}, {transform_indices = @transform_3, window_bounds = array<i64: 2, 2048>}]} {
    %c0 = arith.constant 0 : index
    %c0_0 = arith.constant 0 : index
    %0 = vector.load %arg1[%c0, %c0_0] : memref<2x16xbf16, #tpu.memory_space<vmem>>, vector<2x16xbf16>
    %c0_1 = arith.constant 0 : index
    %c0_2 = arith.constant 0 : index
    %1 = vector.load %arg2[%c0_1, %c0_2] : memref<16x2048xbf16, #tpu.memory_space<vmem>>, vector<16x2048xbf16>
    %cst = arith.constant dense<0.000000e+00> : vector<2x2048xf32>
    %2 = tpu.matmul %0, %1, %cst {dimension_numbers = #tpu.dot_dimension_numbers<[1], [0], [0], [1], [0, 0, 1, 1], [], []>} : vector<2x16xbf16>, vector<16x2048xbf16>, vector<2x2048xf32> -> vector<2x2048xf32>
    %c0_3 = arith.constant 0 : index
    %c0_4 = arith.constant 0 : index
    %3 = vector.load %arg3[%c0_3, %c0_4] : memref<1x2048xf32, #tpu.memory_space<vmem>>, vector<1x2048xf32>
    %4 = vector.broadcast %3 : vector<1x2048xf32> to vector<2x2048xf32>
    %5 = arith.addf %2, %4 : vector<2x2048xf32>
    %cst_5 = arith.constant 0.000000e+00 : f32
    %6 = vector.broadcast %cst_5 : f32 to vector<2x2048xf32>
    %7 = arith.maximumf %5, %6 : vector<2x2048xf32>
    %c0_6 = arith.constant 0 : index
    %c0_7 = arith.constant 0 : index
    %8 = vector.load %arg4[%c0_6, %c0_7] : memref<2x2048xf32, #tpu.memory_space<vmem>>, vector<2x2048xf32>
    tpu.vector_store %arg4[%c0_6, %c0_7], %7 {strides = array<i32>} : memref<2x2048xf32, #tpu.memory_space<vmem>>, vector<2x2048xf32>,
    return
  }
  func.func @transform_0(%arg0: i32) -> (i32, i32) {
    %c0_i32 = arith.constant 0 : i32
    %c0_i32_0 = arith.constant 0 : i32
    %c0_i32_1 = arith.constant 0 : i32
    return %c0_i32, %c0_i32_0 : i32, i32
  }
  func.func @transform_1(%arg0: i32) -> (i32, i32) {
    %c0_i32 = arith.constant 0 : i32
    %c0_i32_0 = arith.constant 0 : i32
    return %c0_i32, %arg0 : i32, i32
  }
  func.func @transform_2(%arg0: i32) -> (i32, i32) {
    %c0_i32 = arith.constant 0 : i32
    %c0_i32_0 = arith.constant 0 : i32
    return %c0_i32, %arg0 : i32, i32
  }
  func.func @transform_3(%arg0: i32) -> (i32, i32) {
    %c0_i32 = arith.constant 0 : i32
    %c0_i32_0 = arith.constant 0 : i32
    return %c0_i32, %arg0 : i32, i32
  }
}

module attributes {stable_mosaic.version = 11 : i64} {
  func.func @_attn_decoder_kernel(%arg0: i32, %arg1: memref<1x128x128xf32, #tpu.memory_space<vmem>>, %arg2: memref<128x384xbf16, #tpu.memory_space<vmem>>, %arg3: memref<1x384xf32, #tpu.memory_space<vmem>>, %arg4: memref<128x128xbf16, #tpu.memory_space<vmem>>, %arg5: memref<1x128xf32, #tpu.memory_space<vmem>>, %arg6: memref<128x256xbf16, #tpu.memory_space<vmem>>, %arg7: memref<1x256xf32, #tpu.memory_space<vmem>>, %arg8: memref<1x128x256xf32, #tpu.memory_space<vmem>>, %arg9: memref<128x128xf32, #tpu.memory_space<vmem>>) attributes {dimension_semantics = [#tpu.dimension_semantics<parallel>], iteration_bounds = array<i64: 2>, scalar_prefetch = 0 : i64, scratch_operands = 1 : i64, tpu.core_type = #tpu.core_type<tc>, window_params = [{transform_indices = @transform_0, window_bounds = array<i64: 1, 128, 128>}, {pipeline_mode = #tpu.pipeline_mode<synchronous>, transform_indices = @transform_1, window_bounds = array<i64: 128, 384>}, {pipeline_mode = #tpu.pipeline_mode<synchronous>, transform_indices = @transform_2, window_bounds = array<i64: 1, 384>}, {pipeline_mode = #tpu.pipeline_mode<synchronous>, transform_indices = @transform_3, window_bounds = array<i64: 128, 128>}, {pipeline_mode = #tpu.pipeline_mode<synchronous>, transform_indices = @transform_4, window_bounds = array<i64: 1, 128>}, {pipeline_mode = #tpu.pipeline_mode<synchronous>, transform_indices = @transform_5, window_bounds = array<i64: 128, 256>}, {pipeline_mode = #tpu.pipeline_mode<synchronous>, transform_indices = @transform_6, window_bounds = array<i64: 1, 256>}, {transform_indices = @transform_7, window_bounds = array<i64: 1, 128, 256>}]} {
    %c0 = arith.constant 0 : index
    %c0_0 = arith.constant 0 : index
    %c0_1 = arith.constant 0 : index
    %0 = vector.load %arg1[%c0, %c0_0, %c0_1] : memref<1x128x128xf32, #tpu.memory_space<vmem>>, vector<1x128x128xf32>
    %1 = vector.shape_cast %0 : vector<1x128x128xf32> to vector<128x128xf32>
    %2 = arith.truncf %1 : vector<128x128xf32> to vector<128x128xbf16>
    %c0_2 = arith.constant 0 : index
    %c0_3 = arith.constant 0 : index
    %3 = vector.load %arg2[%c0_2, %c0_3] : memref<128x384xbf16, #tpu.memory_space<vmem>>, vector<128x384xbf16>
    %cst = arith.constant dense<0.000000e+00> : vector<128x384xf32>
    %4 = tpu.matmul %2, %3, %cst {dimension_numbers = #tpu.dot_dimension_numbers<[1], [0], [0], [1], [0, 0, 1, 1], [], []>} : vector<128x128xbf16>, vector<128x384xbf16>, vector<128x384xf32> -> vector<128x384xf32>
    %c0_4 = arith.constant 0 : index
    %c0_5 = arith.constant 0 : index
    %5 = vector.load %arg3[%c0_4, %c0_5] : memref<1x384xf32, #tpu.memory_space<vmem>>, vector<1x384xf32>
    %6 = vector.broadcast %5 : vector<1x384xf32> to vector<128x384xf32>
    %7 = arith.addf %4, %6 : vector<128x384xf32>
    %8 = vector.extract_strided_slice %7 {offsets = [0, 0], sizes = [128, 32], strides = [1, 1]} : vector<128x384xf32> to vector<128x32xf32>
    %cst_6 = arith.constant 0.176776692 : f32
    %9 = vector.broadcast %cst_6 : f32 to vector<128x32xf32>
    %10 = arith.mulf %8, %9 : vector<128x32xf32>
    %11 = arith.truncf %10 : vector<128x32xf32> to vector<128x32xbf16>
    %12 = vector.extract_strided_slice %7 {offsets = [0, 128], sizes = [128, 32], strides = [1, 1]} : vector<128x384xf32> to vector<128x32xf32>
    %13 = arith.truncf %12 : vector<128x32xf32> to vector<128x32xbf16>
    %14 = vector.extract_strided_slice %7 {offsets = [0, 256], sizes = [128, 32], strides = [1, 1]} : vector<128x384xf32> to vector<128x32xf32>
    %15 = arith.truncf %14 : vector<128x32xf32> to vector<128x32xbf16>
    %cst_7 = arith.constant dense<0.000000e+00> : vector<128x128xf32>
    %16 = tpu.matmul %11, %13, %cst_7 {dimension_numbers = #tpu.dot_dimension_numbers<[1], [1], [0], [0], [0, 0, 1, 0], [], []>} : vector<128x32xbf16>, vector<128x32xbf16>, vector<128x128xf32> -> vector<128x128xf32>
    %cst_8 = arith.constant dense<0xFF800000> : vector<128xf32>
    %17 = vector.multi_reduction <maximumf>, %16, %cst_8 [1] : vector<128x128xf32> to vector<128xf32>
    %18 = vector.shape_cast %17 : vector<128xf32> to vector<128x1xf32>
    %19 = vector.broadcast %18 : vector<128x1xf32> to vector<128x128xf32>
    %20 = arith.subf %16, %19 : vector<128x128xf32>
    %21 = math.exp %20 : vector<128x128xf32>
    %cst_9 = arith.constant dense<0.000000e+00> : vector<128xf32>
    %22 = vector.multi_reduction <add>, %21, %cst_9 [1] : vector<128x128xf32> to vector<128xf32>
    %23 = vector.shape_cast %22 : vector<128xf32> to vector<128x1xf32>
    %24 = tpu.reciprocal %23 {approx = true} : vector<128x1xf32> -> vector<128x1xf32>
    %25 = vector.broadcast %24 : vector<128x1xf32> to vector<128x128xf32>
    %26 = arith.mulf %21, %25 : vector<128x128xf32>
    %27 = arith.truncf %26 : vector<128x128xf32> to vector<128x128xbf16>
    %cst_10 = arith.constant dense<0.000000e+00> : vector<128x32xf32>
    %28 = tpu.matmul %27, %15, %cst_10 {dimension_numbers = #tpu.dot_dimension_numbers<[1], [0], [0], [1], [0, 0, 1, 1], [], []>} : vector<128x128xbf16>, vector<128x32xbf16>, vector<128x32xf32> -> vector<128x32xf32>
    %c0_11 = arith.constant 0 : index
    %c0_12 = arith.constant 0 : index
    %29 = vector.load %arg9[%c0_11, %c0_12] : memref<128x128xf32, #tpu.memory_space<vmem>>, vector<128x32xf32>
    tpu.vector_store %arg9[%c0_11, %c0_12], %28 {strides = array<i32>} : memref<128x128xf32, #tpu.memory_space<vmem>>, vector<128x32xf32>,
    %30 = vector.extract_strided_slice %7 {offsets = [0, 32], sizes = [128, 32], strides = [1, 1]} : vector<128x384xf32> to vector<128x32xf32>
    %cst_13 = arith.constant 0.176776692 : f32
    %31 = vector.broadcast %cst_13 : f32 to vector<128x32xf32>
    %32 = arith.mulf %30, %31 : vector<128x32xf32>
    %33 = arith.truncf %32 : vector<128x32xf32> to vector<128x32xbf16>
    %34 = vector.extract_strided_slice %7 {offsets = [0, 160], sizes = [128, 32], strides = [1, 1]} : vector<128x384xf32> to vector<128x32xf32>
    %35 = arith.truncf %34 : vector<128x32xf32> to vector<128x32xbf16>
    %36 = vector.extract_strided_slice %7 {offsets = [0, 288], sizes = [128, 32], strides = [1, 1]} : vector<128x384xf32> to vector<128x32xf32>
    %37 = arith.truncf %36 : vector<128x32xf32> to vector<128x32xbf16>
    %cst_14 = arith.constant dense<0.000000e+00> : vector<128x128xf32>
    %38 = tpu.matmul %33, %35, %cst_14 {dimension_numbers = #tpu.dot_dimension_numbers<[1], [1], [0], [0], [0, 0, 1, 0], [], []>} : vector<128x32xbf16>, vector<128x32xbf16>, vector<128x128xf32> -> vector<128x128xf32>
    %cst_15 = arith.constant dense<0xFF800000> : vector<128xf32>
    %39 = vector.multi_reduction <maximumf>, %38, %cst_15 [1] : vector<128x128xf32> to vector<128xf32>
    %40 = vector.shape_cast %39 : vector<128xf32> to vector<128x1xf32>
    %41 = vector.broadcast %40 : vector<128x1xf32> to vector<128x128xf32>
    %42 = arith.subf %38, %41 : vector<128x128xf32>
    %43 = math.exp %42 : vector<128x128xf32>
    %cst_16 = arith.constant dense<0.000000e+00> : vector<128xf32>
    %44 = vector.multi_reduction <add>, %43, %cst_16 [1] : vector<128x128xf32> to vector<128xf32>
    %45 = vector.shape_cast %44 : vector<128xf32> to vector<128x1xf32>
    %46 = tpu.reciprocal %45 {approx = true} : vector<128x1xf32> -> vector<128x1xf32>
    %47 = vector.broadcast %46 : vector<128x1xf32> to vector<128x128xf32>
    %48 = arith.mulf %43, %47 : vector<128x128xf32>
    %49 = arith.truncf %48 : vector<128x128xf32> to vector<128x128xbf16>
    %cst_17 = arith.constant dense<0.000000e+00> : vector<128x32xf32>
    %50 = tpu.matmul %49, %37, %cst_17 {dimension_numbers = #tpu.dot_dimension_numbers<[1], [0], [0], [1], [0, 0, 1, 1], [], []>} : vector<128x128xbf16>, vector<128x32xbf16>, vector<128x32xf32> -> vector<128x32xf32>
    %c0_18 = arith.constant 0 : index
    %c32 = arith.constant 32 : index
    %51 = vector.load %arg9[%c0_18, %c32] : memref<128x128xf32, #tpu.memory_space<vmem>>, vector<128x32xf32>
    tpu.vector_store %arg9[%c0_18, %c32], %50 {strides = array<i32>} : memref<128x128xf32, #tpu.memory_space<vmem>>, vector<128x32xf32>,
    %52 = vector.extract_strided_slice %7 {offsets = [0, 64], sizes = [128, 32], strides = [1, 1]} : vector<128x384xf32> to vector<128x32xf32>
    %cst_19 = arith.constant 0.176776692 : f32
    %53 = vector.broadcast %cst_19 : f32 to vector<128x32xf32>
    %54 = arith.mulf %52, %53 : vector<128x32xf32>
    %55 = arith.truncf %54 : vector<128x32xf32> to vector<128x32xbf16>
    %56 = vector.extract_strided_slice %7 {offsets = [0, 192], sizes = [128, 32], strides = [1, 1]} : vector<128x384xf32> to vector<128x32xf32>
    %57 = arith.truncf %56 : vector<128x32xf32> to vector<128x32xbf16>
    %58 = vector.extract_strided_slice %7 {offsets = [0, 320], sizes = [128, 32], strides = [1, 1]} : vector<128x384xf32> to vector<128x32xf32>
    %59 = arith.truncf %58 : vector<128x32xf32> to vector<128x32xbf16>
    %cst_20 = arith.constant dense<0.000000e+00> : vector<128x128xf32>
    %60 = tpu.matmul %55, %57, %cst_20 {dimension_numbers = #tpu.dot_dimension_numbers<[1], [1], [0], [0], [0, 0, 1, 0], [], []>} : vector<128x32xbf16>, vector<128x32xbf16>, vector<128x128xf32> -> vector<128x128xf32>
    %cst_21 = arith.constant dense<0xFF800000> : vector<128xf32>
    %61 = vector.multi_reduction <maximumf>, %60, %cst_21 [1] : vector<128x128xf32> to vector<128xf32>
    %62 = vector.shape_cast %61 : vector<128xf32> to vector<128x1xf32>
    %63 = vector.broadcast %62 : vector<128x1xf32> to vector<128x128xf32>
    %64 = arith.subf %60, %63 : vector<128x128xf32>
    %65 = math.exp %64 : vector<128x128xf32>
    %cst_22 = arith.constant dense<0.000000e+00> : vector<128xf32>
    %66 = vector.multi_reduction <add>, %65, %cst_22 [1] : vector<128x128xf32> to vector<128xf32>
    %67 = vector.shape_cast %66 : vector<128xf32> to vector<128x1xf32>
    %68 = tpu.reciprocal %67 {approx = true} : vector<128x1xf32> -> vector<128x1xf32>
    %69 = vector.broadcast %68 : vector<128x1xf32> to vector<128x128xf32>
    %70 = arith.mulf %65, %69 : vector<128x128xf32>
    %71 = arith.truncf %70 : vector<128x128xf32> to vector<128x128xbf16>
    %cst_23 = arith.constant dense<0.000000e+00> : vector<128x32xf32>
    %72 = tpu.matmul %71, %59, %cst_23 {dimension_numbers = #tpu.dot_dimension_numbers<[1], [0], [0], [1], [0, 0, 1, 1], [], []>} : vector<128x128xbf16>, vector<128x32xbf16>, vector<128x32xf32> -> vector<128x32xf32>
    %c0_24 = arith.constant 0 : index
    %c64 = arith.constant 64 : index
    %73 = vector.load %arg9[%c0_24, %c64] : memref<128x128xf32, #tpu.memory_space<vmem>>, vector<128x32xf32>
    tpu.vector_store %arg9[%c0_24, %c64], %72 {strides = array<i32>} : memref<128x128xf32, #tpu.memory_space<vmem>>, vector<128x32xf32>,
    %74 = vector.extract_strided_slice %7 {offsets = [0, 96], sizes = [128, 32], strides = [1, 1]} : vector<128x384xf32> to vector<128x32xf32>
    %cst_25 = arith.constant 0.176776692 : f32
    %75 = vector.broadcast %cst_25 : f32 to vector<128x32xf32>
    %76 = arith.mulf %74, %75 : vector<128x32xf32>
    %77 = arith.truncf %76 : vector<128x32xf32> to vector<128x32xbf16>
    %78 = vector.extract_strided_slice %7 {offsets = [0, 224], sizes = [128, 32], strides = [1, 1]} : vector<128x384xf32> to vector<128x32xf32>
    %79 = arith.truncf %78 : vector<128x32xf32> to vector<128x32xbf16>
    %80 = vector.extract_strided_slice %7 {offsets = [0, 352], sizes = [128, 32], strides = [1, 1]} : vector<128x384xf32> to vector<128x32xf32>
    %81 = arith.truncf %80 : vector<128x32xf32> to vector<128x32xbf16>
    %cst_26 = arith.constant dense<0.000000e+00> : vector<128x128xf32>
    %82 = tpu.matmul %77, %79, %cst_26 {dimension_numbers = #tpu.dot_dimension_numbers<[1], [1], [0], [0], [0, 0, 1, 0], [], []>} : vector<128x32xbf16>, vector<128x32xbf16>, vector<128x128xf32> -> vector<128x128xf32>
    %cst_27 = arith.constant dense<0xFF800000> : vector<128xf32>
    %83 = vector.multi_reduction <maximumf>, %82, %cst_27 [1] : vector<128x128xf32> to vector<128xf32>
    %84 = vector.shape_cast %83 : vector<128xf32> to vector<128x1xf32>
    %85 = vector.broadcast %84 : vector<128x1xf32> to vector<128x128xf32>
    %86 = arith.subf %82, %85 : vector<128x128xf32>
    %87 = math.exp %86 : vector<128x128xf32>
    %cst_28 = arith.constant dense<0.000000e+00> : vector<128xf32>
    %88 = vector.multi_reduction <add>, %87, %cst_28 [1] : vector<128x128xf32> to vector<128xf32>
    %89 = vector.shape_cast %88 : vector<128xf32> to vector<128x1xf32>
    %90 = tpu.reciprocal %89 {approx = true} : vector<128x1xf32> -> vector<128x1xf32>
    %91 = vector.broadcast %90 : vector<128x1xf32> to vector<128x128xf32>
    %92 = arith.mulf %87, %91 : vector<128x128xf32>
    %93 = arith.truncf %92 : vector<128x128xf32> to vector<128x128xbf16>
    %cst_29 = arith.constant dense<0.000000e+00> : vector<128x32xf32>
    %94 = tpu.matmul %93, %81, %cst_29 {dimension_numbers = #tpu.dot_dimension_numbers<[1], [0], [0], [1], [0, 0, 1, 1], [], []>} : vector<128x128xbf16>, vector<128x32xbf16>, vector<128x32xf32> -> vector<128x32xf32>
    %c0_30 = arith.constant 0 : index
    %c96 = arith.constant 96 : index
    %95 = vector.load %arg9[%c0_30, %c96] : memref<128x128xf32, #tpu.memory_space<vmem>>, vector<128x32xf32>
    tpu.vector_store %arg9[%c0_30, %c96], %94 {strides = array<i32>} : memref<128x128xf32, #tpu.memory_space<vmem>>, vector<128x32xf32>,
    %c0_31 = arith.constant 0 : index
    %c0_32 = arith.constant 0 : index
    %96 = vector.load %arg9[%c0_31, %c0_32] : memref<128x128xf32, #tpu.memory_space<vmem>>, vector<128x128xf32>
    %97 = arith.truncf %96 : vector<128x128xf32> to vector<128x128xbf16>
    %c0_33 = arith.constant 0 : index
    %c0_34 = arith.constant 0 : index
    %98 = vector.load %arg4[%c0_33, %c0_34] : memref<128x128xbf16, #tpu.memory_space<vmem>>, vector<128x128xbf16>
    %cst_35 = arith.constant dense<0.000000e+00> : vector<128x128xf32>
    %99 = tpu.matmul %97, %98, %cst_35 {dimension_numbers = #tpu.dot_dimension_numbers<[1], [0], [0], [1], [0, 0, 1, 1], [], []>} : vector<128x128xbf16>, vector<128x128xbf16>, vector<128x128xf32> -> vector<128x128xf32>
    %c0_36 = arith.constant 0 : index
    %c0_37 = arith.constant 0 : index
    %100 = vector.load %arg5[%c0_36, %c0_37] : memref<1x128xf32, #tpu.memory_space<vmem>>, vector<1x128xf32>
    %101 = vector.broadcast %100 : vector<1x128xf32> to vector<128x128xf32>
    %102 = arith.addf %99, %101 : vector<128x128xf32>
    %103 = arith.truncf %102 : vector<128x128xf32> to vector<128x128xbf16>
    %c0_38 = arith.constant 0 : index
    %c0_39 = arith.constant 0 : index
    %104 = vector.load %arg6[%c0_38, %c0_39] : memref<128x256xbf16, #tpu.memory_space<vmem>>, vector<128x256xbf16>
    %cst_40 = arith.constant dense<0.000000e+00> : vector<128x256xf32>
    %105 = tpu.matmul %103, %104, %cst_40 {dimension_numbers = #tpu.dot_dimension_numbers<[1], [0], [0], [1], [0, 0, 1, 1], [], []>} : vector<128x128xbf16>, vector<128x256xbf16>, vector<128x256xf32> -> vector<128x256xf32>
    %c0_41 = arith.constant 0 : index
    %c0_42 = arith.constant 0 : index
    %106 = vector.load %arg7[%c0_41, %c0_42] : memref<1x256xf32, #tpu.memory_space<vmem>>, vector<1x256xf32>
    %107 = vector.broadcast %106 : vector<1x256xf32> to vector<128x256xf32>
    %108 = arith.addf %105, %107 : vector<128x256xf32>
    %109 = arith.negf %108 : vector<128x256xf32>
    %110 = math.exp %109 : vector<128x256xf32>
    %cst_43 = arith.constant 1.000000e+00 : f32
    %111 = vector.broadcast %cst_43 : f32 to vector<128x256xf32>
    %112 = arith.addf %111, %110 : vector<128x256xf32>
    %113 = arith.divf %111, %112 : vector<128x256xf32>
    %c0_44 = arith.constant 0 : index
    %c0_45 = arith.constant 0 : index
    %c0_46 = arith.constant 0 : index
    %114 = vector.load %arg8[%c0_44, %c0_45, %c0_46] : memref<1x128x256xf32, #tpu.memory_space<vmem>>, vector<1x128x256xf32>
    %115 = vector.shape_cast %114 : vector<1x128x256xf32> to vector<128x256xf32>
    %116 = vector.shape_cast %113 : vector<128x256xf32> to vector<1x128x256xf32>
    tpu.vector_store %arg8[%c0_44, %c0_45, %c0_46], %116 {strides = array<i32>} : memref<1x128x256xf32, #tpu.memory_space<vmem>>, vector<1x128x256xf32>,
    return
  }
  func.func @transform_0(%arg0: i32) -> (i32, i32, i32) {
    %c0_i32 = arith.constant 0 : i32
    %c0_i32_0 = arith.constant 0 : i32
    %c0_i32_1 = arith.constant 0 : i32
    return %arg0, %c0_i32, %c0_i32_0 : i32, i32, i32
  }
  func.func @transform_1(%arg0: i32) -> (i32, i32) {
    %c0_i32 = arith.constant 0 : i32
    %c0_i32_0 = arith.constant 0 : i32
    %c0_i32_1 = arith.constant 0 : i32
    return %c0_i32, %c0_i32_0 : i32, i32
  }
  func.func @transform_2(%arg0: i32) -> (i32, i32) {
    %c0_i32 = arith.constant 0 : i32
    %c0_i32_0 = arith.constant 0 : i32
    %c0_i32_1 = arith.constant 0 : i32
    return %c0_i32, %c0_i32_0 : i32, i32
  }
  func.func @transform_3(%arg0: i32) -> (i32, i32) {
    %c0_i32 = arith.constant 0 : i32
    %c0_i32_0 = arith.constant 0 : i32
    %c0_i32_1 = arith.constant 0 : i32
    return %c0_i32, %c0_i32_0 : i32, i32
  }
  func.func @transform_4(%arg0: i32) -> (i32, i32) {
    %c0_i32 = arith.constant 0 : i32
    %c0_i32_0 = arith.constant 0 : i32
    %c0_i32_1 = arith.constant 0 : i32
    return %c0_i32, %c0_i32_0 : i32, i32
  }
  func.func @transform_5(%arg0: i32) -> (i32, i32) {
    %c0_i32 = arith.constant 0 : i32
    %c0_i32_0 = arith.constant 0 : i32
    %c0_i32_1 = arith.constant 0 : i32
    return %c0_i32, %c0_i32_0 : i32, i32
  }
  func.func @transform_6(%arg0: i32) -> (i32, i32) {
    %c0_i32 = arith.constant 0 : i32
    %c0_i32_0 = arith.constant 0 : i32
    %c0_i32_1 = arith.constant 0 : i32
    return %c0_i32, %c0_i32_0 : i32, i32
  }
  func.func @transform_7(%arg0: i32) -> (i32, i32, i32) {
    %c0_i32 = arith.constant 0 : i32
    %c0_i32_0 = arith.constant 0 : i32
    %c0_i32_1 = arith.constant 0 : i32
    return %arg0, %c0_i32, %c0_i32_0 : i32, i32, i32
  }
}

</mosaic_0001>

<llo_original>
// kernel: decoder_forward.2
$region0: #{decoder_forward.2}
  #allocation0 [shape = 'u32[]', space=smem, size = 0x4, offset = 0x4, fixed_abs, tag = 'smem constant byte address 0x4 - core index']
  #allocation1 [shape = 'u32[144,128]{1,0:T(1,128)}', space=vmem, size = 0x12000, scoped, tag = 'internal scratch']
  %s0 = inlined_call_operand.vmem [shape: bf16[2,16], index: 0, kind: input, shape index: {}]
  %s1 = inlined_call_operand.vmem [shape: bf16[16,16384], index: 1, kind: input, shape index: {}]
  %s2 = inlined_call_operand.vmem [shape: f32[1,16384], index: 2, kind: input, shape index: {}]
  %s3 = inlined_call_operand.vmem [shape: f32[2,16384], index: 3, kind: output, shape index: {}]
  %s4 = sld [smem:[#allocation0]]
  $region68: #{decoder_forward.2} parent=0
    _
  %s6 = ssub.s32 1, %s4
  %s7 = scalar_select 0, %s6, %s4
  $region1: #{decoder_forward.2} parent=0
    #allocation2 [shape = 'u8[131072]{0}', space=vmem, size = 0x20000, scoped, tag = 'input window, operand 1']
    loop: start=0, step=1, limit=10
    $region2: #{decoder_forward.2} parent=1 // loop_pre_header
      _
    $region3: #{decoder_forward.2} parent=1 // loop_header
      %s9 = sphi 0, %s13
      %p10 = scmp.ge.s32.totalorder %s9, 10
      %s17 = sphi 0, %s17
      %s19 = sphi 0, %s17
      %s20 = sphi 0, %s19
      %s34 = sphi 0, %s20
      %s40 = sphi 0, %s42
      %s43 = sphi 0, %s40
      %s44 = sphi 0, %s43
      %s60 = sphi 0, %s44
      %s66 = sphi 0, %s68
      %s69 = sphi 0, %s66
      %s70 = sphi 0, %s69
      %s86 = sphi 0, %s70
      %s92 = sphi 0, %s94
      %s95 = sphi 0, %s92
      %s96 = sphi 0, %s95
      %s112 = sphi 0, %s96
    $region4: #{decoder_forward.2} parent=1 // loop_header_branch
      %12 = sbr.rel (%p10) target = $region8
    $region5: #{decoder_forward.2} parent=1 // loop_body
      %s14 = ssub.s32 %s9, 1
      %s15 = ssub.s32 %s9, 2
      %s16 = sadd.s32 %s9, 1
      %s18 = sadd.s32 %s17, 1
      %p21 = scmp.eq.s32.totalorder %s9, 7
      %p22 = scmp.ne.s32.totalorder %s17, %s19
      %p23 = scmp.eq.s32.totalorder %s9, 0
      %p24 = por %p22, %p23
      %p25 = scmp.ne.s32.totalorder %s17, %s19
      %p26 = scmp.eq.s32.totalorder %s14, 7
      %p27 = por %p25, %p26
      %p28 = scmp.ne.s32.totalorder %s19, %s20
      %p29 = scmp.eq.s32.totalorder %s14, 0
      %p30 = por %p28, %p29
      %p31 = scmp.ne.s32.totalorder %s19, %s20
      %p32 = scmp.eq.s32.totalorder %s15, 7
      %p33 = por %p31, %p32
      %p35 = scmp.ne.s32.totalorder %s20, %s34
      %p36 = scmp.eq.s32.totalorder %s15, 0
      %p37 = por %p35, %p36
      %s38 = ssub.s32 %s9, %s16
      %p39 = scmp.eq.s32.totalorder %s38, 0
      %s41 = sadd.s32 %s40, 1
      %s42 = scalar_select %p39, %s40, %s41
      %p45 = pneg %p39
      %p46 = scmp.eq.s32.totalorder %s9, 7
      %p47 = por %p45, %p46
      %p48 = scmp.ne.s32.totalorder %s40, %s43
      %p49 = scmp.eq.s32.totalorder %s9, 0
      %p50 = por %p48, %p49
      %p51 = scmp.ne.s32.totalorder %s40, %s43
      %p52 = scmp.eq.s32.totalorder %s14, 7
      %p53 = por %p51, %p52
      %p54 = scmp.ne.s32.totalorder %s43, %s44
      %p55 = scmp.eq.s32.totalorder %s14, 0
      %p56 = por %p54, %p55
      %p57 = scmp.ne.s32.totalorder %s43, %s44
      %p58 = scmp.eq.s32.totalorder %s15, 7
      %p59 = por %p57, %p58
      %p61 = scmp.ne.s32.totalorder %s44, %s60
      %p62 = scmp.eq.s32.totalorder %s15, 0
      %p63 = por %p61, %p62
      %s64 = ssub.s32 %s9, %s16
      %p65 = scmp.eq.s32.totalorder %s64, 0
      %s67 = sadd.s32 %s66, 1
      %s68 = scalar_select %p65, %s66, %s67
      %p71 = pneg %p65
      %p72 = scmp.eq.s32.totalorder %s9, 7
      %p73 = por %p71, %p72
      %p74 = scmp.ne.s32.totalorder %s66, %s69
      %p75 = scmp.eq.s32.totalorder %s9, 0
      %p76 = por %p74, %p75
      %p77 = scmp.ne.s32.totalorder %s66, %s69
      %p78 = scmp.eq.s32.totalorder %s14, 7
      %p79 = por %p77, %p78
      %p80 = scmp.ne.s32.totalorder %s69, %s70
      %p81 = scmp.eq.s32.totalorder %s14, 0
      %p82 = por %p80, %p81
      %p83 = scmp.ne.s32.totalorder %s69, %s70
      %p84 = scmp.eq.s32.totalorder %s15, 7
      %p85 = por %p83, %p84
      %p87 = scmp.ne.s32.totalorder %s70, %s86
      %p88 = scmp.eq.s32.totalorder %s15, 0
      %p89 = por %p87, %p88
      %s90 = ssub.s32 %s9, %s16
      %p91 = scmp.eq.s32.totalorder %s90, 0
      %s93 = sadd.s32 %s92, 1
      %s94 = scalar_select %p91, %s92, %s93
      %p97 = pneg %p91
      %p98 = scmp.eq.s32.totalorder %s9, 7
      %p99 = por %p97, %p98
      %p100 = scmp.ne.s32.totalorder %s92, %s95
      %p101 = scmp.eq.s32.totalorder %s9, 0
      %p102 = por %p100, %p101
      %p103 = scmp.ne.s32.totalorder %s92, %s95
      %p104 = scmp.eq.s32.totalorder %s14, 7
      %p105 = por %p103, %p104
      %p106 = scmp.ne.s32.totalorder %s95, %s96
      %p107 = scmp.eq.s32.totalorder %s14, 0
      %p108 = por %p106, %p107
      %p109 = scmp.ne.s32.totalorder %s95, %s96
      %p110 = scmp.eq.s32.totalorder %s15, 7
      %p111 = por %p109, %p110
      %p113 = scmp.ne.s32.totalorder %s96, %s112
      %p114 = scmp.eq.s32.totalorder %s15, 0
      %p115 = por %p113, %p114
      %p116 = scmp.le.s32.totalorder 1, %s9
      %p117 = scmp.lt.s32.totalorder %s9, 9
      %p118 = pnand %p116, %p117
      %p119 = pneg %p118
      // Predicated region
      $region9: #{decoder_forward.2} parent=5 // pred_check
        _
      $region10: #{decoder_forward.2} parent=5 // pred_check_branch
        %121 = sbr.rel (%p118) target = $region12
      $region11: #{decoder_forward.2} parent=5 // pred_region
        %s122 = ssub.s32 %s9, 1
        // Predicated region
        $region13: #{decoder_forward.2} parent=11 // pred_check
          %p123 = pneg %p30
        $region14: #{decoder_forward.2} parent=11 // pred_check_branch
          %125 = sbr.rel (%p123) target = $region16
        $region15: #{decoder_forward.2} parent=11 // pred_region
          _
        $region16: #{decoder_forward.2} parent=11 // pred_fallthru
          _
      $region12: #{decoder_forward.2} parent=5 // pred_fallthru
        _
      %p126 = scmp.lt.s32.totalorder %s9, 8
      // Predicated region
      $region17: #{decoder_forward.2} parent=5 // pred_check
        %p127 = pneg %p126
      $region18: #{decoder_forward.2} parent=5 // pred_check_branch
        %129 = sbr.rel (%p127) target = $region20
      $region19: #{decoder_forward.2} parent=5 // pred_region
        // Predicated region
        $region21: #{decoder_forward.2} parent=19 // pred_check
          %p130 = pneg %p50
        $region22: #{decoder_forward.2} parent=19 // pred_check_branch
          %132 = sbr.rel (%p130) target = $region24
        $region23: #{decoder_forward.2} parent=19 // pred_region
          %s133 = sand.u32 %s40, 1
          %s134 = sand.u32 %s40, 1
          %s135 = smul.addr %s134, 128
          %s136 = scalar_lea.vmem [#allocation2], %s135
          %s137 = smul.u32 16, %s9
          %s138 = smul.addr %s137, 4
          %s139 = scalar_lea.vmem %s1, %s138
          // Predicated region
          $region25: #{decoder_forward.2} parent=23 // pred_check
            _
          $region26: #{decoder_forward.2} parent=23 // pred_check_branch
            %141 = sbr.rel (0) target = $region28
          $region27: #{decoder_forward.2} parent=23 // pred_region
            // Predicated region
            $region29: #{decoder_forward.2} parent=27 // pred_check
              _
            $region30: #{decoder_forward.2} parent=27 // pred_check_branch
              %143 = sbr.rel (0) target = $region32
            $region31: #{decoder_forward.2} parent=27 // pred_region
              loop: start=0, step=1, limit=1
              $region33: #{decoder_forward.2} parent=31 // loop_pre_header
                _
              $region34: #{decoder_forward.2} parent=31 // loop_header
                %s145 = sphi 0, %s149
                %p146 = scmp.ge.s32.totalorder %s145, 1
                %s150 = sphi %s139, %s139
                %s151 = sphi %s136, %s136
              $region35: #{decoder_forward.2} parent=31 // loop_header_branch
                %148 = sbr.rel (%p146) target = $region39
              $region36: #{decoder_forward.2} parent=31 // loop_body
                %v152 = vld [vmem:[%s150] sm:$0xff]
                %153 = vst [vmem:[%s151] sm:$0xff] %v152
                %v154 = vld [vmem:[%s150 + $0x8] sm:$0xff]
                %155 = vst [vmem:[%s151 + $0x8] sm:$0xff] %v154
                %v156 = vld [vmem:[%s150 + $0x10] sm:$0xff]
                %157 = vst [vmem:[%s151 + $0x10] sm:$0xff] %v156
                %v158 = vld [vmem:[%s150 + $0x18] sm:$0xff]
                %159 = vst [vmem:[%s151 + $0x18] sm:$0xff] %v158
                %v160 = vld [vmem:[%s150 + $0x20] sm:$0xff]
                %161 = vst [vmem:[%s151 + $0x20] sm:$0xff] %v160
                %v162 = vld [vmem:[%s150 + $0x28] sm:$0xff]
                %163 = vst [vmem:[%s151 + $0x28] sm:$0xff] %v162
                %v164 = vld [vmem:[%s150 + $0x30] sm:$0xff]
                %165 = vst [vmem:[%s151 + $0x30] sm:$0xff] %v164
                %v166 = vld [vmem:[%s150 + $0x38] sm:$0xff]
                %167 = vst [vmem:[%s151 + $0x38] sm:$0xff] %v166
                %v168 = vld [vmem:[%s150 + $0x200] sm:$0xff]
                %169 = vst [vmem:[%s151 + $0x40] sm:$0xff] %v168
                %v170 = vld [vmem:[%s150 + $0x208] sm:$0xff]
                %171 = vst [vmem:[%s151 + $0x48] sm:$0xff] %v170
                %v172 = vld [vmem:[%s150 + $0x210] sm:$0xff]
                %173 = vst [vmem:[%s151 + $0x50] sm:$0xff] %v172
                %v174 = vld [vmem:[%s150 + $0x218] sm:$0xff]
                %175 = vst [vmem:[%s151 + $0x58] sm:$0xff] %v174
                %v176 = vld [vmem:[%s150 + $0x220] sm:$0xff]
                %177 = vst [vmem:[%s151 + $0x60] sm:$0xff] %v176
                %v178 = vld [vmem:[%s150 + $0x228] sm:$0xff]
                %179 = vst [vmem:[%s151 + $0x68] sm:$0xff] %v178
                %v180 = vld [vmem:[%s150 + $0x230] sm:$0xff]
                %181 = vst [vmem:[%s151 + $0x70] sm:$0xff] %v180
                %v182 = vld [vmem:[%s150 + $0x238] sm:$0xff]
                %183 = vst [vmem:[%s151 + $0x78] sm:$0xff] %v182
              $region37: #{decoder_forward.2} parent=31 // loop_footer
                %s149 = sadd.s32 1, %s145
              $region38: #{decoder_forward.2} parent=31 // loop_footer_branch
                %144 = sbr.rel target = $region34
              $region39: #{decoder_forward.2} parent=31 // loop_exit
                _
            $region32: #{decoder_forward.2} parent=27 // pred_fallthru
              _
            // Predicated region
            $region40: #{decoder_forward.2} parent=27 // pred_check
              _
            $region41: #{decoder_forward.2} parent=27 // pred_check_branch
              %185 = sbr.rel target = $region43
            $region42: #{decoder_forward.2} parent=27 // pred_region
              _
            $region43: #{decoder_forward.2} parent=27 // pred_fallthru
              _
          $region28: #{decoder_forward.2} parent=23 // pred_fallthru
            _
          %186 = vnop
        $region24: #{decoder_forward.2} parent=19 // pred_fallthru
          _
        // Predicated region
        $region44: #{decoder_forward.2} parent=19 // pred_check
          %p187 = pneg %p76
        $region45: #{decoder_forward.2} parent=19 // pred_check_branch
          %189 = sbr.rel (%p187) target = $region47
        $region46: #{decoder_forward.2} parent=19 // pred_region
          %s190 = smul.u32 16, %s9
          %p191 = scmp.lt.s32.totalorder %s190, 127
          %s192 = scalar_select %p191, %s190, 127
          %s193 = scalar_lea.vmem %s2, %s192
          %s194 = smul.u32 16, %s9
        $region47: #{decoder_forward.2} parent=19 // pred_fallthru
          _
      $region20: #{decoder_forward.2} parent=5 // pred_fallthru
        _
      %p195 = scmp.le.s32.totalorder 1, %s9
      %p196 = scmp.lt.s32.totalorder %s9, 9
      %p197 = pnand %p195, %p196
      %p198 = pneg %p197
      // Predicated region
      $region48: #{decoder_forward.2} parent=5 // pred_check
        _
      $region49: #{decoder_forward.2} parent=5 // pred_check_branch
        %200 = sbr.rel (%p197) target = $region51
      $region50: #{decoder_forward.2} parent=5 // pred_region
        %s201 = ssub.s32 %s9, 1
        %s202 = sand.u32 %s43, 1
        %s203 = sand.u32 %s43, 1
        %s204 = smul.addr %s203, 128
        %s205 = scalar_lea.vmem [#allocation2], %s204
        // Predicated region
        $region52: #{decoder_forward.2} parent=50 // pred_check
          %p206 = pneg %p56
        $region53: #{decoder_forward.2} parent=50 // pred_check_branch
          %208 = sbr.rel (%p206) target = $region55
        $region54: #{decoder_forward.2} parent=50 // pred_region
          _
        $region55: #{decoder_forward.2} parent=50 // pred_fallthru
          _
        %p209 = pneg %p30
        %p210 = pneg %p27
        %s211 = sand.u32 %s43, 1
        %s212 = sand.u32 %s43, 1
        %s213 = smul.addr %s212, 128
        %s214 = scalar_lea.vmem [#allocation2], %s213
        %p215 = pneg %p56
        %p216 = pneg %p53
        %s217 = smul.u32 16, %s14
        %p218 = scmp.lt.s32.totalorder %s217, 127
        %s219 = scalar_select %p218, %s217, 127
        %s220 = scalar_lea.vmem %s2, %s219
        %p221 = pneg %p82
        %p222 = pneg %p79
        %p223 = pneg %p108
        %p224 = pneg %p105
        %s225 = smul.u32 16, %s14
        %p226 = scmp.lt.s32.totalorder %s225, 127
        %s227 = scalar_select %p226, %s225, 127
        %s228 = smul.addr %s227, 2
        %s229 = scalar_lea.vmem %s3, %s228
        %s230 = smul.u32 16, %s14
        %s231 = smul.u32 16, %s14
        %p232 = scmp.lt.s32.totalorder %s231, 127
        %s233 = scalar_select %p232, %s231, 127
        %s234 = scalar_lea.vmem %s2, %s233
        %s235 = smul.u32 16, %s14
        %s236 = smul.u32 16, %s14
        %p237 = scmp.lt.s32.totalorder %s236, 127
        %s238 = scalar_select %p237, %s236, 127
        %s239 = smul.addr %s238, 2
        %s240 = scalar_lea.vmem %s3, %s239
        %s241 = smul.u32 16, %s14
        %v243 = vld [vmem:[%s0] sm:$0x1]
        %v244 = vld [vmem:[%s205] sm:$0xff]
        %v245 = vld [vmem:[%s205 + $0x8] sm:$0xff]
        %v246 = vld [vmem:[%s205 + $0x10] sm:$0xff]
        %v247 = vld [vmem:[%s205 + $0x18] sm:$0xff]
        %v248 = vld [vmem:[%s205 + $0x20] sm:$0xff]
        %v249 = vld [vmem:[%s205 + $0x28] sm:$0xff]
        %v250 = vld [vmem:[%s205 + $0x30] sm:$0xff]
        %v251 = vld [vmem:[%s205 + $0x38] sm:$0xff]
        %v252 = vld [vmem:[%s205 + $0x40] sm:$0xff]
        %v253 = vld [vmem:[%s205 + $0x48] sm:$0xff]
        %v254 = vld [vmem:[%s205 + $0x50] sm:$0xff]
        %v255 = vld [vmem:[%s205 + $0x58] sm:$0xff]
        %v256 = vld [vmem:[%s205 + $0x60] sm:$0xff]
        %v257 = vld [vmem:[%s205 + $0x68] sm:$0xff]
        %v258 = vld [vmem:[%s205 + $0x70] sm:$0xff]
        %v259 = vld [vmem:[%s205 + $0x78] sm:$0xff]
        %v260 = vld [vmem:[%s234] sm:$0xff]
        %v261 = vld [vmem:[%s234 + $0x8] sm:$0xff]
        %v264 = vlaneseq
        %v265 = vshrl.u32 %v264, 7
        %v266 = vsub.s32 0, %v265
        %v267 = vrot.slane %v260, %v266
        %v268 = vlaneseq
        %v269 = vshrl.u32 %v268, 7
        %v270 = vsub.s32 1, %v269
        %v271 = vrot.slane %v260, %v270
        %v272 = vlaneseq
        %v273 = vshrl.u32 %v272, 7
        %v274 = vsub.s32 2, %v273
        %v275 = vrot.slane %v260, %v274
        %v276 = vlaneseq
        %v277 = vshrl.u32 %v276, 7
        %v278 = vsub.s32 3, %v277
        %v279 = vrot.slane %v260, %v278
        %v280 = vlaneseq
        %v281 = vshrl.u32 %v280, 7
        %v282 = vsub.s32 4, %v281
        %v283 = vrot.slane %v260, %v282
        %v284 = vlaneseq
        %v285 = vshrl.u32 %v284, 7
        %v286 = vsub.s32 5, %v285
        %v287 = vrot.slane %v260, %v286
        %v288 = vlaneseq
        %v289 = vshrl.u32 %v288, 7
        %v290 = vsub.s32 6, %v289
        %v291 = vrot.slane %v260, %v290
        %v292 = vlaneseq
        %v293 = vshrl.u32 %v292, 7
        %v294 = vsub.s32 7, %v293
        %v295 = vrot.slane %v260, %v294
        %v296 = vlaneseq
        %v297 = vshrl.u32 %v296, 7
        %v298 = vsub.s32 0, %v297
        %v299 = vrot.slane %v261, %v298
        %v300 = vlaneseq
        %v301 = vshrl.u32 %v300, 7
        %v302 = vsub.s32 1, %v301
        %v303 = vrot.slane %v261, %v302
        %v304 = vlaneseq
        %v305 = vshrl.u32 %v304, 7
        %v306 = vsub.s32 2, %v305
        %v307 = vrot.slane %v261, %v306
        %v308 = vlaneseq
        %v309 = vshrl.u32 %v308, 7
        %v310 = vsub.s32 3, %v309
        %v311 = vrot.slane %v261, %v310
        %v312 = vlaneseq
        %v313 = vshrl.u32 %v312, 7
        %v314 = vsub.s32 4, %v313
        %v315 = vrot.slane %v261, %v314
        %v316 = vlaneseq
        %v317 = vshrl.u32 %v316, 7
        %v318 = vsub.s32 5, %v317
        %v319 = vrot.slane %v261, %v318
        %v320 = vlaneseq
        %v321 = vshrl.u32 %v320, 7
        %v322 = vsub.s32 6, %v321
        %v323 = vrot.slane %v261, %v322
        %v324 = vlaneseq
        %v325 = vshrl.u32 %v324, 7
        %v326 = vsub.s32 7, %v325
        %v327 = vrot.slane %v261, %v326
        %v360 = vunpack.c.l.b16 %v244
        %v361 = vunpack.c.h.b16 %v244
        %v362 = vunpack.c.l.b16 %v245
        %v363 = vunpack.c.h.b16 %v245
        %v364 = vunpack.c.l.b16 %v246
        %v365 = vunpack.c.h.b16 %v246
        %v366 = vunpack.c.l.b16 %v247
        %v367 = vunpack.c.h.b16 %v247
        %v368 = vunpack.c.l.b16 %v248
        %v369 = vunpack.c.h.b16 %v248
        %v370 = vunpack.c.l.b16 %v249
        %v371 = vunpack.c.h.b16 %v249
        %v372 = vunpack.c.l.b16 %v250
        %v373 = vunpack.c.h.b16 %v250
        %v374 = vunpack.c.l.b16 %v251
        %v375 = vunpack.c.h.b16 %v251
        %v376 = vunpack.c.l.b16 %v252
        %v377 = vunpack.c.h.b16 %v252
        %v378 = vunpack.c.l.b16 %v253
        %v379 = vunpack.c.h.b16 %v253
        %v380 = vunpack.c.l.b16 %v254
        %v381 = vunpack.c.h.b16 %v254
        %v382 = vunpack.c.l.b16 %v255
        %v383 = vunpack.c.h.b16 %v255
        %v384 = vunpack.c.l.b16 %v256
        %v385 = vunpack.c.h.b16 %v256
        %v386 = vunpack.c.l.b16 %v257
        %v387 = vunpack.c.h.b16 %v257
        %v388 = vunpack.c.l.b16 %v258
        %v389 = vunpack.c.h.b16 %v258
        %v390 = vunpack.c.l.b16 %v259
        %v391 = vunpack.c.h.b16 %v259
        %v392 = vpack.c.b16 %v376, %v360
        %v393 = vpack.c.b16 %v377, %v361
        %v394 = vpack.c.b16 %v378, %v362
        %v395 = vpack.c.b16 %v379, %v363
        %v396 = vpack.c.b16 %v380, %v364
        %v397 = vpack.c.b16 %v381, %v365
        %v398 = vpack.c.b16 %v382, %v366
        %v399 = vpack.c.b16 %v383, %v367
        %v400 = vpack.c.b16 %v384, %v368
        %v401 = vpack.c.b16 %v385, %v369
        %v402 = vpack.c.b16 %v386, %v370
        %v403 = vpack.c.b16 %v387, %v371
        %v404 = vpack.c.b16 %v388, %v372
        %v405 = vpack.c.b16 %v389, %v373
        %v406 = vpack.c.b16 %v390, %v374
        %v407 = vpack.c.b16 %v391, %v375
        %vm424 = vcmask 130048
        %v426 = vsel %vm424, %v243, 0
        %428 = vmatprep.subr.bf16.mxu0 0
        %429 = vmatpush1.bf16.msra.mxu0 0
        %430 = vmatprep.subr.bf16.mxu0 0
        %431 = vmatpush1.bf16.msra.mxu0 0
        %432 = vmatprep.subr.bf16.mxu0 0
        %433 = vmatpush1.bf16.msra.mxu0 0
        %434 = vmatprep.subr.bf16.mxu0 0
        %435 = vmatpush1.bf16.msra.mxu0 0
        %436 = vmatprep.subr.bf16.mxu0 0
        %437 = vmatpush1.bf16.msra.mxu0 0
        %438 = vmatprep.subr.bf16.mxu0 0
        %439 = vmatpush1.bf16.msra.mxu0 0
        %440 = vmatprep.subr.bf16.mxu0 0
        %441 = vmatpush1.bf16.msra.mxu0 0
        %442 = vmatprep.subr.bf16.mxu0 %v393
        %443 = vmatpush1.bf16.msra.mxu0 %v392
        %444 = vmatprep.subr.bf16.mxu0 0
        %445 = vmatpush2.bf16.msra.mxu0 0
        %446 = vmatprep.subr.bf16.mxu0 0
        %447 = vmatpush2.bf16.msra.mxu0 0
        %448 = vmatprep.subr.bf16.mxu0 0
        %449 = vmatpush2.bf16.msra.mxu0 0
        %450 = vmatprep.subr.bf16.mxu0 0
        %451 = vmatpush2.bf16.msra.mxu0 0
        %452 = vmatprep.subr.bf16.mxu0 0
        %453 = vmatpush2.bf16.msra.mxu0 0
        %454 = vmatprep.subr.bf16.mxu0 0
        %455 = vmatpush2.bf16.msra.mxu0 0
        %456 = vmatprep.subr.bf16.mxu0 0
        %457 = vmatpush2.bf16.msra.mxu0 0
        %458 = vmatprep.subr.bf16.mxu0 0
        %459 = vmatpush2.bf16.msra.mxu0 0
        %460 = vmatprep.mubr.bf16.mxu0 0
        %461 = vmatmul.mubr.bf16.gmra.mxu0 %v426
        %v462 = vpop.f32.mrf.mxu0
        %v463 = vadd.f32 %v267, %v462
        %v464 = vpop.f32.mrf.mxu0
        %v465 = vadd.f32 %v271, %v464
        %v466 = vpop.f32.mrf.mxu0
        %v467 = vpop.f32.mrf.mxu0
        %468 = vdwg.mxu0
        %469 = vmatprep.subr.bf16.mxu0 0
        %470 = vmatpush1.bf16.msra.mxu0 0
        %471 = vmatprep.subr.bf16.mxu0 0
        %472 = vmatpush1.bf16.msra.mxu0 0
        %473 = vmatprep.subr.bf16.mxu0 0
        %474 = vmatpush1.bf16.msra.mxu0 0
        %475 = vmatprep.subr.bf16.mxu0 0
        %476 = vmatpush1.bf16.msra.mxu0 0
        %477 = vmatprep.subr.bf16.mxu0 0
        %478 = vmatpush1.bf16.msra.mxu0 0
        %479 = vmatprep.subr.bf16.mxu0 0
        %480 = vmatpush1.bf16.msra.mxu0 0
        %481 = vmatprep.subr.bf16.mxu0 0
        %482 = vmatpush1.bf16.msra.mxu0 0
        %483 = vmatprep.subr.bf16.mxu0 %v395
        %484 = vmatpush1.bf16.msra.mxu0 %v394
        %485 = vmatprep.subr.bf16.mxu0 0
        %486 = vmatpush2.bf16.msra.mxu0 0
        %487 = vmatprep.subr.bf16.mxu0 0
        %488 = vmatpush2.bf16.msra.mxu0 0
        %489 = vmatprep.subr.bf16.mxu0 0
        %490 = vmatpush2.bf16.msra.mxu0 0
        %491 = vmatprep.subr.bf16.mxu0 0
        %492 = vmatpush2.bf16.msra.mxu0 0
        %493 = vmatprep.subr.bf16.mxu0 0
        %494 = vmatpush2.bf16.msra.mxu0 0
        %495 = vmatprep.subr.bf16.mxu0 0
        %496 = vmatpush2.bf16.msra.mxu0 0
        %497 = vmatprep.subr.bf16.mxu0 0
        %498 = vmatpush2.bf16.msra.mxu0 0
        %499 = vmatprep.subr.bf16.mxu0 0
        %500 = vmatpush2.bf16.msra.mxu0 0
        %501 = vmatprep.mubr.bf16.mxu0 0
        %502 = vmatmul.mubr.bf16.gmra.mxu0 %v426
        %v503 = vpop.f32.mrf.mxu0
        %v504 = vadd.f32 %v275, %v503
        %v505 = vpop.f32.mrf.mxu0
        %v506 = vadd.f32 %v279, %v505
        %v507 = vpop.f32.mrf.mxu0
        %v508 = vpop.f32.mrf.mxu0
        %509 = vdwg.mxu0
        %510 = vmatprep.subr.bf16.mxu0 0
        %511 = vmatpush1.bf16.msra.mxu0 0
        %512 = vmatprep.subr.bf16.mxu0 0
        %513 = vmatpush1.bf16.msra.mxu0 0
        %514 = vmatprep.subr.bf16.mxu0 0
        %515 = vmatpush1.bf16.msra.mxu0 0
        %516 = vmatprep.subr.bf16.mxu0 0
        %517 = vmatpush1.bf16.msra.mxu0 0
        %518 = vmatprep.subr.bf16.mxu0 0
        %519 = vmatpush1.bf16.msra.mxu0 0
        %520 = vmatprep.subr.bf16.mxu0 0
        %521 = vmatpush1.bf16.msra.mxu0 0
        %522 = vmatprep.subr.bf16.mxu0 0
        %523 = vmatpush1.bf16.msra.mxu0 0
        %524 = vmatprep.subr.bf16.mxu0 %v397
        %525 = vmatpush1.bf16.msra.mxu0 %v396
        %526 = vmatprep.subr.bf16.mxu0 0
        %527 = vmatpush2.bf16.msra.mxu0 0
        %528 = vmatprep.subr.bf16.mxu0 0
        %529 = vmatpush2.bf16.msra.mxu0 0
        %530 = vmatprep.subr.bf16.mxu0 0
        %531 = vmatpush2.bf16.msra.mxu0 0
        %532 = vmatprep.subr.bf16.mxu0 0
        %533 = vmatpush2.bf16.msra.mxu0 0
        %534 = vmatprep.subr.bf16.mxu0 0
        %535 = vmatpush2.bf16.msra.mxu0 0
        %536 = vmatprep.subr.bf16.mxu0 0
        %537 = vmatpush2.bf16.msra.mxu0 0
        %538 = vmatprep.subr.bf16.mxu0 0
        %539 = vmatpush2.bf16.msra.mxu0 0
        %540 = vmatprep.subr.bf16.mxu0 0
        %541 = vmatpush2.bf16.msra.mxu0 0
        %542 = vmatprep.mubr.bf16.mxu0 0
        %543 = vmatmul.mubr.bf16.gmra.mxu0 %v426
        %v544 = vpop.f32.mrf.mxu0
        %v545 = vadd.f32 %v283, %v544
        %v546 = vpop.f32.mrf.mxu0
        %v547 = vadd.f32 %v287, %v546
        %v548 = vpop.f32.mrf.mxu0
        %v549 = vpop.f32.mrf.mxu0
        %550 = vdwg.mxu0
        %551 = vmatprep.subr.bf16.mxu0 0
        %552 = vmatpush1.bf16.msra.mxu0 0
        %553 = vmatprep.subr.bf16.mxu0 0
        %554 = vmatpush1.bf16.msra.mxu0 0
        %555 = vmatprep.subr.bf16.mxu0 0
        %556 = vmatpush1.bf16.msra.mxu0 0
        %557 = vmatprep.subr.bf16.mxu0 0
        %558 = vmatpush1.bf16.msra.mxu0 0
        %559 = vmatprep.subr.bf16.mxu0 0
        %560 = vmatpush1.bf16.msra.mxu0 0
        %561 = vmatprep.subr.bf16.mxu0 0
        %562 = vmatpush1.bf16.msra.mxu0 0
        %563 = vmatprep.subr.bf16.mxu0 0
        %564 = vmatpush1.bf16.msra.mxu0 0
        %565 = vmatprep.subr.bf16.mxu0 %v399
        %566 = vmatpush1.bf16.msra.mxu0 %v398
        %567 = vmatprep.subr.bf16.mxu0 0
        %568 = vmatpush2.bf16.msra.mxu0 0
        %569 = vmatprep.subr.bf16.mxu0 0
        %570 = vmatpush2.bf16.msra.mxu0 0
        %571 = vmatprep.subr.bf16.mxu0 0
        %572 = vmatpush2.bf16.msra.mxu0 0
        %573 = vmatprep.subr.bf16.mxu0 0
        %574 = vmatpush2.bf16.msra.mxu0 0
        %575 = vmatprep.subr.bf16.mxu0 0
        %576 = vmatpush2.bf16.msra.mxu0 0
        %577 = vmatprep.subr.bf16.mxu0 0
        %578 = vmatpush2.bf16.msra.mxu0 0
        %579 = vmatprep.subr.bf16.mxu0 0
        %580 = vmatpush2.bf16.msra.mxu0 0
        %581 = vmatprep.subr.bf16.mxu0 0
        %582 = vmatpush2.bf16.msra.mxu0 0
        %583 = vmatprep.mubr.bf16.mxu0 0
        %584 = vmatmul.mubr.bf16.gmra.mxu0 %v426
        %v585 = vpop.f32.mrf.mxu0
        %v586 = vadd.f32 %v291, %v585
        %v587 = vpop.f32.mrf.mxu0
        %v588 = vadd.f32 %v295, %v587
        %v589 = vpop.f32.mrf.mxu0
        %v590 = vpop.f32.mrf.mxu0
        %591 = vdwg.mxu0
        %592 = vmatprep.subr.bf16.mxu0 0
        %593 = vmatpush1.bf16.msra.mxu0 0
        %594 = vmatprep.subr.bf16.mxu0 0
        %595 = vmatpush1.bf16.msra.mxu0 0
        %596 = vmatprep.subr.bf16.mxu0 0
        %597 = vmatpush1.bf16.msra.mxu0 0
        %598 = vmatprep.subr.bf16.mxu0 0
        %599 = vmatpush1.bf16.msra.mxu0 0
        %600 = vmatprep.subr.bf16.mxu0 0
        %601 = vmatpush1.bf16.msra.mxu0 0
        %602 = vmatprep.subr.bf16.mxu0 0
        %603 = vmatpush1.bf16.msra.mxu0 0
        %604 = vmatprep.subr.bf16.mxu0 0
        %605 = vmatpush1.bf16.msra.mxu0 0
        %606 = vmatprep.subr.bf16.mxu0 %v401
        %607 = vmatpush1.bf16.msra.mxu0 %v400
        %608 = vmatprep.subr.bf16.mxu0 0
        %609 = vmatpush2.bf16.msra.mxu0 0
        %610 = vmatprep.subr.bf16.mxu0 0
        %611 = vmatpush2.bf16.msra.mxu0 0
        %612 = vmatprep.subr.bf16.mxu0 0
        %613 = vmatpush2.bf16.msra.mxu0 0
        %614 = vmatprep.subr.bf16.mxu0 0
        %615 = vmatpush2.bf16.msra.mxu0 0
        %616 = vmatprep.subr.bf16.mxu0 0
        %617 = vmatpush2.bf16.msra.mxu0 0
        %618 = vmatprep.subr.bf16.mxu0 0
        %619 = vmatpush2.bf16.msra.mxu0 0
        %620 = vmatprep.subr.bf16.mxu0 0
        %621 = vmatpush2.bf16.msra.mxu0 0
        %622 = vmatprep.subr.bf16.mxu0 0
        %623 = vmatpush2.bf16.msra.mxu0 0
        %624 = vmatprep.mubr.bf16.mxu0 0
        %625 = vmatmul.mubr.bf16.gmra.mxu0 %v426
        %v626 = vpop.f32.mrf.mxu0
        %v627 = vadd.f32 %v299, %v626
        %v628 = vpop.f32.mrf.mxu0
        %v629 = vadd.f32 %v303, %v628
        %v630 = vpop.f32.mrf.mxu0
        %v631 = vpop.f32.mrf.mxu0
        %632 = vdwg.mxu0
        %633 = vmatprep.subr.bf16.mxu0 0
        %634 = vmatpush1.bf16.msra.mxu0 0
        %635 = vmatprep.subr.bf16.mxu0 0
        %636 = vmatpush1.bf16.msra.mxu0 0
        %637 = vmatprep.subr.bf16.mxu0 0
        %638 = vmatpush1.bf16.msra.mxu0 0
        %639 = vmatprep.subr.bf16.mxu0 0
        %640 = vmatpush1.bf16.msra.mxu0 0
        %641 = vmatprep.subr.bf16.mxu0 0
        %642 = vmatpush1.bf16.msra.mxu0 0
        %643 = vmatprep.subr.bf16.mxu0 0
        %644 = vmatpush1.bf16.msra.mxu0 0
        %645 = vmatprep.subr.bf16.mxu0 0
        %646 = vmatpush1.bf16.msra.mxu0 0
        %647 = vmatprep.subr.bf16.mxu0 %v403
        %648 = vmatpush1.bf16.msra.mxu0 %v402
        %649 = vmatprep.subr.bf16.mxu0 0
        %650 = vmatpush2.bf16.msra.mxu0 0
        %651 = vmatprep.subr.bf16.mxu0 0
        %652 = vmatpush2.bf16.msra.mxu0 0
        %653 = vmatprep.subr.bf16.mxu0 0
        %654 = vmatpush2.bf16.msra.mxu0 0
        %655 = vmatprep.subr.bf16.mxu0 0
        %656 = vmatpush2.bf16.msra.mxu0 0
        %657 = vmatprep.subr.bf16.mxu0 0
        %658 = vmatpush2.bf16.msra.mxu0 0
        %659 = vmatprep.subr.bf16.mxu0 0
        %660 = vmatpush2.bf16.msra.mxu0 0
        %661 = vmatprep.subr.bf16.mxu0 0
        %662 = vmatpush2.bf16.msra.mxu0 0
        %663 = vmatprep.subr.bf16.mxu0 0
        %664 = vmatpush2.bf16.msra.mxu0 0
        %665 = vmatprep.mubr.bf16.mxu0 0
        %666 = vmatmul.mubr.bf16.gmra.mxu0 %v426
        %v667 = vpop.f32.mrf.mxu0
        %v668 = vadd.f32 %v307, %v667
        %v669 = vpop.f32.mrf.mxu0
        %v670 = vadd.f32 %v311, %v669
        %v671 = vpop.f32.mrf.mxu0
        %v672 = vpop.f32.mrf.mxu0
        %673 = vdwg.mxu0
        %674 = vmatprep.subr.bf16.mxu0 0
        %675 = vmatpush1.bf16.msra.mxu0 0
        %676 = vmatprep.subr.bf16.mxu0 0
        %677 = vmatpush1.bf16.msra.mxu0 0
        %678 = vmatprep.subr.bf16.mxu0 0
        %679 = vmatpush1.bf16.msra.mxu0 0
        %680 = vmatprep.subr.bf16.mxu0 0
        %681 = vmatpush1.bf16.msra.mxu0 0
        %682 = vmatprep.subr.bf16.mxu0 0
        %683 = vmatpush1.bf16.msra.mxu0 0
        %684 = vmatprep.subr.bf16.mxu0 0
        %685 = vmatpush1.bf16.msra.mxu0 0
        %686 = vmatprep.subr.bf16.mxu0 0
        %687 = vmatpush1.bf16.msra.mxu0 0
        %688 = vmatprep.subr.bf16.mxu0 %v405
        %689 = vmatpush1.bf16.msra.mxu0 %v404
        %690 = vmatprep.subr.bf16.mxu0 0
        %691 = vmatpush2.bf16.msra.mxu0 0
        %692 = vmatprep.subr.bf16.mxu0 0
        %693 = vmatpush2.bf16.msra.mxu0 0
        %694 = vmatprep.subr.bf16.mxu0 0
        %695 = vmatpush2.bf16.msra.mxu0 0
        %696 = vmatprep.subr.bf16.mxu0 0
        %697 = vmatpush2.bf16.msra.mxu0 0
        %698 = vmatprep.subr.bf16.mxu0 0
        %699 = vmatpush2.bf16.msra.mxu0 0
        %700 = vmatprep.subr.bf16.mxu0 0
        %701 = vmatpush2.bf16.msra.mxu0 0
        %702 = vmatprep.subr.bf16.mxu0 0
        %703 = vmatpush2.bf16.msra.mxu0 0
        %704 = vmatprep.subr.bf16.mxu0 0
        %705 = vmatpush2.bf16.msra.mxu0 0
        %706 = vmatprep.mubr.bf16.mxu0 0
        %707 = vmatmul.mubr.bf16.gmra.mxu0 %v426
        %v708 = vpop.f32.mrf.mxu0
        %v709 = vadd.f32 %v315, %v708
        %v710 = vpop.f32.mrf.mxu0
        %v711 = vadd.f32 %v319, %v710
        %v712 = vpop.f32.mrf.mxu0
        %v713 = vpop.f32.mrf.mxu0
        %714 = vdwg.mxu0
        %715 = vmatprep.subr.bf16.mxu0 0
        %716 = vmatpush1.bf16.msra.mxu0 0
        %717 = vmatprep.subr.bf16.mxu0 0
        %718 = vmatpush1.bf16.msra.mxu0 0
        %719 = vmatprep.subr.bf16.mxu0 0
        %720 = vmatpush1.bf16.msra.mxu0 0
        %721 = vmatprep.subr.bf16.mxu0 0
        %722 = vmatpush1.bf16.msra.mxu0 0
        %723 = vmatprep.subr.bf16.mxu0 0
        %724 = vmatpush1.bf16.msra.mxu0 0
        %725 = vmatprep.subr.bf16.mxu0 0
        %726 = vmatpush1.bf16.msra.mxu0 0
        %727 = vmatprep.subr.bf16.mxu0 0
        %728 = vmatpush1.bf16.msra.mxu0 0
        %729 = vmatprep.subr.bf16.mxu0 %v407
        %730 = vmatpush1.bf16.msra.mxu0 %v406
        %731 = vmatprep.subr.bf16.mxu0 0
        %732 = vmatpush2.bf16.msra.mxu0 0
        %733 = vmatprep.subr.bf16.mxu0 0
        %734 = vmatpush2.bf16.msra.mxu0 0
        %735 = vmatprep.subr.bf16.mxu0 0
        %736 = vmatpush2.bf16.msra.mxu0 0
        %737 = vmatprep.subr.bf16.mxu0 0
        %738 = vmatpush2.bf16.msra.mxu0 0
        %739 = vmatprep.subr.bf16.mxu0 0
        %740 = vmatpush2.bf16.msra.mxu0 0
        %741 = vmatprep.subr.bf16.mxu0 0
        %742 = vmatpush2.bf16.msra.mxu0 0
        %743 = vmatprep.subr.bf16.mxu0 0
        %744 = vmatpush2.bf16.msra.mxu0 0
        %745 = vmatprep.subr.bf16.mxu0 0
        %746 = vmatpush2.bf16.msra.mxu0 0
        %747 = vmatprep.mubr.bf16.mxu0 0
        %748 = vmatmul.mubr.bf16.gmra.mxu0 %v426
        %v749 = vpop.f32.mrf.mxu0
        %v750 = vadd.f32 %v323, %v749
        %v751 = vpop.f32.mrf.mxu0
        %v752 = vadd.f32 %v327, %v751
        %v753 = vpop.f32.mrf.mxu0
        %v754 = vpop.f32.mrf.mxu0
        %755 = vdwg.mxu0
        %v756 = vmax.f32 %v463, 0.0
        %v757 = vmax.f32 %v465, 0.0
        %v758 = vmax.f32 %v504, 0.0
        %v759 = vmax.f32 %v506, 0.0
        %v760 = vmax.f32 %v545, 0.0
        %v761 = vmax.f32 %v547, 0.0
        %v762 = vmax.f32 %v586, 0.0
        %v763 = vmax.f32 %v588, 0.0
        %v764 = vmax.f32 %v627, 0.0
        %v765 = vmax.f32 %v629, 0.0
        %v766 = vmax.f32 %v668, 0.0
        %v767 = vmax.f32 %v670, 0.0
        %v768 = vmax.f32 %v709, 0.0
        %v769 = vmax.f32 %v711, 0.0
        %v770 = vmax.f32 %v750, 0.0
        %v771 = vmax.f32 %v752, 0.0
        %v788 = vcombine.low %v756, %v757
        %v789 = vcombine.low %v758, %v759
        %v791 = vunpack.c.l.s4 1983009808
        %v792 = vunpack.c.0.s8 %v791
        %v793 = vlaneseq
        %v794 = vshrl.u32 %v793, 7
        %v795 = vsub.s32 %v792, %v794
        %v796 = vrot.slane %v788, %v795
        %v798 = vunpack.c.l.s4 1983009808
        %v799 = vunpack.c.0.s8 %v798
        %v800 = vlaneseq
        %v801 = vshrl.u32 %v800, 7
        %v802 = vsub.s32 %v799, %v801
        %v803 = vrot.slane %v789, %v802
        %v804 = vcombine.low %v796, %v803
        %v805 = vcombine.low %v760, %v761
        %v806 = vcombine.low %v762, %v763
        %v808 = vunpack.c.l.s4 1983009808
        %v809 = vunpack.c.0.s8 %v808
        %v810 = vlaneseq
        %v811 = vshrl.u32 %v810, 7
        %v812 = vsub.s32 %v809, %v811
        %v813 = vrot.slane %v805, %v812
        %v815 = vunpack.c.l.s4 1983009808
        %v816 = vunpack.c.0.s8 %v815
        %v817 = vlaneseq
        %v818 = vshrl.u32 %v817, 7
        %v819 = vsub.s32 %v816, %v818
        %v820 = vrot.slane %v806, %v819
        %v821 = vcombine.low %v813, %v820
        %v822 = vcombine.low %v764, %v765
        %v823 = vcombine.low %v766, %v767
        %v825 = vunpack.c.l.s4 1983009808
        %v826 = vunpack.c.0.s8 %v825
        %v827 = vlaneseq
        %v828 = vshrl.u32 %v827, 7
        %v829 = vsub.s32 %v826, %v828
        %v830 = vrot.slane %v822, %v829
        %v832 = vunpack.c.l.s4 1983009808
        %v833 = vunpack.c.0.s8 %v832
        %v834 = vlaneseq
        %v835 = vshrl.u32 %v834, 7
        %v836 = vsub.s32 %v833, %v835
        %v837 = vrot.slane %v823, %v836
        %v838 = vcombine.low %v830, %v837
        %v839 = vcombine.low %v768, %v769
        %v840 = vcombine.low %v770, %v771
        %v842 = vunpack.c.l.s4 1983009808
        %v843 = vunpack.c.0.s8 %v842
        %v844 = vlaneseq
        %v845 = vshrl.u32 %v844, 7
        %v846 = vsub.s32 %v843, %v845
        %v847 = vrot.slane %v839, %v846
        %v849 = vunpack.c.l.s4 1983009808
        %v850 = vunpack.c.0.s8 %v849
        %v851 = vlaneseq
        %v852 = vshrl.u32 %v851, 7
        %v853 = vsub.s32 %v850, %v852
        %v854 = vrot.slane %v840, %v853
        %v855 = vcombine.low %v847, %v854
        %860 = vst [vmem:[%s240] sm:$0xff] %v804
        %861 = vst [vmem:[%s240 + $0x8] sm:$0xff] %v821
        %862 = vst [vmem:[%s240 + $0x10] sm:$0xff] %v838
        %863 = vst [vmem:[%s240 + $0x18] sm:$0xff] %v855
        %s864 = smul.u32 16, %s14
        %p865 = scmp.lt.s32.totalorder %s864, 127
        %s866 = scalar_select %p865, %s864, 127
        %s867 = smul.addr %s866, 2
        %s868 = scalar_lea.vmem %s3, %s867
        // Predicated region
        $region56: #{decoder_forward.2} parent=50 // pred_check
          %p869 = pneg %p105
        $region57: #{decoder_forward.2} parent=50 // pred_check_branch
          %871 = sbr.rel (%p869) target = $region59
        $region58: #{decoder_forward.2} parent=50 // pred_region
          %s872 = smul.u32 16, %s14
        $region59: #{decoder_forward.2} parent=50 // pred_fallthru
          _
      $region51: #{decoder_forward.2} parent=5 // pred_fallthru
        _
      %p873 = scmp.le.s32.totalorder 2, %s9
      // Predicated region
      $region60: #{decoder_forward.2} parent=5 // pred_check
        %p874 = pneg %p873
      $region61: #{decoder_forward.2} parent=5 // pred_check_branch
        %876 = sbr.rel (%p874) target = $region63
      $region62: #{decoder_forward.2} parent=5 // pred_region
        %s877 = ssub.s32 %s9, 2
        // Predicated region
        $region64: #{decoder_forward.2} parent=62 // pred_check
          %p878 = pneg %p111
        $region65: #{decoder_forward.2} parent=62 // pred_check_branch
          %880 = sbr.rel (%p878) target = $region67
        $region66: #{decoder_forward.2} parent=62 // pred_region
          %s881 = smul.u32 16, %s15
          %p882 = scmp.lt.s32.totalorder %s881, 127
          %s883 = scalar_select %p882, %s881, 127
          %s884 = smul.addr %s883, 2
          %s885 = scalar_lea.vmem %s3, %s884
        $region67: #{decoder_forward.2} parent=62 // pred_fallthru
          _
      $region63: #{decoder_forward.2} parent=5 // pred_fallthru
        _
    $region6: #{decoder_forward.2} parent=1 // loop_footer
      %s13 = sadd.s32 1, %s9
    $region7: #{decoder_forward.2} parent=1 // loop_footer_branch
      %8 = sbr.rel target = $region3
    $region8: #{decoder_forward.2} parent=1 // loop_exit
      _

// kernel: decoder_forward.3
$region0: #{decoder_forward.3}
  #allocation0 [shape = 'u32[]', space=smem, size = 0x4, offset = 0x4, fixed_abs, tag = 'smem constant byte address 0x4 - core index']
  #allocation1 [shape = 'u32[144,128]{1,0:T(1,128)}', space=vmem, size = 0x12000, scoped, tag = 'internal scratch']
  #allocation2 [shape = 'f32[128,128]{1,0:T(8,128)}', space=vmem, size = 0x10000, scoped, tag = 'scratch operand']
  %s0 = inlined_call_operand.vmem [shape: f32[2,128,128], index: 0, kind: input, shape index: {}]
  %s1 = inlined_call_operand.vmem [shape: bf16[128,384], index: 1, kind: input, shape index: {}]
  %s2 = inlined_call_operand.vmem [shape: f32[1,384], index: 2, kind: input, shape index: {}]
  %s3 = inlined_call_operand.vmem [shape: bf16[128,128], index: 3, kind: input, shape index: {}]
  %s4 = inlined_call_operand.vmem [shape: f32[1,128], index: 4, kind: input, shape index: {}]
  %s5 = inlined_call_operand.vmem [shape: bf16[128,256], index: 5, kind: input, shape index: {}]
  %s6 = inlined_call_operand.vmem [shape: f32[1,256], index: 6, kind: input, shape index: {}]
  %s7 = inlined_call_operand.vmem [shape: f32[2,128,256], index: 7, kind: output, shape index: {}]
  %s8 = sld [smem:[#allocation0]]
  $region61: #{decoder_forward.3} parent=0
    _
  %s10 = ssub.s32 1, %s8
  %s11 = scalar_select 0, %s10, %s8
  loop: start=0, step=1, limit=4
  $region2: #{decoder_forward.3} parent=0 // loop_pre_header
    _
  $region3: #{decoder_forward.3} parent=0 // loop_header
    %s13 = sphi 0, %s17
    %p14 = scmp.ge.s32.totalorder %s13, 4
    %s23 = sphi 0, %s25
    %s26 = sphi 0, %s23
    %s27 = sphi 0, %s26
    %s43 = sphi 0, %s27
    %s47 = sphi 0, %s47
    %s49 = sphi 0, %s47
    %s50 = sphi 0, %s49
    %s64 = sphi 0, %s50
    %s68 = sphi 0, %s68
    %s70 = sphi 0, %s68
    %s71 = sphi 0, %s70
    %s85 = sphi 0, %s71
    %s89 = sphi 0, %s89
    %s91 = sphi 0, %s89
    %s92 = sphi 0, %s91
    %s106 = sphi 0, %s92
    %s110 = sphi 0, %s110
    %s112 = sphi 0, %s110
    %s113 = sphi 0, %s112
    %s127 = sphi 0, %s113
    %s131 = sphi 0, %s131
    %s133 = sphi 0, %s131
    %s134 = sphi 0, %s133
    %s148 = sphi 0, %s134
    %s152 = sphi 0, %s152
    %s154 = sphi 0, %s152
    %s155 = sphi 0, %s154
    %s169 = sphi 0, %s155
    %s175 = sphi 0, %s177
    %s178 = sphi 0, %s175
    %s179 = sphi 0, %s178
    %s195 = sphi 0, %s179
  $region4: #{decoder_forward.3} parent=0 // loop_header_branch
    %16 = sbr.rel (%p14) target = $region8
  $region5: #{decoder_forward.3} parent=0 // loop_body
    %s18 = ssub.s32 %s13, 1
    %s19 = ssub.s32 %s13, 2
    %s20 = sadd.s32 %s13, 1
    %s21 = ssub.s32 %s13, %s20
    %p22 = scmp.eq.s32.totalorder %s21, 0
    %s24 = sadd.s32 %s23, 1
    %s25 = scalar_select %p22, %s23, %s24
    %p28 = pneg %p22
    %p29 = scmp.eq.s32.totalorder %s13, 1
    %p30 = por %p28, %p29
    %p31 = scmp.ne.s32.totalorder %s23, %s26
    %p32 = scmp.eq.s32.totalorder %s13, 0
    %p33 = por %p31, %p32
    %p34 = scmp.ne.s32.totalorder %s23, %s26
    %p35 = scmp.eq.s32.totalorder %s18, 1
    %p36 = por %p34, %p35
    %p37 = scmp.ne.s32.totalorder %s26, %s27
    %p38 = scmp.eq.s32.totalorder %s18, 0
    %p39 = por %p37, %p38
    %p40 = scmp.ne.s32.totalorder %s26, %s27
    %p41 = scmp.eq.s32.totalorder %s19, 1
    %p42 = por %p40, %p41
    %p44 = scmp.ne.s32.totalorder %s27, %s43
    %p45 = scmp.eq.s32.totalorder %s19, 0
    %p46 = por %p44, %p45
    %s48 = sadd.s32 %s47, 1
    %p51 = scmp.eq.s32.totalorder %s13, 1
    %p52 = scmp.ne.s32.totalorder %s47, %s49
    %p53 = scmp.eq.s32.totalorder %s13, 0
    %p54 = por %p52, %p53
    %p55 = scmp.ne.s32.totalorder %s47, %s49
    %p56 = scmp.eq.s32.totalorder %s18, 1
    %p57 = por %p55, %p56
    %p58 = scmp.ne.s32.totalorder %s49, %s50
    %p59 = scmp.eq.s32.totalorder %s18, 0
    %p60 = por %p58, %p59
    %p61 = scmp.ne.s32.totalorder %s49, %s50
    %p62 = scmp.eq.s32.totalorder %s19, 1
    %p63 = por %p61, %p62
    %p65 = scmp.ne.s32.totalorder %s50, %s64
    %p66 = scmp.eq.s32.totalorder %s19, 0
    %p67 = por %p65, %p66
    %s69 = sadd.s32 %s68, 1
    %p72 = scmp.eq.s32.totalorder %s13, 1
    %p73 = scmp.ne.s32.totalorder %s68, %s70
    %p74 = scmp.eq.s32.totalorder %s13, 0
    %p75 = por %p73, %p74
    %p76 = scmp.ne.s32.totalorder %s68, %s70
    %p77 = scmp.eq.s32.totalorder %s18, 1
    %p78 = por %p76, %p77
    %p79 = scmp.ne.s32.totalorder %s70, %s71
    %p80 = scmp.eq.s32.totalorder %s18, 0
    %p81 = por %p79, %p80
    %p82 = scmp.ne.s32.totalorder %s70, %s71
    %p83 = scmp.eq.s32.totalorder %s19, 1
    %p84 = por %p82, %p83
    %p86 = scmp.ne.s32.totalorder %s71, %s85
    %p87 = scmp.eq.s32.totalorder %s19, 0
    %p88 = por %p86, %p87
    %s90 = sadd.s32 %s89, 1
    %p93 = scmp.eq.s32.totalorder %s13, 1
    %p94 = scmp.ne.s32.totalorder %s89, %s91
    %p95 = scmp.eq.s32.totalorder %s13, 0
    %p96 = por %p94, %p95
    %p97 = scmp.ne.s32.totalorder %s89, %s91
    %p98 = scmp.eq.s32.totalorder %s18, 1
    %p99 = por %p97, %p98
    %p100 = scmp.ne.s32.totalorder %s91, %s92
    %p101 = scmp.eq.s32.totalorder %s18, 0
    %p102 = por %p100, %p101
    %p103 = scmp.ne.s32.totalorder %s91, %s92
    %p104 = scmp.eq.s32.totalorder %s19, 1
    %p105 = por %p103, %p104
    %p107 = scmp.ne.s32.totalorder %s92, %s106
    %p108 = scmp.eq.s32.totalorder %s19, 0
    %p109 = por %p107, %p108
    %s111 = sadd.s32 %s110, 1
    %p114 = scmp.eq.s32.totalorder %s13, 1
    %p115 = scmp.ne.s32.totalorder %s110, %s112
    %p116 = scmp.eq.s32.totalorder %s13, 0
    %p117 = por %p115, %p116
    %p118 = scmp.ne.s32.totalorder %s110, %s112
    %p119 = scmp.eq.s32.totalorder %s18, 1
    %p120 = por %p118, %p119
    %p121 = scmp.ne.s32.totalorder %s112, %s113
    %p122 = scmp.eq.s32.totalorder %s18, 0
    %p123 = por %p121, %p122
    %p124 = scmp.ne.s32.totalorder %s112, %s113
    %p125 = scmp.eq.s32.totalorder %s19, 1
    %p126 = por %p124, %p125
    %p128 = scmp.ne.s32.totalorder %s113, %s127
    %p129 = scmp.eq.s32.totalorder %s19, 0
    %p130 = por %p128, %p129
    %s132 = sadd.s32 %s131, 1
    %p135 = scmp.eq.s32.totalorder %s13, 1
    %p136 = scmp.ne.s32.totalorder %s131, %s133
    %p137 = scmp.eq.s32.totalorder %s13, 0
    %p138 = por %p136, %p137
    %p139 = scmp.ne.s32.totalorder %s131, %s133
    %p140 = scmp.eq.s32.totalorder %s18, 1
    %p141 = por %p139, %p140
    %p142 = scmp.ne.s32.totalorder %s133, %s134
    %p143 = scmp.eq.s32.totalorder %s18, 0
    %p144 = por %p142, %p143
    %p145 = scmp.ne.s32.totalorder %s133, %s134
    %p146 = scmp.eq.s32.totalorder %s19, 1
    %p147 = por %p145, %p146
    %p149 = scmp.ne.s32.totalorder %s134, %s148
    %p150 = scmp.eq.s32.totalorder %s19, 0
    %p151 = por %p149, %p150
    %s153 = sadd.s32 %s152, 1
    %p156 = scmp.eq.s32.totalorder %s13, 1
    %p157 = scmp.ne.s32.totalorder %s152, %s154
    %p158 = scmp.eq.s32.totalorder %s13, 0
    %p159 = por %p157, %p158
    %p160 = scmp.ne.s32.totalorder %s152, %s154
    %p161 = scmp.eq.s32.totalorder %s18, 1
    %p162 = por %p160, %p161
    %p163 = scmp.ne.s32.totalorder %s154, %s155
    %p164 = scmp.eq.s32.totalorder %s18, 0
    %p165 = por %p163, %p164
    %p166 = scmp.ne.s32.totalorder %s154, %s155
    %p167 = scmp.eq.s32.totalorder %s19, 1
    %p168 = por %p166, %p167
    %p170 = scmp.ne.s32.totalorder %s155, %s169
    %p171 = scmp.eq.s32.totalorder %s19, 0
    %p172 = por %p170, %p171
    %s173 = ssub.s32 %s13, %s20
    %p174 = scmp.eq.s32.totalorder %s173, 0
    %s176 = sadd.s32 %s175, 1
    %s177 = scalar_select %p174, %s175, %s176
    %p180 = pneg %p174
    %p181 = scmp.eq.s32.totalorder %s13, 1
    %p182 = por %p180, %p181
    %p183 = scmp.ne.s32.totalorder %s175, %s178
    %p184 = scmp.eq.s32.totalorder %s13, 0
    %p185 = por %p183, %p184
    %p186 = scmp.ne.s32.totalorder %s175, %s178
    %p187 = scmp.eq.s32.totalorder %s18, 1
    %p188 = por %p186, %p187
    %p189 = scmp.ne.s32.totalorder %s178, %s179
    %p190 = scmp.eq.s32.totalorder %s18, 0
    %p191 = por %p189, %p190
    %p192 = scmp.ne.s32.totalorder %s178, %s179
    %p193 = scmp.eq.s32.totalorder %s19, 1
    %p194 = por %p192, %p193
    %p196 = scmp.ne.s32.totalorder %s179, %s195
    %p197 = scmp.eq.s32.totalorder %s19, 0
    %p198 = por %p196, %p197
    %p199 = scmp.le.s32.totalorder 1, %s13
    %p200 = scmp.lt.s32.totalorder %s13, 3
    %p201 = pnand %p199, %p200
    %p202 = pneg %p201
    // Predicated region
    $region9: #{decoder_forward.3} parent=5 // pred_check
      _
    $region10: #{decoder_forward.3} parent=5 // pred_check_branch
      %204 = sbr.rel (%p201) target = $region12
    $region11: #{decoder_forward.3} parent=5 // pred_region
      %s205 = ssub.s32 %s13, 1
      // Predicated region
      $region13: #{decoder_forward.3} parent=11 // pred_check
        %p206 = pneg %p60
      $region14: #{decoder_forward.3} parent=11 // pred_check_branch
        %208 = sbr.rel (%p206) target = $region16
      $region15: #{decoder_forward.3} parent=11 // pred_region
        _
      $region16: #{decoder_forward.3} parent=11 // pred_fallthru
        _
      // Predicated region
      $region17: #{decoder_forward.3} parent=11 // pred_check
        %p209 = pneg %p81
      $region18: #{decoder_forward.3} parent=11 // pred_check_branch
        %211 = sbr.rel (%p209) target = $region20
      $region19: #{decoder_forward.3} parent=11 // pred_region
        _
      $region20: #{decoder_forward.3} parent=11 // pred_fallthru
        _
      // Predicated region
      $region21: #{decoder_forward.3} parent=11 // pred_check
        %p212 = pneg %p102
      $region22: #{decoder_forward.3} parent=11 // pred_check_branch
        %214 = sbr.rel (%p212) target = $region24
      $region23: #{decoder_forward.3} parent=11 // pred_region
        _
      $region24: #{decoder_forward.3} parent=11 // pred_fallthru
        _
      // Predicated region
      $region25: #{decoder_forward.3} parent=11 // pred_check
        %p215 = pneg %p123
      $region26: #{decoder_forward.3} parent=11 // pred_check_branch
        %217 = sbr.rel (%p215) target = $region28
      $region27: #{decoder_forward.3} parent=11 // pred_region
        _
      $region28: #{decoder_forward.3} parent=11 // pred_fallthru
        _
      // Predicated region
      $region29: #{decoder_forward.3} parent=11 // pred_check
        %p218 = pneg %p144
      $region30: #{decoder_forward.3} parent=11 // pred_check_branch
        %220 = sbr.rel (%p218) target = $region32
      $region31: #{decoder_forward.3} parent=11 // pred_region
        _
      $region32: #{decoder_forward.3} parent=11 // pred_fallthru
        _
      // Predicated region
      $region33: #{decoder_forward.3} parent=11 // pred_check
        %p221 = pneg %p165
      $region34: #{decoder_forward.3} parent=11 // pred_check_branch
        %223 = sbr.rel (%p221) target = $region36
      $region35: #{decoder_forward.3} parent=11 // pred_region
        _
      $region36: #{decoder_forward.3} parent=11 // pred_fallthru
        _
    $region12: #{decoder_forward.3} parent=5 // pred_fallthru
      _
    %p224 = scmp.lt.s32.totalorder %s13, 2
    // Predicated region
    $region37: #{decoder_forward.3} parent=5 // pred_check
      %p225 = pneg %p224
    $region38: #{decoder_forward.3} parent=5 // pred_check_branch
      %227 = sbr.rel (%p225) target = $region40
    $region39: #{decoder_forward.3} parent=5 // pred_region
      // Predicated region
      $region41: #{decoder_forward.3} parent=39 // pred_check
        %p228 = pneg %p33
      $region42: #{decoder_forward.3} parent=39 // pred_check_branch
        %230 = sbr.rel (%p228) target = $region44
      $region43: #{decoder_forward.3} parent=39 // pred_region
        %p231 = scmp.lt.s32.totalorder %s13, 1
        %s232 = scalar_select %p231, %s13, 1
        %s233 = smul.addr %s232, 16
        %s234 = smul.addr %s233, 8
        %s235 = scalar_lea.vmem %s0, %s234
      $region44: #{decoder_forward.3} parent=39 // pred_fallthru
        _
    $region40: #{decoder_forward.3} parent=5 // pred_fallthru
      _
    %p236 = scmp.le.s32.totalorder 1, %s13
    %p237 = scmp.lt.s32.totalorder %s13, 3
    %p238 = pnand %p236, %p237
    %p239 = pneg %p238
    // Predicated region
    $region45: #{decoder_forward.3} parent=5 // pred_check
      _
    $region46: #{decoder_forward.3} parent=5 // pred_check_branch
      %241 = sbr.rel (%p238) target = $region48
    $region47: #{decoder_forward.3} parent=5 // pred_region
      %s242 = ssub.s32 %s13, 1
      %p243 = scmp.lt.s32.totalorder %s18, 1
      %s244 = scalar_select %p243, %s18, 1
      %s245 = smul.addr %s244, 16
      %s246 = smul.addr %s245, 8
      %s247 = scalar_lea.vmem %s0, %s246
      %p248 = pneg %p39
      %p249 = pneg %p36
      %p250 = pneg %p60
      %p251 = pneg %p57
      %p252 = pneg %p81
      %p253 = pneg %p78
      %p254 = pneg %p102
      %p255 = pneg %p99
      %p256 = pneg %p123
      %p257 = pneg %p120
      %p258 = pneg %p144
      %p259 = pneg %p141
      %p260 = pneg %p165
      %p261 = pneg %p162
      %p262 = pneg %p191
      %p263 = pneg %p188
      %p264 = scmp.lt.s32.totalorder %s18, 1
      %s265 = scalar_select %p264, %s18, 1
      %s266 = smul.addr %s265, 32
      %s267 = smul.addr %s266, 8
      %s268 = scalar_lea.vmem %s7, %s267
      %p269 = scmp.lt.s32.totalorder %s18, 1
      %s270 = scalar_select %p269, %s18, 1
      %s271 = smul.addr %s270, 16
      %s272 = smul.addr %s271, 8
      %s273 = scalar_lea.vmem %s0, %s272
      %p274 = scmp.lt.s32.totalorder %s18, 1
      %s275 = scalar_select %p274, %s18, 1
      %s276 = smul.addr %s275, 32
      %s277 = smul.addr %s276, 8
      %s278 = scalar_lea.vmem %s7, %s277
      %v280 = vld [vmem:[%s273] sm:$0xff]
      %v281 = vld [vmem:[%s273 + $0x8] sm:$0xff]
      %v282 = vld [vmem:[%s273 + $0x10] sm:$0xff]
      %v283 = vld [vmem:[%s273 + $0x18] sm:$0xff]
      %v284 = vld [vmem:[%s273 + $0x20] sm:$0xff]
      %v285 = vld [vmem:[%s273 + $0x28] sm:$0xff]
      %v286 = vld [vmem:[%s273 + $0x30] sm:$0xff]
      %v287 = vld [vmem:[%s273 + $0x38] sm:$0xff]
      %v288 = vld [vmem:[%s273 + $0x40] sm:$0xff]
      %v289 = vld [vmem:[%s273 + $0x48] sm:$0xff]
      %v290 = vld [vmem:[%s273 + $0x50] sm:$0xff]
      %v291 = vld [vmem:[%s273 + $0x58] sm:$0xff]
      %v292 = vld [vmem:[%s273 + $0x60] sm:$0xff]
      %v293 = vld [vmem:[%s273 + $0x68] sm:$0xff]
      %v294 = vld [vmem:[%s273 + $0x70] sm:$0xff]
      %v295 = vld [vmem:[%s273 + $0x78] sm:$0xff]
      %v296 = vpack.c.bf16 %v281, %v280
      %v297 = vpack.c.bf16 %v283, %v282
      %v298 = vpack.c.bf16 %v285, %v284
      %v299 = vpack.c.bf16 %v287, %v286
      %v300 = vpack.c.bf16 %v289, %v288
      %v301 = vpack.c.bf16 %v291, %v290
      %v302 = vpack.c.bf16 %v293, %v292
      %v303 = vpack.c.bf16 %v295, %v294
      %v304 = vld [vmem:[%s1] sm:$0xff]
      %v305 = vld [vmem:[%s1 + $0x8] sm:$0xf]
      %v306 = vld [vmem:[%s1 + $0xc] sm:$0xff]
      %v307 = vld [vmem:[%s1 + $0x14] sm:$0xf]
      %v308 = vld [vmem:[%s1 + $0x18] sm:$0xff]
      %v309 = vld [vmem:[%s1 + $0x20] sm:$0xf]
      %v310 = vld [vmem:[%s1 + $0x24] sm:$0xff]
      %v311 = vld [vmem:[%s1 + $0x2c] sm:$0xf]
      %v312 = vld [vmem:[%s1 + $0x30] sm:$0xff]
      %v313 = vld [vmem:[%s1 + $0x38] sm:$0xf]
      %v314 = vld [vmem:[%s1 + $0x3c] sm:$0xff]
      %v315 = vld [vmem:[%s1 + $0x44] sm:$0xf]
      %v316 = vld [vmem:[%s1 + $0x48] sm:$0xff]
      %v317 = vld [vmem:[%s1 + $0x50] sm:$0xf]
      %v318 = vld [vmem:[%s1 + $0x54] sm:$0xff]
      %v319 = vld [vmem:[%s1 + $0x5c] sm:$0xf]
      %v320 = vld [vmem:[%s1 + $0x60] sm:$0xff]
      %v321 = vld [vmem:[%s1 + $0x68] sm:$0xf]
      %v322 = vld [vmem:[%s1 + $0x6c] sm:$0xff]
      %v323 = vld [vmem:[%s1 + $0x74] sm:$0xf]
      %v324 = vld [vmem:[%s1 + $0x78] sm:$0xff]
      %v325 = vld [vmem:[%s1 + $0x80] sm:$0xf]
      %v326 = vld [vmem:[%s1 + $0x84] sm:$0xff]
      %v327 = vld [vmem:[%s1 + $0x8c] sm:$0xf]
      %v328 = vld [vmem:[%s1 + $0x90] sm:$0xff]
      %v329 = vld [vmem:[%s1 + $0x98] sm:$0xf]
      %v330 = vld [vmem:[%s1 + $0x9c] sm:$0xff]
      %v331 = vld [vmem:[%s1 + $0xa4] sm:$0xf]
      %v332 = vld [vmem:[%s1 + $0xa8] sm:$0xff]
      %v333 = vld [vmem:[%s1 + $0xb0] sm:$0xf]
      %v334 = vld [vmem:[%s1 + $0xb4] sm:$0xff]
      %v335 = vld [vmem:[%s1 + $0xbc] sm:$0xf]
      %v336 = vld [vmem:[%s2] sm:$0x7]
      %v338 = vlaneseq
      %v339 = vshrl.u32 %v338, 7
      %v340 = vsub.s32 0, %v339
      %v341 = vrot.slane %v336, %v340
      %v342 = vlaneseq
      %v343 = vshrl.u32 %v342, 7
      %v344 = vsub.s32 1, %v343
      %v345 = vrot.slane %v336, %v344
      %v346 = vlaneseq
      %v347 = vshrl.u32 %v346, 7
      %v348 = vsub.s32 2, %v347
      %v349 = vrot.slane %v336, %v348
      %v385 = vunpack.c.l.b16 %v304
      %v386 = vunpack.c.h.b16 %v304
      %v387 = vunpack.c.l.b16 %v305
      %v388 = vunpack.c.l.b16 %v306
      %v389 = vunpack.c.h.b16 %v306
      %v390 = vunpack.c.l.b16 %v307
      %v391 = vunpack.c.l.b16 %v308
      %v392 = vunpack.c.h.b16 %v308
      %v393 = vunpack.c.l.b16 %v309
      %v394 = vunpack.c.l.b16 %v310
      %v395 = vunpack.c.h.b16 %v310
      %v396 = vunpack.c.l.b16 %v311
      %v397 = vunpack.c.l.b16 %v312
      %v398 = vunpack.c.h.b16 %v312
      %v399 = vunpack.c.l.b16 %v313
      %v400 = vunpack.c.l.b16 %v314
      %v401 = vunpack.c.h.b16 %v314
      %v402 = vunpack.c.l.b16 %v315
      %v403 = vunpack.c.l.b16 %v316
      %v404 = vunpack.c.h.b16 %v316
      %v405 = vunpack.c.l.b16 %v317
      %v406 = vunpack.c.l.b16 %v318
      %v407 = vunpack.c.h.b16 %v318
      %v408 = vunpack.c.l.b16 %v319
      %v409 = vunpack.c.l.b16 %v320
      %v410 = vunpack.c.h.b16 %v320
      %v411 = vunpack.c.l.b16 %v321
      %v412 = vunpack.c.l.b16 %v322
      %v413 = vunpack.c.h.b16 %v322
      %v414 = vunpack.c.l.b16 %v323
      %v415 = vunpack.c.l.b16 %v324
      %v416 = vunpack.c.h.b16 %v324
      %v417 = vunpack.c.l.b16 %v325
      %v418 = vunpack.c.l.b16 %v326
      %v419 = vunpack.c.h.b16 %v326
      %v420 = vunpack.c.l.b16 %v327
      %v421 = vunpack.c.l.b16 %v328
      %v422 = vunpack.c.h.b16 %v328
      %v423 = vunpack.c.l.b16 %v329
      %v424 = vunpack.c.l.b16 %v330
      %v425 = vunpack.c.h.b16 %v330
      %v426 = vunpack.c.l.b16 %v331
      %v427 = vunpack.c.l.b16 %v332
      %v428 = vunpack.c.h.b16 %v332
      %v429 = vunpack.c.l.b16 %v333
      %v430 = vunpack.c.l.b16 %v334
      %v431 = vunpack.c.h.b16 %v334
      %v432 = vunpack.c.l.b16 %v335
      %v433 = vpack.c.b16 %v388, %v385
      %v434 = vpack.c.b16 %v389, %v386
      %v435 = vpack.c.b16 %v390, %v387
      %v436 = vpack.c.b16 %v394, %v391
      %v437 = vpack.c.b16 %v395, %v392
      %v438 = vpack.c.b16 %v396, %v393
      %v439 = vpack.c.b16 %v400, %v397
      %v440 = vpack.c.b16 %v401, %v398
      %v441 = vpack.c.b16 %v402, %v399
      %v442 = vpack.c.b16 %v406, %v403
      %v443 = vpack.c.b16 %v407, %v404
      %v444 = vpack.c.b16 %v408, %v405
      %v445 = vpack.c.b16 %v412, %v409
      %v446 = vpack.c.b16 %v413, %v410
      %v447 = vpack.c.b16 %v414, %v411
      %v448 = vpack.c.b16 %v418, %v415
      %v449 = vpack.c.b16 %v419, %v416
      %v450 = vpack.c.b16 %v420, %v417
      %v451 = vpack.c.b16 %v424, %v421
      %v452 = vpack.c.b16 %v425, %v422
      %v453 = vpack.c.b16 %v426, %v423
      %v454 = vpack.c.b16 %v430, %v427
      %v455 = vpack.c.b16 %v431, %v428
      %v456 = vpack.c.b16 %v432, %v429
      %481 = vmatprep.subr.bf16.mxu0 %v455
      %482 = vmatpush1.bf16.msra.mxu0 %v454
      %483 = vmatprep.subr.bf16.mxu0 %v452
      %484 = vmatpush1.bf16.msra.mxu0 %v451
      %485 = vmatprep.subr.bf16.mxu0 %v449
      %486 = vmatpush1.bf16.msra.mxu0 %v448
      %487 = vmatprep.subr.bf16.mxu0 %v446
      %488 = vmatpush1.bf16.msra.mxu0 %v445
      %489 = vmatprep.subr.bf16.mxu0 %v443
      %490 = vmatpush1.bf16.msra.mxu0 %v442
      %491 = vmatprep.subr.bf16.mxu0 %v440
      %492 = vmatpush1.bf16.msra.mxu0 %v439
      %493 = vmatprep.subr.bf16.mxu0 %v437
      %494 = vmatpush1.bf16.msra.mxu0 %v436
      %495 = vmatprep.subr.bf16.mxu0 %v434
      %496 = vmatpush1.bf16.msra.mxu0 %v433
      %497 = vmatprep.subr.bf16.mxu0 0
      %498 = vmatpush2.bf16.msra.mxu0 0
      %499 = vmatprep.subr.bf16.mxu0 0
      %500 = vmatpush2.bf16.msra.mxu0 0
      %501 = vmatprep.subr.bf16.mxu0 0
      %502 = vmatpush2.bf16.msra.mxu0 0
      %503 = vmatprep.subr.bf16.mxu0 0
      %504 = vmatpush2.bf16.msra.mxu0 0
      %505 = vmatprep.subr.bf16.mxu0 0
      %506 = vmatpush2.bf16.msra.mxu0 0
      %507 = vmatprep.subr.bf16.mxu0 0
      %508 = vmatpush2.bf16.msra.mxu0 0
      %509 = vmatprep.subr.bf16.mxu0 0
      %510 = vmatpush2.bf16.msra.mxu0 0
      %511 = vmatprep.subr.bf16.mxu0 0
      %512 = vmatpush2.bf16.msra.mxu0 0
      %513 = vmatprep.mubr.bf16.mxu0 0
      %514 = vmatmul.mubr.bf16.gmra.mxu0 %v296
      %v515 = vpop.f32.mrf.mxu0
      %v516 = vadd.f32 %v341, %v515
      %v517 = vpop.f32.mrf.mxu0
      %v518 = vadd.f32 %v345, %v517
      %v519 = vpop.f32.mrf.mxu0
      %v520 = vadd.f32 %v341, %v519
      %v521 = vpop.f32.mrf.mxu0
      %v522 = vadd.f32 %v345, %v521
      %523 = vmatprep.mubr.bf16.mxu0 0
      %524 = vmatmul.mubr.bf16.gmra.mxu0 %v297
      %v525 = vpop.f32.mrf.mxu0
      %v526 = vadd.f32 %v341, %v525
      %v527 = vpop.f32.mrf.mxu0
      %v528 = vadd.f32 %v345, %v527
      %v529 = vpop.f32.mrf.mxu0
      %v530 = vadd.f32 %v341, %v529
      %v531 = vpop.f32.mrf.mxu0
      %v532 = vadd.f32 %v345, %v531
      %533 = vmatprep.mubr.bf16.mxu0 0
      %534 = vmatmul.mubr.bf16.gmra.mxu0 %v298
      %v535 = vpop.f32.mrf.mxu0
      %v536 = vadd.f32 %v341, %v535
      %v537 = vpop.f32.mrf.mxu0
      %v538 = vadd.f32 %v345, %v537
      %v539 = vpop.f32.mrf.mxu0
      %v540 = vadd.f32 %v341, %v539
      %v541 = vpop.f32.mrf.mxu0
      %v542 = vadd.f32 %v345, %v541
      %543 = vmatprep.mubr.bf16.mxu0 0
      %544 = vmatmul.mubr.bf16.gmra.mxu0 %v299
      %v545 = vpop.f32.mrf.mxu0
      %v546 = vadd.f32 %v341, %v545
      %v547 = vpop.f32.mrf.mxu0
      %v548 = vadd.f32 %v345, %v547
      %v549 = vpop.f32.mrf.mxu0
      %v550 = vadd.f32 %v341, %v549
      %v551 = vpop.f32.mrf.mxu0
      %v552 = vadd.f32 %v345, %v551
      %553 = vmatprep.mubr.bf16.mxu0 0
      %554 = vmatmul.mubr.bf16.gmra.mxu0 %v300
      %v555 = vpop.f32.mrf.mxu0
      %v556 = vadd.f32 %v341, %v555
      %v557 = vpop.f32.mrf.mxu0
      %v558 = vadd.f32 %v345, %v557
      %v559 = vpop.f32.mrf.mxu0
      %v560 = vadd.f32 %v341, %v559
      %v561 = vpop.f32.mrf.mxu0
      %v562 = vadd.f32 %v345, %v561
      %563 = vmatprep.mubr.bf16.mxu0 0
      %564 = vmatmul.mubr.bf16.gmra.mxu0 %v301
      %v565 = vpop.f32.mrf.mxu0
      %v566 = vadd.f32 %v341, %v565
      %v567 = vpop.f32.mrf.mxu0
      %v568 = vadd.f32 %v345, %v567
      %v569 = vpop.f32.mrf.mxu0
      %v570 = vadd.f32 %v341, %v569
      %v571 = vpop.f32.mrf.mxu0
      %v572 = vadd.f32 %v345, %v571
      %573 = vmatprep.mubr.bf16.mxu0 0
      %574 = vmatmul.mubr.bf16.gmra.mxu0 %v302
      %v575 = vpop.f32.mrf.mxu0
      %v576 = vadd.f32 %v341, %v575
      %v577 = vpop.f32.mrf.mxu0
      %v578 = vadd.f32 %v345, %v577
      %v579 = vpop.f32.mrf.mxu0
      %v580 = vadd.f32 %v341, %v579
      %v581 = vpop.f32.mrf.mxu0
      %v582 = vadd.f32 %v345, %v581
      %583 = vmatprep.mubr.bf16.mxu0 0
      %584 = vmatmul.mubr.bf16.gmra.mxu0 %v303
      %v585 = vpop.f32.mrf.mxu0
      %v586 = vadd.f32 %v341, %v585
      %v587 = vpop.f32.mrf.mxu0
      %v588 = vadd.f32 %v345, %v587
      %v589 = vpop.f32.mrf.mxu0
      %v590 = vadd.f32 %v341, %v589
      %v591 = vpop.f32.mrf.mxu0
      %v592 = vadd.f32 %v345, %v591
      %593 = vdwg.mxu0
      %594 = vmatprep.subr.bf16.mxu0 0
      %595 = vmatpush1.bf16.msra.mxu0 %v456
      %596 = vmatprep.subr.bf16.mxu0 0
      %597 = vmatpush1.bf16.msra.mxu0 %v453
      %598 = vmatprep.subr.bf16.mxu0 0
      %599 = vmatpush1.bf16.msra.mxu0 %v450
      %600 = vmatprep.subr.bf16.mxu0 0
      %601 = vmatpush1.bf16.msra.mxu0 %v447
      %602 = vmatprep.subr.bf16.mxu0 0
      %603 = vmatpush1.bf16.msra.mxu0 %v444
      %604 = vmatprep.subr.bf16.mxu0 0
      %605 = vmatpush1.bf16.msra.mxu0 %v441
      %606 = vmatprep.subr.bf16.mxu0 0
      %607 = vmatpush1.bf16.msra.mxu0 %v438
      %608 = vmatprep.subr.bf16.mxu0 0
      %609 = vmatpush1.bf16.msra.mxu0 %v435
      %610 = vmatprep.subr.bf16.mxu0 0
      %611 = vmatpush2.bf16.msra.mxu0 0
      %612 = vmatprep.subr.bf16.mxu0 0
      %613 = vmatpush2.bf16.msra.mxu0 0
      %614 = vmatprep.subr.bf16.mxu0 0
      %615 = vmatpush2.bf16.msra.mxu0 0
      %616 = vmatprep.subr.bf16.mxu0 0
      %617 = vmatpush2.bf16.msra.mxu0 0
      %618 = vmatprep.subr.bf16.mxu0 0
      %619 = vmatpush2.bf16.msra.mxu0 0
      %620 = vmatprep.subr.bf16.mxu0 0
      %621 = vmatpush2.bf16.msra.mxu0 0
      %622 = vmatprep.subr.bf16.mxu0 0
      %623 = vmatpush2.bf16.msra.mxu0 0
      %624 = vmatprep.subr.bf16.mxu0 0
      %625 = vmatpush2.bf16.msra.mxu0 0
      %626 = vmatprep.mubr.bf16.mxu0 0
      %627 = vmatmul.mubr.bf16.gmra.mxu0 %v296
      %v628 = vpop.f32.mrf.mxu0
      %v629 = vadd.f32 %v349, %v628
      %v630 = vpop.f32.mrf.mxu0
      %v631 = vpop.f32.mrf.mxu0
      %v632 = vadd.f32 %v349, %v631
      %v633 = vpop.f32.mrf.mxu0
      %634 = vmatprep.mubr.bf16.mxu0 0
      %635 = vmatmul.mubr.bf16.gmra.mxu0 %v297
      %v636 = vpop.f32.mrf.mxu0
      %v637 = vadd.f32 %v349, %v636
      %v638 = vpop.f32.mrf.mxu0
      %v639 = vpop.f32.mrf.mxu0
      %v640 = vadd.f32 %v349, %v639
      %v641 = vpop.f32.mrf.mxu0
      %642 = vmatprep.mubr.bf16.mxu0 0
      %643 = vmatmul.mubr.bf16.gmra.mxu0 %v298
      %v644 = vpop.f32.mrf.mxu0
      %v645 = vadd.f32 %v349, %v644
      %v646 = vpop.f32.mrf.mxu0
      %v647 = vpop.f32.mrf.mxu0
      %v648 = vadd.f32 %v349, %v647
      %v649 = vpop.f32.mrf.mxu0
      %650 = vmatprep.mubr.bf16.mxu0 0
      %651 = vmatmul.mubr.bf16.gmra.mxu0 %v299
      %v652 = vpop.f32.mrf.mxu0
      %v653 = vadd.f32 %v349, %v652
      %v654 = vpop.f32.mrf.mxu0
      %v655 = vpop.f32.mrf.mxu0
      %v656 = vadd.f32 %v349, %v655
      %v657 = vpop.f32.mrf.mxu0
      %658 = vmatprep.mubr.bf16.mxu0 0
      %659 = vmatmul.mubr.bf16.gmra.mxu0 %v300
      %v660 = vpop.f32.mrf.mxu0
      %v661 = vadd.f32 %v349, %v660
      %v662 = vpop.f32.mrf.mxu0
      %v663 = vpop.f32.mrf.mxu0
      %v664 = vadd.f32 %v349, %v663
      %v665 = vpop.f32.mrf.mxu0
      %666 = vmatprep.mubr.bf16.mxu0 0
      %667 = vmatmul.mubr.bf16.gmra.mxu0 %v301
      %v668 = vpop.f32.mrf.mxu0
      %v669 = vadd.f32 %v349, %v668
      %v670 = vpop.f32.mrf.mxu0
      %v671 = vpop.f32.mrf.mxu0
      %v672 = vadd.f32 %v349, %v671
      %v673 = vpop.f32.mrf.mxu0
      %674 = vmatprep.mubr.bf16.mxu0 0
      %675 = vmatmul.mubr.bf16.gmra.mxu0 %v302
      %v676 = vpop.f32.mrf.mxu0
      %v677 = vadd.f32 %v349, %v676
      %v678 = vpop.f32.mrf.mxu0
      %v679 = vpop.f32.mrf.mxu0
      %v680 = vadd.f32 %v349, %v679
      %v681 = vpop.f32.mrf.mxu0
      %682 = vmatprep.mubr.bf16.mxu0 0
      %683 = vmatmul.mubr.bf16.gmra.mxu0 %v303
      %v684 = vpop.f32.mrf.mxu0
      %v685 = vadd.f32 %v349, %v684
      %v686 = vpop.f32.mrf.mxu0
      %v687 = vpop.f32.mrf.mxu0
      %v688 = vadd.f32 %v349, %v687
      %v689 = vpop.f32.mrf.mxu0
      %690 = vdwg.mxu0
      %v691 = vmul.f32 %v516, 0.17677669
      %v692 = vmul.f32 %v520, 0.17677669
      %v693 = vmul.f32 %v526, 0.17677669
      %v694 = vmul.f32 %v530, 0.17677669
      %v695 = vmul.f32 %v536, 0.17677669
      %v696 = vmul.f32 %v540, 0.17677669
      %v697 = vmul.f32 %v546, 0.17677669
      %v698 = vmul.f32 %v550, 0.17677669
      %v699 = vmul.f32 %v556, 0.17677669
      %v700 = vmul.f32 %v560, 0.17677669
      %v701 = vmul.f32 %v566, 0.17677669
      %v702 = vmul.f32 %v570, 0.17677669
      %v703 = vmul.f32 %v576, 0.17677669
      %v704 = vmul.f32 %v580, 0.17677669
      %v705 = vmul.f32 %v586, 0.17677669
      %v706 = vmul.f32 %v590, 0.17677669
      %v707 = vpack.c.bf16 %v692, %v691
      %v708 = vpack.c.bf16 %v694, %v693
      %v709 = vpack.c.bf16 %v696, %v695
      %v710 = vpack.c.bf16 %v698, %v697
      %v711 = vpack.c.bf16 %v700, %v699
      %v712 = vpack.c.bf16 %v702, %v701
      %v713 = vpack.c.bf16 %v704, %v703
      %v714 = vpack.c.bf16 %v706, %v705
      %v715 = vpack.c.bf16 %v522, %v518
      %v716 = vpack.c.bf16 %v532, %v528
      %v717 = vpack.c.bf16 %v542, %v538
      %v718 = vpack.c.bf16 %v552, %v548
      %v719 = vpack.c.bf16 %v562, %v558
      %v720 = vpack.c.bf16 %v572, %v568
      %v721 = vpack.c.bf16 %v582, %v578
      %v722 = vpack.c.bf16 %v592, %v588
      %v723 = vpack.c.bf16 %v632, %v629
      %v724 = vpack.c.bf16 %v640, %v637
      %v725 = vpack.c.bf16 %v648, %v645
      %v726 = vpack.c.bf16 %v656, %v653
      %v727 = vpack.c.bf16 %v664, %v661
      %v728 = vpack.c.bf16 %v672, %v669
      %v729 = vpack.c.bf16 %v680, %v677
      %v730 = vpack.c.bf16 %v688, %v685
      %vm731 = vcmask 261120
      %v733 = vsel %vm731, %v707, 0
      %v736 = vsel %vm731, %v708, 0
      %v739 = vsel %vm731, %v709, 0
      %v742 = vsel %vm731, %v710, 0
      %v745 = vsel %vm731, %v711, 0
      %v748 = vsel %vm731, %v712, 0
      %v751 = vsel %vm731, %v713, 0
      %v754 = vsel %vm731, %v714, 0
      %v757 = vsel %vm731, %v715, 0
      %v760 = vsel %vm731, %v716, 0
      %v763 = vsel %vm731, %v717, 0
      %v766 = vsel %vm731, %v718, 0
      %v769 = vsel %vm731, %v719, 0
      %v772 = vsel %vm731, %v720, 0
      %v775 = vsel %vm731, %v721, 0
      %v778 = vsel %vm731, %v722, 0
      %780 = vmatprep.subr.bf16.mxu0 0
      %781 = vmatpush1.bf16.xpose.msra.mxu0 %v778
      %782 = vmatprep.subr.bf16.mxu0 0
      %783 = vmatpush1.bf16.xpose.msra.mxu0 %v775
      %784 = vmatprep.subr.bf16.mxu0 0
      %785 = vmatpush1.bf16.xpose.msra.mxu0 %v772
      %786 = vmatprep.subr.bf16.mxu0 0
      %787 = vmatpush1.bf16.xpose.msra.mxu0 %v769
      %788 = vmatprep.subr.bf16.mxu0 0
      %789 = vmatpush1.bf16.xpose.msra.mxu0 %v766
      %790 = vmatprep.subr.bf16.mxu0 0
      %791 = vmatpush1.bf16.xpose.msra.mxu0 %v763
      %792 = vmatprep.subr.bf16.mxu0 0
      %793 = vmatpush1.bf16.xpose.msra.mxu0 %v760
      %794 = vmatprep.subr.bf16.mxu0 0
      %795 = vmatpush1.bf16.xpose.msra.mxu0 %v757
      %796 = vmatprep.subr.bf16.mxu0 0
      %797 = vmatpush2.bf16.xpose.msra.mxu0 0
      %798 = vmatprep.subr.bf16.mxu0 0
      %799 = vmatpush2.bf16.xpose.msra.mxu0 0
      %800 = vmatprep.subr.bf16.mxu0 0
      %801 = vmatpush2.bf16.xpose.msra.mxu0 0
      %802 = vmatprep.subr.bf16.mxu0 0
      %803 = vmatpush2.bf16.xpose.msra.mxu0 0
      %804 = vmatprep.subr.bf16.mxu0 0
      %805 = vmatpush2.bf16.xpose.msra.mxu0 0
      %806 = vmatprep.subr.bf16.mxu0 0
      %807 = vmatpush2.bf16.xpose.msra.mxu0 0
      %808 = vmatprep.subr.bf16.mxu0 0
      %809 = vmatpush2.bf16.xpose.msra.mxu0 0
      %810 = vmatprep.subr.bf16.mxu0 0
      %811 = vmatpush2.bf16.xpose.msra.mxu0 0
      %812 = vmatprep.mubr.bf16.mxu0 0
      %813 = vmatmul.mubr.bf16.gmra.mxu0 %v733
      %v814 = vpop.f32.mrf.mxu0
      %v815 = vadd.f32 0.0, %v814
      %v816 = vpop.f32.mrf.mxu0
      %v817 = vpop.f32.mrf.mxu0
      %v818 = vadd.f32 0.0, %v817
      %v819 = vpop.f32.mrf.mxu0
      %820 = vmatprep.mubr.bf16.mxu0 0
      %821 = vmatmul.mubr.bf16.gmra.mxu0 %v736
      %v822 = vpop.f32.mrf.mxu0
      %v823 = vadd.f32 0.0, %v822
      %v824 = vpop.f32.mrf.mxu0
      %v825 = vpop.f32.mrf.mxu0
      %v826 = vadd.f32 0.0, %v825
      %v827 = vpop.f32.mrf.mxu0
      %828 = vmatprep.mubr.bf16.mxu0 0
      %829 = vmatmul.mubr.bf16.gmra.mxu0 %v739
      %v830 = vpop.f32.mrf.mxu0
      %v831 = vadd.f32 0.0, %v830
      %v832 = vpop.f32.mrf.mxu0
      %v833 = vpop.f32.mrf.mxu0
      %v834 = vadd.f32 0.0, %v833
      %v835 = vpop.f32.mrf.mxu0
      %836 = vmatprep.mubr.bf16.mxu0 0
      %837 = vmatmul.mubr.bf16.gmra.mxu0 %v742
      %v838 = vpop.f32.mrf.mxu0
      %v839 = vadd.f32 0.0, %v838
      %v840 = vpop.f32.mrf.mxu0
      %v841 = vpop.f32.mrf.mxu0
      %v842 = vadd.f32 0.0, %v841
      %v843 = vpop.f32.mrf.mxu0
      %844 = vmatprep.mubr.bf16.mxu0 0
      %845 = vmatmul.mubr.bf16.gmra.mxu0 %v745
      %v846 = vpop.f32.mrf.mxu0
      %v847 = vadd.f32 0.0, %v846
      %v848 = vpop.f32.mrf.mxu0
      %v849 = vpop.f32.mrf.mxu0
      %v850 = vadd.f32 0.0, %v849
      %v851 = vpop.f32.mrf.mxu0
      %852 = vmatprep.mubr.bf16.mxu0 0
      %853 = vmatmul.mubr.bf16.gmra.mxu0 %v748
      %v854 = vpop.f32.mrf.mxu0
      %v855 = vadd.f32 0.0, %v854
      %v856 = vpop.f32.mrf.mxu0
      %v857 = vpop.f32.mrf.mxu0
      %v858 = vadd.f32 0.0, %v857
      %v859 = vpop.f32.mrf.mxu0
      %860 = vmatprep.mubr.bf16.mxu0 0
      %861 = vmatmul.mubr.bf16.gmra.mxu0 %v751
      %v862 = vpop.f32.mrf.mxu0
      %v863 = vadd.f32 0.0, %v862
      %v864 = vpop.f32.mrf.mxu0
      %v865 = vpop.f32.mrf.mxu0
      %v866 = vadd.f32 0.0, %v865
      %v867 = vpop.f32.mrf.mxu0
      %868 = vmatprep.mubr.bf16.mxu0 0
      %869 = vmatmul.mubr.bf16.gmra.mxu0 %v754
      %v870 = vpop.f32.mrf.mxu0
      %v871 = vadd.f32 0.0, %v870
      %v872 = vpop.f32.mrf.mxu0
      %v873 = vpop.f32.mrf.mxu0
      %v874 = vadd.f32 0.0, %v873
      %v875 = vpop.f32.mrf.mxu0
      %876 = vdwg.mxu0
      %877 = vmax.xlane.f32.xlu0 %v815
      %v878 = vpop.xlane.xlu0 %877
      %879 = vmax.xlane.f32.xlu0 %v818
      %v880 = vpop.xlane.xlu0 %879
      %881 = vmax.xlane.f32.xlu0 %v823
      %v882 = vpop.xlane.xlu0 %881
      %883 = vmax.xlane.f32.xlu0 %v826
      %v884 = vpop.xlane.xlu0 %883
      %885 = vmax.xlane.f32.xlu0 %v831
      %v886 = vpop.xlane.xlu0 %885
      %887 = vmax.xlane.f32.xlu0 %v834
      %v888 = vpop.xlane.xlu0 %887
      %889 = vmax.xlane.f32.xlu0 %v839
      %v890 = vpop.xlane.xlu0 %889
      %891 = vmax.xlane.f32.xlu0 %v842
      %v892 = vpop.xlane.xlu0 %891
      %893 = vmax.xlane.f32.xlu0 %v847
      %v894 = vpop.xlane.xlu0 %893
      %895 = vmax.xlane.f32.xlu0 %v850
      %v896 = vpop.xlane.xlu0 %895
      %897 = vmax.xlane.f32.xlu0 %v855
      %v898 = vpop.xlane.xlu0 %897
      %899 = vmax.xlane.f32.xlu0 %v858
      %v900 = vpop.xlane.xlu0 %899
      %901 = vmax.xlane.f32.xlu0 %v863
      %v902 = vpop.xlane.xlu0 %901
      %903 = vmax.xlane.f32.xlu0 %v866
      %v904 = vpop.xlane.xlu0 %903
      %905 = vmax.xlane.f32.xlu0 %v871
      %v906 = vpop.xlane.xlu0 %905
      %907 = vmax.xlane.f32.xlu0 %v874
      %v908 = vpop.xlane.xlu0 %907
      %v909 = vsub.f32 %v815, %v878
      %v910 = vsub.f32 %v818, %v880
      %v911 = vsub.f32 %v823, %v882
      %v912 = vsub.f32 %v826, %v884
      %v913 = vsub.f32 %v831, %v886
      %v914 = vsub.f32 %v834, %v888
      %v915 = vsub.f32 %v839, %v890
      %v916 = vsub.f32 %v842, %v892
      %v917 = vsub.f32 %v847, %v894
      %v918 = vsub.f32 %v850, %v896
      %v919 = vsub.f32 %v855, %v898
      %v920 = vsub.f32 %v858, %v900
      %v921 = vsub.f32 %v863, %v902
      %v922 = vsub.f32 %v866, %v904
      %v923 = vsub.f32 %v871, %v906
      %v924 = vsub.f32 %v874, %v908
      %v925 = vmul.f32 %v909, 1.442695
      %v926 = vpow.pop %v925
      %v927 = vmul.f32 %v910, 1.442695
      %v928 = vpow.pop %v927
      %v929 = vmul.f32 %v911, 1.442695
      %v930 = vpow.pop %v929
      %v931 = vmul.f32 %v912, 1.442695
      %v932 = vpow.pop %v931
      %v933 = vmul.f32 %v913, 1.442695
      %v934 = vpow.pop %v933
      %v935 = vmul.f32 %v914, 1.442695
      %v936 = vpow.pop %v935
      %v937 = vmul.f32 %v915, 1.442695
      %v938 = vpow.pop %v937
      %v939 = vmul.f32 %v916, 1.442695
      %v940 = vpow.pop %v939
      %v941 = vmul.f32 %v917, 1.442695
      %v942 = vpow.pop %v941
      %v943 = vmul.f32 %v918, 1.442695
      %v944 = vpow.pop %v943
      %v945 = vmul.f32 %v919, 1.442695
      %v946 = vpow.pop %v945
      %v947 = vmul.f32 %v920, 1.442695
      %v948 = vpow.pop %v947
      %v949 = vmul.f32 %v921, 1.442695
      %v950 = vpow.pop %v949
      %v951 = vmul.f32 %v922, 1.442695
      %v952 = vpow.pop %v951
      %v953 = vmul.f32 %v923, 1.442695
      %v954 = vpow.pop %v953
      %v955 = vmul.f32 %v924, 1.442695
      %v956 = vpow.pop %v955
      %957 = vadd.xlane.f32.xlu0 %v926
      %v958 = vpop.xlane.xlu0 %957
      %959 = vadd.xlane.f32.xlu0 %v928
      %v960 = vpop.xlane.xlu0 %959
      %961 = vadd.xlane.f32.xlu0 %v930
      %v962 = vpop.xlane.xlu0 %961
      %963 = vadd.xlane.f32.xlu0 %v932
      %v964 = vpop.xlane.xlu0 %963
      %965 = vadd.xlane.f32.xlu0 %v934
      %v966 = vpop.xlane.xlu0 %965
      %967 = vadd.xlane.f32.xlu0 %v936
      %v968 = vpop.xlane.xlu0 %967
      %969 = vadd.xlane.f32.xlu0 %v938
      %v970 = vpop.xlane.xlu0 %969
      %971 = vadd.xlane.f32.xlu0 %v940
      %v972 = vpop.xlane.xlu0 %971
      %973 = vadd.xlane.f32.xlu0 %v942
      %v974 = vpop.xlane.xlu0 %973
      %975 = vadd.xlane.f32.xlu0 %v944
      %v976 = vpop.xlane.xlu0 %975
      %977 = vadd.xlane.f32.xlu0 %v946
      %v978 = vpop.xlane.xlu0 %977
      %979 = vadd.xlane.f32.xlu0 %v948
      %v980 = vpop.xlane.xlu0 %979
      %981 = vadd.xlane.f32.xlu0 %v950
      %v982 = vpop.xlane.xlu0 %981
      %983 = vadd.xlane.f32.xlu0 %v952
      %v984 = vpop.xlane.xlu0 %983
      %985 = vadd.xlane.f32.xlu0 %v954
      %v986 = vpop.xlane.xlu0 %985
      %987 = vadd.xlane.f32.xlu0 %v956
      %v988 = vpop.xlane.xlu0 %987
      %v989 = vrcp.pop %v958
      %v990 = vrcp.pop %v960
      %v991 = vrcp.pop %v962
      %v992 = vrcp.pop %v964
      %v993 = vrcp.pop %v966
      %v994 = vrcp.pop %v968
      %v995 = vrcp.pop %v970
      %v996 = vrcp.pop %v972
      %v997 = vrcp.pop %v974
      %v998 = vrcp.pop %v976
      %v999 = vrcp.pop %v978
      %v1000 = vrcp.pop %v980
      %v1001 = vrcp.pop %v982
      %v1002 = vrcp.pop %v984
      %v1003 = vrcp.pop %v986
      %v1004 = vrcp.pop %v988
      %v1005 = vmul.f32 %v926, %v989
      %v1006 = vmul.f32 %v928, %v990
      %v1007 = vmul.f32 %v930, %v991
      %v1008 = vmul.f32 %v932, %v992
      %v1009 = vmul.f32 %v934, %v993
      %v1010 = vmul.f32 %v936, %v994
      %v1011 = vmul.f32 %v938, %v995
      %v1012 = vmul.f32 %v940, %v996
      %v1013 = vmul.f32 %v942, %v997
      %v1014 = vmul.f32 %v944, %v998
      %v1015 = vmul.f32 %v946, %v999
      %v1016 = vmul.f32 %v948, %v1000
      %v1017 = vmul.f32 %v950, %v1001
      %v1018 = vmul.f32 %v952, %v1002
      %v1019 = vmul.f32 %v954, %v1003
      %v1020 = vmul.f32 %v956, %v1004
      %v1021 = vpack.c.bf16 %v1006, %v1005
      %v1022 = vpack.c.bf16 %v1008, %v1007
      %v1023 = vpack.c.bf16 %v1010, %v1009
      %v1024 = vpack.c.bf16 %v1012, %v1011
      %v1025 = vpack.c.bf16 %v1014, %v1013
      %v1026 = vpack.c.bf16 %v1016, %v1015
      %v1027 = vpack.c.bf16 %v1018, %v1017
      %v1028 = vpack.c.bf16 %v1020, %v1019
      %1029 = vmatprep.subr.bf16.mxu0 0
      %1030 = vmatpush1.bf16.msra.mxu0 %v730
      %1031 = vmatprep.subr.bf16.mxu0 0
      %1032 = vmatpush1.bf16.msra.mxu0 %v729
      %1033 = vmatprep.subr.bf16.mxu0 0
      %1034 = vmatpush1.bf16.msra.mxu0 %v728
      %1035 = vmatprep.subr.bf16.mxu0 0
      %1036 = vmatpush1.bf16.msra.mxu0 %v727
      %1037 = vmatprep.subr.bf16.mxu0 0
      %1038 = vmatpush1.bf16.msra.mxu0 %v726
      %1039 = vmatprep.subr.bf16.mxu0 0
      %1040 = vmatpush1.bf16.msra.mxu0 %v725
      %1041 = vmatprep.subr.bf16.mxu0 0
      %1042 = vmatpush1.bf16.msra.mxu0 %v724
      %1043 = vmatprep.subr.bf16.mxu0 0
      %1044 = vmatpush1.bf16.msra.mxu0 %v723
      %1045 = vmatprep.subr.bf16.mxu0 0
      %1046 = vmatpush2.bf16.msra.mxu0 0
      %1047 = vmatprep.subr.bf16.mxu0 0
      %1048 = vmatpush2.bf16.msra.mxu0 0
      %1049 = vmatprep.subr.bf16.mxu0 0
      %1050 = vmatpush2.bf16.msra.mxu0 0
      %1051 = vmatprep.subr.bf16.mxu0 0
      %1052 = vmatpush2.bf16.msra.mxu0 0
      %1053 = vmatprep.subr.bf16.mxu0 0
      %1054 = vmatpush2.bf16.msra.mxu0 0
      %1055 = vmatprep.subr.bf16.mxu0 0
      %1056 = vmatpush2.bf16.msra.mxu0 0
      %1057 = vmatprep.subr.bf16.mxu0 0
      %1058 = vmatpush2.bf16.msra.mxu0 0
      %1059 = vmatprep.subr.bf16.mxu0 0
      %1060 = vmatpush2.bf16.msra.mxu0 0
      %1061 = vmatprep.mubr.bf16.mxu0 0
      %1062 = vmatmul.mubr.bf16.gmra.mxu0 %v1021
      %v1063 = vpop.f32.mrf.mxu0
      %v1064 = vadd.f32 0.0, %v1063
      %v1065 = vpop.f32.mrf.mxu0
      %v1066 = vpop.f32.mrf.mxu0
      %v1067 = vadd.f32 0.0, %v1066
      %v1068 = vpop.f32.mrf.mxu0
      %1069 = vmatprep.mubr.bf16.mxu0 0
      %1070 = vmatmul.mubr.bf16.gmra.mxu0 %v1022
      %v1071 = vpop.f32.mrf.mxu0
      %v1072 = vadd.f32 0.0, %v1071
      %v1073 = vpop.f32.mrf.mxu0
      %v1074 = vpop.f32.mrf.mxu0
      %v1075 = vadd.f32 0.0, %v1074
      %v1076 = vpop.f32.mrf.mxu0
      %1077 = vmatprep.mubr.bf16.mxu0 0
      %1078 = vmatmul.mubr.bf16.gmra.mxu0 %v1023
      %v1079 = vpop.f32.mrf.mxu0
      %v1080 = vadd.f32 0.0, %v1079
      %v1081 = vpop.f32.mrf.mxu0
      %v1082 = vpop.f32.mrf.mxu0
      %v1083 = vadd.f32 0.0, %v1082
      %v1084 = vpop.f32.mrf.mxu0
      %1085 = vmatprep.mubr.bf16.mxu0 0
      %1086 = vmatmul.mubr.bf16.gmra.mxu0 %v1024
      %v1087 = vpop.f32.mrf.mxu0
      %v1088 = vadd.f32 0.0, %v1087
      %v1089 = vpop.f32.mrf.mxu0
      %v1090 = vpop.f32.mrf.mxu0
      %v1091 = vadd.f32 0.0, %v1090
      %v1092 = vpop.f32.mrf.mxu0
      %1093 = vmatprep.mubr.bf16.mxu0 0
      %1094 = vmatmul.mubr.bf16.gmra.mxu0 %v1025
      %v1095 = vpop.f32.mrf.mxu0
      %v1096 = vadd.f32 0.0, %v1095
      %v1097 = vpop.f32.mrf.mxu0
      %v1098 = vpop.f32.mrf.mxu0
      %v1099 = vadd.f32 0.0, %v1098
      %v1100 = vpop.f32.mrf.mxu0
      %1101 = vmatprep.mubr.bf16.mxu0 0
      %1102 = vmatmul.mubr.bf16.gmra.mxu0 %v1026
      %v1103 = vpop.f32.mrf.mxu0
      %v1104 = vadd.f32 0.0, %v1103
      %v1105 = vpop.f32.mrf.mxu0
      %v1106 = vpop.f32.mrf.mxu0
      %v1107 = vadd.f32 0.0, %v1106
      %v1108 = vpop.f32.mrf.mxu0
      %1109 = vmatprep.mubr.bf16.mxu0 0
      %1110 = vmatmul.mubr.bf16.gmra.mxu0 %v1027
      %v1111 = vpop.f32.mrf.mxu0
      %v1112 = vadd.f32 0.0, %v1111
      %v1113 = vpop.f32.mrf.mxu0
      %v1114 = vpop.f32.mrf.mxu0
      %v1115 = vadd.f32 0.0, %v1114
      %v1116 = vpop.f32.mrf.mxu0
      %1117 = vmatprep.mubr.bf16.mxu0 0
      %1118 = vmatmul.mubr.bf16.gmra.mxu0 %v1028
      %v1119 = vpop.f32.mrf.mxu0
      %v1120 = vadd.f32 0.0, %v1119
      %v1121 = vpop.f32.mrf.mxu0
      %v1122 = vpop.f32.mrf.mxu0
      %v1123 = vadd.f32 0.0, %v1122
      %v1124 = vpop.f32.mrf.mxu0
      %1125 = vdwg.mxu0
      %1126 = vst.msk [vmem:[#allocation2] sm:$0xff] %vm731, %v1064
      %1127 = vst.msk [vmem:[#allocation2 + $0x8] sm:$0xff] %vm731, %v1067
      %1128 = vst.msk [vmem:[#allocation2 + $0x10] sm:$0xff] %vm731, %v1072
      %1129 = vst.msk [vmem:[#allocation2 + $0x18] sm:$0xff] %vm731, %v1075
      %1130 = vst.msk [vmem:[#allocation2 + $0x20] sm:$0xff] %vm731, %v1080
      %1131 = vst.msk [vmem:[#allocation2 + $0x28] sm:$0xff] %vm731, %v1083
      %1132 = vst.msk [vmem:[#allocation2 + $0x30] sm:$0xff] %vm731, %v1088
      %1133 = vst.msk [vmem:[#allocation2 + $0x38] sm:$0xff] %vm731, %v1091
      %1134 = vst.msk [vmem:[#allocation2 + $0x40] sm:$0xff] %vm731, %v1096
      %1135 = vst.msk [vmem:[#allocation2 + $0x48] sm:$0xff] %vm731, %v1099
      %1136 = vst.msk [vmem:[#allocation2 + $0x50] sm:$0xff] %vm731, %v1104
      %1137 = vst.msk [vmem:[#allocation2 + $0x58] sm:$0xff] %vm731, %v1107
      %1138 = vst.msk [vmem:[#allocation2 + $0x60] sm:$0xff] %vm731, %v1112
      %1139 = vst.msk [vmem:[#allocation2 + $0x68] sm:$0xff] %vm731, %v1115
      %1140 = vst.msk [vmem:[#allocation2 + $0x70] sm:$0xff] %vm731, %v1120
      %1141 = vst.msk [vmem:[#allocation2 + $0x78] sm:$0xff] %vm731, %v1123
      %1150 = vrot.lane.b32.xlu0 %v707, 96
      %v1151 = vpop.permute.xlu0 %1150
      %1152 = vrot.lane.b32.xlu0 %v708, 96
      %v1153 = vpop.permute.xlu0 %1152
      %1154 = vrot.lane.b32.xlu0 %v709, 96
      %v1155 = vpop.permute.xlu0 %1154
      %1156 = vrot.lane.b32.xlu0 %v710, 96
      %v1157 = vpop.permute.xlu0 %1156
      %1158 = vrot.lane.b32.xlu0 %v711, 96
      %v1159 = vpop.permute.xlu0 %1158
      %1160 = vrot.lane.b32.xlu0 %v712, 96
      %v1161 = vpop.permute.xlu0 %1160
      %1162 = vrot.lane.b32.xlu0 %v713, 96
      %v1163 = vpop.permute.xlu0 %1162
      %1164 = vrot.lane.b32.xlu0 %v714, 96
      %v1165 = vpop.permute.xlu0 %1164
      %1174 = vrot.lane.b32.xlu0 %v715, 96
      %v1175 = vpop.permute.xlu0 %1174
      %1176 = vrot.lane.b32.xlu0 %v716, 96
      %v1177 = vpop.permute.xlu0 %1176
      %1178 = vrot.lane.b32.xlu0 %v717, 96
      %v1179 = vpop.permute.xlu0 %1178
      %1180 = vrot.lane.b32.xlu0 %v718, 96
      %v1181 = vpop.permute.xlu0 %1180
      %1182 = vrot.lane.b32.xlu0 %v719, 96
      %v1183 = vpop.permute.xlu0 %1182
      %1184 = vrot.lane.b32.xlu0 %v720, 96
      %v1185 = vpop.permute.xlu0 %1184
      %1186 = vrot.lane.b32.xlu0 %v721, 96
      %v1187 = vpop.permute.xlu0 %1186
      %1188 = vrot.lane.b32.xlu0 %v722, 96
      %v1189 = vpop.permute.xlu0 %1188
      %v1191 = vsel %vm731, %v1151, 0
      %v1194 = vsel %vm731, %v1153, 0
      %v1197 = vsel %vm731, %v1155, 0
      %v1200 = vsel %vm731, %v1157, 0
      %v1203 = vsel %vm731, %v1159, 0
      %v1206 = vsel %vm731, %v1161, 0
      %v1209 = vsel %vm731, %v1163, 0
      %v1212 = vsel %vm731, %v1165, 0
      %v1215 = vsel %vm731, %v1175, 0
      %v1218 = vsel %vm731, %v1177, 0
      %v1221 = vsel %vm731, %v1179, 0
      %v1224 = vsel %vm731, %v1181, 0
      %v1227 = vsel %vm731, %v1183, 0
      %v1230 = vsel %vm731, %v1185, 0
      %v1233 = vsel %vm731, %v1187, 0
      %v1236 = vsel %vm731, %v1189, 0
      %1238 = vmatprep.subr.bf16.mxu0 0
      %1239 = vmatpush1.bf16.xpose.msra.mxu0 %v1236
      %1240 = vmatprep.subr.bf16.mxu0 0
      %1241 = vmatpush1.bf16.xpose.msra.mxu0 %v1233
      %1242 = vmatprep.subr.bf16.mxu0 0
      %1243 = vmatpush1.bf16.xpose.msra.mxu0 %v1230
      %1244 = vmatprep.subr.bf16.mxu0 0
      %1245 = vmatpush1.bf16.xpose.msra.mxu0 %v1227
      %1246 = vmatprep.subr.bf16.mxu0 0
      %1247 = vmatpush1.bf16.xpose.msra.mxu0 %v1224
      %1248 = vmatprep.subr.bf16.mxu0 0
      %1249 = vmatpush1.bf16.xpose.msra.mxu0 %v1221
      %1250 = vmatprep.subr.bf16.mxu0 0
      %1251 = vmatpush1.bf16.xpose.msra.mxu0 %v1218
      %1252 = vmatprep.subr.bf16.mxu0 0
      %1253 = vmatpush1.bf16.xpose.msra.mxu0 %v1215
      %1254 = vmatprep.subr.bf16.mxu0 0
      %1255 = vmatpush2.bf16.xpose.msra.mxu0 0
      %1256 = vmatprep.subr.bf16.mxu0 0
      %1257 = vmatpush2.bf16.xpose.msra.mxu0 0
      %1258 = vmatprep.subr.bf16.mxu0 0
      %1259 = vmatpush2.bf16.xpose.msra.mxu0 0
      %1260 = vmatprep.subr.bf16.mxu0 0
      %1261 = vmatpush2.bf16.xpose.msra.mxu0 0
      %1262 = vmatprep.subr.bf16.mxu0 0
      %1263 = vmatpush2.bf16.xpose.msra.mxu0 0
      %1264 = vmatprep.subr.bf16.mxu0 0
      %1265 = vmatpush2.bf16.xpose.msra.mxu0 0
      %1266 = vmatprep.subr.bf16.mxu0 0
      %1267 = vmatpush2.bf16.xpose.msra.mxu0 0
      %1268 = vmatprep.subr.bf16.mxu0 0
      %1269 = vmatpush2.bf16.xpose.msra.mxu0 0
      %1270 = vmatprep.mubr.bf16.mxu0 0
      %1271 = vmatmul.mubr.bf16.gmra.mxu0 %v1191
      %v1272 = vpop.f32.mrf.mxu0
      %v1273 = vadd.f32 0.0, %v1272
      %v1274 = vpop.f32.mrf.mxu0
      %v1275 = vpop.f32.mrf.mxu0
      %v1276 = vadd.f32 0.0, %v1275
      %v1277 = vpop.f32.mrf.mxu0
      %1278 = vmatprep.mubr.bf16.mxu0 0
      %1279 = vmatmul.mubr.bf16.gmra.mxu0 %v1194
      %v1280 = vpop.f32.mrf.mxu0
      %v1281 = vadd.f32 0.0, %v1280
      %v1282 = vpop.f32.mrf.mxu0
      %v1283 = vpop.f32.mrf.mxu0
      %v1284 = vadd.f32 0.0, %v1283
      %v1285 = vpop.f32.mrf.mxu0
      %1286 = vmatprep.mubr.bf16.mxu0 0
      %1287 = vmatmul.mubr.bf16.gmra.mxu0 %v1197
      %v1288 = vpop.f32.mrf.mxu0
      %v1289 = vadd.f32 0.0, %v1288
      %v1290 = vpop.f32.mrf.mxu0
      %v1291 = vpop.f32.mrf.mxu0
      %v1292 = vadd.f32 0.0, %v1291
      %v1293 = vpop.f32.mrf.mxu0
      %1294 = vmatprep.mubr.bf16.mxu0 0
      %1295 = vmatmul.mubr.bf16.gmra.mxu0 %v1200
      %v1296 = vpop.f32.mrf.mxu0
      %v1297 = vadd.f32 0.0, %v1296
      %v1298 = vpop.f32.mrf.mxu0
      %v1299 = vpop.f32.mrf.mxu0
      %v1300 = vadd.f32 0.0, %v1299
      %v1301 = vpop.f32.mrf.mxu0
      %1302 = vmatprep.mubr.bf16.mxu0 0
      %1303 = vmatmul.mubr.bf16.gmra.mxu0 %v1203
      %v1304 = vpop.f32.mrf.mxu0
      %v1305 = vadd.f32 0.0, %v1304
      %v1306 = vpop.f32.mrf.mxu0
      %v1307 = vpop.f32.mrf.mxu0
      %v1308 = vadd.f32 0.0, %v1307
      %v1309 = vpop.f32.mrf.mxu0
      %1310 = vmatprep.mubr.bf16.mxu0 0
      %1311 = vmatmul.mubr.bf16.gmra.mxu0 %v1206
      %v1312 = vpop.f32.mrf.mxu0
      %v1313 = vadd.f32 0.0, %v1312
      %v1314 = vpop.f32.mrf.mxu0
      %v1315 = vpop.f32.mrf.mxu0
      %v1316 = vadd.f32 0.0, %v1315
      %v1317 = vpop.f32.mrf.mxu0
      %1318 = vmatprep.mubr.bf16.mxu0 0
      %1319 = vmatmul.mubr.bf16.gmra.mxu0 %v1209
      %v1320 = vpop.f32.mrf.mxu0
      %v1321 = vadd.f32 0.0, %v1320
      %v1322 = vpop.f32.mrf.mxu0
      %v1323 = vpop.f32.mrf.mxu0
      %v1324 = vadd.f32 0.0, %v1323
      %v1325 = vpop.f32.mrf.mxu0
      %1326 = vmatprep.mubr.bf16.mxu0 0
      %1327 = vmatmul.mubr.bf16.gmra.mxu0 %v1212
      %v1328 = vpop.f32.mrf.mxu0
      %v1329 = vadd.f32 0.0, %v1328
      %v1330 = vpop.f32.mrf.mxu0
      %v1331 = vpop.f32.mrf.mxu0
      %v1332 = vadd.f32 0.0, %v1331
      %v1333 = vpop.f32.mrf.mxu0
      %1334 = vdwg.mxu0
      %1335 = vmax.xlane.f32.xlu0 %v1273
      %v1336 = vpop.xlane.xlu0 %1335
      %1337 = vmax.xlane.f32.xlu0 %v1276
      %v1338 = vpop.xlane.xlu0 %1337
      %1339 = vmax.xlane.f32.xlu0 %v1281
      %v1340 = vpop.xlane.xlu0 %1339
      %1341 = vmax.xlane.f32.xlu0 %v1284
      %v1342 = vpop.xlane.xlu0 %1341
      %1343 = vmax.xlane.f32.xlu0 %v1289
      %v1344 = vpop.xlane.xlu0 %1343
      %1345 = vmax.xlane.f32.xlu0 %v1292
      %v1346 = vpop.xlane.xlu0 %1345
      %1347 = vmax.xlane.f32.xlu0 %v1297
      %v1348 = vpop.xlane.xlu0 %1347
      %1349 = vmax.xlane.f32.xlu0 %v1300
      %v1350 = vpop.xlane.xlu0 %1349
      %1351 = vmax.xlane.f32.xlu0 %v1305
      %v1352 = vpop.xlane.xlu0 %1351
      %1353 = vmax.xlane.f32.xlu0 %v1308
      %v1354 = vpop.xlane.xlu0 %1353
      %1355 = vmax.xlane.f32.xlu0 %v1313
      %v1356 = vpop.xlane.xlu0 %1355
      %1357 = vmax.xlane.f32.xlu0 %v1316
      %v1358 = vpop.xlane.xlu0 %1357
      %1359 = vmax.xlane.f32.xlu0 %v1321
      %v1360 = vpop.xlane.xlu0 %1359
      %1361 = vmax.xlane.f32.xlu0 %v1324
      %v1362 = vpop.xlane.xlu0 %1361
      %1363 = vmax.xlane.f32.xlu0 %v1329
      %v1364 = vpop.xlane.xlu0 %1363
      %1365 = vmax.xlane.f32.xlu0 %v1332
      %v1366 = vpop.xlane.xlu0 %1365
      %v1367 = vsub.f32 %v1273, %v1336
      %v1368 = vsub.f32 %v1276, %v1338
      %v1369 = vsub.f32 %v1281, %v1340
      %v1370 = vsub.f32 %v1284, %v1342
      %v1371 = vsub.f32 %v1289, %v1344
      %v1372 = vsub.f32 %v1292, %v1346
      %v1373 = vsub.f32 %v1297, %v1348
      %v1374 = vsub.f32 %v1300, %v1350
      %v1375 = vsub.f32 %v1305, %v1352
      %v1376 = vsub.f32 %v1308, %v1354
      %v1377 = vsub.f32 %v1313, %v1356
      %v1378 = vsub.f32 %v1316, %v1358
      %v1379 = vsub.f32 %v1321, %v1360
      %v1380 = vsub.f32 %v1324, %v1362
      %v1381 = vsub.f32 %v1329, %v1364
      %v1382 = vsub.f32 %v1332, %v1366
      %v1383 = vmul.f32 %v1367, 1.442695
      %v1384 = vpow.pop %v1383
      %v1385 = vmul.f32 %v1368, 1.442695
      %v1386 = vpow.pop %v1385
      %v1387 = vmul.f32 %v1369, 1.442695
      %v1388 = vpow.pop %v1387
      %v1389 = vmul.f32 %v1370, 1.442695
      %v1390 = vpow.pop %v1389
      %v1391 = vmul.f32 %v1371, 1.442695
      %v1392 = vpow.pop %v1391
      %v1393 = vmul.f32 %v1372, 1.442695
      %v1394 = vpow.pop %v1393
      %v1395 = vmul.f32 %v1373, 1.442695
      %v1396 = vpow.pop %v1395
      %v1397 = vmul.f32 %v1374, 1.442695
      %v1398 = vpow.pop %v1397
      %v1399 = vmul.f32 %v1375, 1.442695
      %v1400 = vpow.pop %v1399
      %v1401 = vmul.f32 %v1376, 1.442695
      %v1402 = vpow.pop %v1401
      %v1403 = vmul.f32 %v1377, 1.442695
      %v1404 = vpow.pop %v1403
      %v1405 = vmul.f32 %v1378, 1.442695
      %v1406 = vpow.pop %v1405
      %v1407 = vmul.f32 %v1379, 1.442695
      %v1408 = vpow.pop %v1407
      %v1409 = vmul.f32 %v1380, 1.442695
      %v1410 = vpow.pop %v1409
      %v1411 = vmul.f32 %v1381, 1.442695
      %v1412 = vpow.pop %v1411
      %v1413 = vmul.f32 %v1382, 1.442695
      %v1414 = vpow.pop %v1413
      %1415 = vadd.xlane.f32.xlu0 %v1384
      %v1416 = vpop.xlane.xlu0 %1415
      %1417 = vadd.xlane.f32.xlu0 %v1386
      %v1418 = vpop.xlane.xlu0 %1417
      %1419 = vadd.xlane.f32.xlu0 %v1388
      %v1420 = vpop.xlane.xlu0 %1419
      %1421 = vadd.xlane.f32.xlu0 %v1390
      %v1422 = vpop.xlane.xlu0 %1421
      %1423 = vadd.xlane.f32.xlu0 %v1392
      %v1424 = vpop.xlane.xlu0 %1423
      %1425 = vadd.xlane.f32.xlu0 %v1394
      %v1426 = vpop.xlane.xlu0 %1425
      %1427 = vadd.xlane.f32.xlu0 %v1396
      %v1428 = vpop.xlane.xlu0 %1427
      %1429 = vadd.xlane.f32.xlu0 %v1398
      %v1430 = vpop.xlane.xlu0 %1429
      %1431 = vadd.xlane.f32.xlu0 %v1400
      %v1432 = vpop.xlane.xlu0 %1431
      %1433 = vadd.xlane.f32.xlu0 %v1402
      %v1434 = vpop.xlane.xlu0 %1433
      %1435 = vadd.xlane.f32.xlu0 %v1404
      %v1436 = vpop.xlane.xlu0 %1435
      %1437 = vadd.xlane.f32.xlu0 %v1406
      %v1438 = vpop.xlane.xlu0 %1437
      %1439 = vadd.xlane.f32.xlu0 %v1408
      %v1440 = vpop.xlane.xlu0 %1439
      %1441 = vadd.xlane.f32.xlu0 %v1410
      %v1442 = vpop.xlane.xlu0 %1441
      %1443 = vadd.xlane.f32.xlu0 %v1412
      %v1444 = vpop.xlane.xlu0 %1443
      %1445 = vadd.xlane.f32.xlu0 %v1414
      %v1446 = vpop.xlane.xlu0 %1445
      %v1447 = vrcp.pop %v1416
      %v1448 = vrcp.pop %v1418
      %v1449 = vrcp.pop %v1420
      %v1450 = vrcp.pop %v1422
      %v1451 = vrcp.pop %v1424
      %v1452 = vrcp.pop %v1426
      %v1453 = vrcp.pop %v1428
      %v1454 = vrcp.pop %v1430
      %v1455 = vrcp.pop %v1432
      %v1456 = vrcp.pop %v1434
      %v1457 = vrcp.pop %v1436
      %v1458 = vrcp.pop %v1438
      %v1459 = vrcp.pop %v1440
      %v1460 = vrcp.pop %v1442
      %v1461 = vrcp.pop %v1444
      %v1462 = vrcp.pop %v1446
      %v1463 = vmul.f32 %v1384, %v1447
      %v1464 = vmul.f32 %v1386, %v1448
      %v1465 = vmul.f32 %v1388, %v1449
      %v1466 = vmul.f32 %v1390, %v1450
      %v1467 = vmul.f32 %v1392, %v1451
      %v1468 = vmul.f32 %v1394, %v1452
      %v1469 = vmul.f32 %v1396, %v1453
      %v1470 = vmul.f32 %v1398, %v1454
      %v1471 = vmul.f32 %v1400, %v1455
      %v1472 = vmul.f32 %v1402, %v1456
      %v1473 = vmul.f32 %v1404, %v1457
      %v1474 = vmul.f32 %v1406, %v1458
      %v1475 = vmul.f32 %v1408, %v1459
      %v1476 = vmul.f32 %v1410, %v1460
      %v1477 = vmul.f32 %v1412, %v1461
      %v1478 = vmul.f32 %v1414, %v1462
      %v1479 = vpack.c.bf16 %v1464, %v1463
      %v1480 = vpack.c.bf16 %v1466, %v1465
      %v1481 = vpack.c.bf16 %v1468, %v1467
      %v1482 = vpack.c.bf16 %v1470, %v1469
      %v1483 = vpack.c.bf16 %v1472, %v1471
      %v1484 = vpack.c.bf16 %v1474, %v1473
      %v1485 = vpack.c.bf16 %v1476, %v1475
      %v1486 = vpack.c.bf16 %v1478, %v1477
      %1495 = vrot.lane.b32.xlu0 %v723, 96
      %v1496 = vpop.permute.xlu0 %1495
      %1497 = vrot.lane.b32.xlu0 %v724, 96
      %v1498 = vpop.permute.xlu0 %1497
      %1499 = vrot.lane.b32.xlu0 %v725, 96
      %v1500 = vpop.permute.xlu0 %1499
      %1501 = vrot.lane.b32.xlu0 %v726, 96
      %v1502 = vpop.permute.xlu0 %1501
      %1503 = vrot.lane.b32.xlu0 %v727, 96
      %v1504 = vpop.permute.xlu0 %1503
      %1505 = vrot.lane.b32.xlu0 %v728, 96
      %v1506 = vpop.permute.xlu0 %1505
      %1507 = vrot.lane.b32.xlu0 %v729, 96
      %v1508 = vpop.permute.xlu0 %1507
      %1509 = vrot.lane.b32.xlu0 %v730, 96
      %v1510 = vpop.permute.xlu0 %1509
      %1519 = vmatprep.subr.bf16.mxu0 0
      %1520 = vmatpush1.bf16.msra.mxu0 %v1510
      %1521 = vmatprep.subr.bf16.mxu0 0
      %1522 = vmatpush1.bf16.msra.mxu0 %v1508
      %1523 = vmatprep.subr.bf16.mxu0 0
      %1524 = vmatpush1.bf16.msra.mxu0 %v1506
      %1525 = vmatprep.subr.bf16.mxu0 0
      %1526 = vmatpush1.bf16.msra.mxu0 %v1504
      %1527 = vmatprep.subr.bf16.mxu0 0
      %1528 = vmatpush1.bf16.msra.mxu0 %v1502
      %1529 = vmatprep.subr.bf16.mxu0 0
      %1530 = vmatpush1.bf16.msra.mxu0 %v1500
      %1531 = vmatprep.subr.bf16.mxu0 0
      %1532 = vmatpush1.bf16.msra.mxu0 %v1498
      %1533 = vmatprep.subr.bf16.mxu0 0
      %1534 = vmatpush1.bf16.msra.mxu0 %v1496
      %1535 = vmatprep.subr.bf16.mxu0 0
      %1536 = vmatpush2.bf16.msra.mxu0 0
      %1537 = vmatprep.subr.bf16.mxu0 0
      %1538 = vmatpush2.bf16.msra.mxu0 0
      %1539 = vmatprep.subr.bf16.mxu0 0
      %1540 = vmatpush2.bf16.msra.mxu0 0
      %1541 = vmatprep.subr.bf16.mxu0 0
      %1542 = vmatpush2.bf16.msra.mxu0 0
      %1543 = vmatprep.subr.bf16.mxu0 0
      %1544 = vmatpush2.bf16.msra.mxu0 0
      %1545 = vmatprep.subr.bf16.mxu0 0
      %1546 = vmatpush2.bf16.msra.mxu0 0
      %1547 = vmatprep.subr.bf16.mxu0 0
      %1548 = vmatpush2.bf16.msra.mxu0 0
      %1549 = vmatprep.subr.bf16.mxu0 0
      %1550 = vmatpush2.bf16.msra.mxu0 0
      %1551 = vmatprep.mubr.bf16.mxu0 0
      %1552 = vmatmul.mubr.bf16.gmra.mxu0 %v1479
      %v1553 = vpop.f32.mrf.mxu0
      %v1554 = vadd.f32 0.0, %v1553
      %v1555 = vpop.f32.mrf.mxu0
      %v1556 = vpop.f32.mrf.mxu0
      %v1557 = vadd.f32 0.0, %v1556
      %v1558 = vpop.f32.mrf.mxu0
      %1559 = vmatprep.mubr.bf16.mxu0 0
      %1560 = vmatmul.mubr.bf16.gmra.mxu0 %v1480
      %v1561 = vpop.f32.mrf.mxu0
      %v1562 = vadd.f32 0.0, %v1561
      %v1563 = vpop.f32.mrf.mxu0
      %v1564 = vpop.f32.mrf.mxu0
      %v1565 = vadd.f32 0.0, %v1564
      %v1566 = vpop.f32.mrf.mxu0
      %1567 = vmatprep.mubr.bf16.mxu0 0
      %1568 = vmatmul.mubr.bf16.gmra.mxu0 %v1481
      %v1569 = vpop.f32.mrf.mxu0
      %v1570 = vadd.f32 0.0, %v1569
      %v1571 = vpop.f32.mrf.mxu0
      %v1572 = vpop.f32.mrf.mxu0
      %v1573 = vadd.f32 0.0, %v1572
      %v1574 = vpop.f32.mrf.mxu0
      %1575 = vmatprep.mubr.bf16.mxu0 0
      %1576 = vmatmul.mubr.bf16.gmra.mxu0 %v1482
      %v1577 = vpop.f32.mrf.mxu0
      %v1578 = vadd.f32 0.0, %v1577
      %v1579 = vpop.f32.mrf.mxu0
      %v1580 = vpop.f32.mrf.mxu0
      %v1581 = vadd.f32 0.0, %v1580
      %v1582 = vpop.f32.mrf.mxu0
      %1583 = vmatprep.mubr.bf16.mxu0 0
      %1584 = vmatmul.mubr.bf16.gmra.mxu0 %v1483
      %v1585 = vpop.f32.mrf.mxu0
      %v1586 = vadd.f32 0.0, %v1585
      %v1587 = vpop.f32.mrf.mxu0
      %v1588 = vpop.f32.mrf.mxu0
      %v1589 = vadd.f32 0.0, %v1588
      %v1590 = vpop.f32.mrf.mxu0
      %1591 = vmatprep.mubr.bf16.mxu0 0
      %1592 = vmatmul.mubr.bf16.gmra.mxu0 %v1484
      %v1593 = vpop.f32.mrf.mxu0
      %v1594 = vadd.f32 0.0, %v1593
      %v1595 = vpop.f32.mrf.mxu0
      %v1596 = vpop.f32.mrf.mxu0
      %v1597 = vadd.f32 0.0, %v1596
      %v1598 = vpop.f32.mrf.mxu0
      %1599 = vmatprep.mubr.bf16.mxu0 0
      %1600 = vmatmul.mubr.bf16.gmra.mxu0 %v1485
      %v1601 = vpop.f32.mrf.mxu0
      %v1602 = vadd.f32 0.0, %v1601
      %v1603 = vpop.f32.mrf.mxu0
      %v1604 = vpop.f32.mrf.mxu0
      %v1605 = vadd.f32 0.0, %v1604
      %v1606 = vpop.f32.mrf.mxu0
      %1607 = vmatprep.mubr.bf16.mxu0 0
      %1608 = vmatmul.mubr.bf16.gmra.mxu0 %v1486
      %v1609 = vpop.f32.mrf.mxu0
      %v1610 = vadd.f32 0.0, %v1609
      %v1611 = vpop.f32.mrf.mxu0
      %v1612 = vpop.f32.mrf.mxu0
      %v1613 = vadd.f32 0.0, %v1612
      %v1614 = vpop.f32.mrf.mxu0
      %1615 = vdwg.mxu0
      %1632 = vrot.lane.b32.xlu0 %v1554, 32
      %v1633 = vpop.permute.xlu0 %1632
      %1634 = vrot.lane.b32.xlu0 %v1557, 32
      %v1635 = vpop.permute.xlu0 %1634
      %1636 = vrot.lane.b32.xlu0 %v1562, 32
      %v1637 = vpop.permute.xlu0 %1636
      %1638 = vrot.lane.b32.xlu0 %v1565, 32
      %v1639 = vpop.permute.xlu0 %1638
      %1640 = vrot.lane.b32.xlu0 %v1570, 32
      %v1641 = vpop.permute.xlu0 %1640
      %1642 = vrot.lane.b32.xlu0 %v1573, 32
      %v1643 = vpop.permute.xlu0 %1642
      %1644 = vrot.lane.b32.xlu0 %v1578, 32
      %v1645 = vpop.permute.xlu0 %1644
      %1646 = vrot.lane.b32.xlu0 %v1581, 32
      %v1647 = vpop.permute.xlu0 %1646
      %1648 = vrot.lane.b32.xlu0 %v1586, 32
      %v1649 = vpop.permute.xlu0 %1648
      %1650 = vrot.lane.b32.xlu0 %v1589, 32
      %v1651 = vpop.permute.xlu0 %1650
      %1652 = vrot.lane.b32.xlu0 %v1594, 32
      %v1653 = vpop.permute.xlu0 %1652
      %1654 = vrot.lane.b32.xlu0 %v1597, 32
      %v1655 = vpop.permute.xlu0 %1654
      %1656 = vrot.lane.b32.xlu0 %v1602, 32
      %v1657 = vpop.permute.xlu0 %1656
      %1658 = vrot.lane.b32.xlu0 %v1605, 32
      %v1659 = vpop.permute.xlu0 %1658
      %1660 = vrot.lane.b32.xlu0 %v1610, 32
      %v1661 = vpop.permute.xlu0 %1660
      %1662 = vrot.lane.b32.xlu0 %v1613, 32
      %v1663 = vpop.permute.xlu0 %1662
      %vm1680 = vcmask 523520
      %1681 = vst.msk [vmem:[#allocation2] sm:$0xff] %vm1680, %v1633
      %1682 = vst.msk [vmem:[#allocation2 + $0x8] sm:$0xff] %vm1680, %v1635
      %1683 = vst.msk [vmem:[#allocation2 + $0x10] sm:$0xff] %vm1680, %v1637
      %1684 = vst.msk [vmem:[#allocation2 + $0x18] sm:$0xff] %vm1680, %v1639
      %1685 = vst.msk [vmem:[#allocation2 + $0x20] sm:$0xff] %vm1680, %v1641
      %1686 = vst.msk [vmem:[#allocation2 + $0x28] sm:$0xff] %vm1680, %v1643
      %1687 = vst.msk [vmem:[#allocation2 + $0x30] sm:$0xff] %vm1680, %v1645
      %1688 = vst.msk [vmem:[#allocation2 + $0x38] sm:$0xff] %vm1680, %v1647
      %1689 = vst.msk [vmem:[#allocation2 + $0x40] sm:$0xff] %vm1680, %v1649
      %1690 = vst.msk [vmem:[#allocation2 + $0x48] sm:$0xff] %vm1680, %v1651
      %1691 = vst.msk [vmem:[#allocation2 + $0x50] sm:$0xff] %vm1680, %v1653
      %1692 = vst.msk [vmem:[#allocation2 + $0x58] sm:$0xff] %vm1680, %v1655
      %1693 = vst.msk [vmem:[#allocation2 + $0x60] sm:$0xff] %vm1680, %v1657
      %1694 = vst.msk [vmem:[#allocation2 + $0x68] sm:$0xff] %vm1680, %v1659
      %1695 = vst.msk [vmem:[#allocation2 + $0x70] sm:$0xff] %vm1680, %v1661
      %1696 = vst.msk [vmem:[#allocation2 + $0x78] sm:$0xff] %vm1680, %v1663
      %1697 = vrot.lane.b32.xlu0 %v707, 64
      %v1698 = vpop.permute.xlu0 %1697
      %1699 = vrot.lane.b32.xlu0 %v708, 64
      %v1700 = vpop.permute.xlu0 %1699
      %1701 = vrot.lane.b32.xlu0 %v709, 64
      %v1702 = vpop.permute.xlu0 %1701
      %1703 = vrot.lane.b32.xlu0 %v710, 64
      %v1704 = vpop.permute.xlu0 %1703
      %1705 = vrot.lane.b32.xlu0 %v711, 64
      %v1706 = vpop.permute.xlu0 %1705
      %1707 = vrot.lane.b32.xlu0 %v712, 64
      %v1708 = vpop.permute.xlu0 %1707
      %1709 = vrot.lane.b32.xlu0 %v713, 64
      %v1710 = vpop.permute.xlu0 %1709
      %1711 = vrot.lane.b32.xlu0 %v714, 64
      %v1712 = vpop.permute.xlu0 %1711
      %1713 = vrot.lane.b32.xlu0 %v715, 64
      %v1714 = vpop.permute.xlu0 %1713
      %1715 = vrot.lane.b32.xlu0 %v716, 64
      %v1716 = vpop.permute.xlu0 %1715
      %1717 = vrot.lane.b32.xlu0 %v717, 64
      %v1718 = vpop.permute.xlu0 %1717
      %1719 = vrot.lane.b32.xlu0 %v718, 64
      %v1720 = vpop.permute.xlu0 %1719
      %1721 = vrot.lane.b32.xlu0 %v719, 64
      %v1722 = vpop.permute.xlu0 %1721
      %1723 = vrot.lane.b32.xlu0 %v720, 64
      %v1724 = vpop.permute.xlu0 %1723
      %1725 = vrot.lane.b32.xlu0 %v721, 64
      %v1726 = vpop.permute.xlu0 %1725
      %1727 = vrot.lane.b32.xlu0 %v722, 64
      %v1728 = vpop.permute.xlu0 %1727
      %v1730 = vsel %vm731, %v1698, 0
      %v1733 = vsel %vm731, %v1700, 0
      %v1736 = vsel %vm731, %v1702, 0
      %v1739 = vsel %vm731, %v1704, 0
      %v1742 = vsel %vm731, %v1706, 0
      %v1745 = vsel %vm731, %v1708, 0
      %v1748 = vsel %vm731, %v1710, 0
      %v1751 = vsel %vm731, %v1712, 0
      %v1754 = vsel %vm731, %v1714, 0
      %v1757 = vsel %vm731, %v1716, 0
      %v1760 = vsel %vm731, %v1718, 0
      %v1763 = vsel %vm731, %v1720, 0
      %v1766 = vsel %vm731, %v1722, 0
      %v1769 = vsel %vm731, %v1724, 0
      %v1772 = vsel %vm731, %v1726, 0
      %v1775 = vsel %vm731, %v1728, 0
      %1777 = vmatprep.subr.bf16.mxu0 0
      %1778 = vmatpush1.bf16.xpose.msra.mxu0 %v1775
      %1779 = vmatprep.subr.bf16.mxu0 0
      %1780 = vmatpush1.bf16.xpose.msra.mxu0 %v1772
      %1781 = vmatprep.subr.bf16.mxu0 0
      %1782 = vmatpush1.bf16.xpose.msra.mxu0 %v1769
      %1783 = vmatprep.subr.bf16.mxu0 0
      %1784 = vmatpush1.bf16.xpose.msra.mxu0 %v1766
      %1785 = vmatprep.subr.bf16.mxu0 0
      %1786 = vmatpush1.bf16.xpose.msra.mxu0 %v1763
      %1787 = vmatprep.subr.bf16.mxu0 0
      %1788 = vmatpush1.bf16.xpose.msra.mxu0 %v1760
      %1789 = vmatprep.subr.bf16.mxu0 0
      %1790 = vmatpush1.bf16.xpose.msra.mxu0 %v1757
      %1791 = vmatprep.subr.bf16.mxu0 0
      %1792 = vmatpush1.bf16.xpose.msra.mxu0 %v1754
      %1793 = vmatprep.subr.bf16.mxu0 0
      %1794 = vmatpush2.bf16.xpose.msra.mxu0 0
      %1795 = vmatprep.subr.bf16.mxu0 0
      %1796 = vmatpush2.bf16.xpose.msra.mxu0 0
      %1797 = vmatprep.subr.bf16.mxu0 0
      %1798 = vmatpush2.bf16.xpose.msra.mxu0 0
      %1799 = vmatprep.subr.bf16.mxu0 0
      %1800 = vmatpush2.bf16.xpose.msra.mxu0 0
      %1801 = vmatprep.subr.bf16.mxu0 0
      %1802 = vmatpush2.bf16.xpose.msra.mxu0 0
      %1803 = vmatprep.subr.bf16.mxu0 0
      %1804 = vmatpush2.bf16.xpose.msra.mxu0 0
      %1805 = vmatprep.subr.bf16.mxu0 0
      %1806 = vmatpush2.bf16.xpose.msra.mxu0 0
      %1807 = vmatprep.subr.bf16.mxu0 0
      %1808 = vmatpush2.bf16.xpose.msra.mxu0 0
      %1809 = vmatprep.mubr.bf16.mxu0 0
      %1810 = vmatmul.mubr.bf16.gmra.mxu0 %v1730
      %v1811 = vpop.f32.mrf.mxu0
      %v1812 = vadd.f32 0.0, %v1811
      %v1813 = vpop.f32.mrf.mxu0
      %v1814 = vpop.f32.mrf.mxu0
      %v1815 = vadd.f32 0.0, %v1814
      %v1816 = vpop.f32.mrf.mxu0
      %1817 = vmatprep.mubr.bf16.mxu0 0
      %1818 = vmatmul.mubr.bf16.gmra.mxu0 %v1733
      %v1819 = vpop.f32.mrf.mxu0
      %v1820 = vadd.f32 0.0, %v1819
      %v1821 = vpop.f32.mrf.mxu0
      %v1822 = vpop.f32.mrf.mxu0
      %v1823 = vadd.f32 0.0, %v1822
      %v1824 = vpop.f32.mrf.mxu0
      %1825 = vmatprep.mubr.bf16.mxu0 0
      %1826 = vmatmul.mubr.bf16.gmra.mxu0 %v1736
      %v1827 = vpop.f32.mrf.mxu0
      %v1828 = vadd.f32 0.0, %v1827
      %v1829 = vpop.f32.mrf.mxu0
      %v1830 = vpop.f32.mrf.mxu0
      %v1831 = vadd.f32 0.0, %v1830
      %v1832 = vpop.f32.mrf.mxu0
      %1833 = vmatprep.mubr.bf16.mxu0 0
      %1834 = vmatmul.mubr.bf16.gmra.mxu0 %v1739
      %v1835 = vpop.f32.mrf.mxu0
      %v1836 = vadd.f32 0.0, %v1835
      %v1837 = vpop.f32.mrf.mxu0
      %v1838 = vpop.f32.mrf.mxu0
      %v1839 = vadd.f32 0.0, %v1838
      %v1840 = vpop.f32.mrf.mxu0
      %1841 = vmatprep.mubr.bf16.mxu0 0
      %1842 = vmatmul.mubr.bf16.gmra.mxu0 %v1742
      %v1843 = vpop.f32.mrf.mxu0
      %v1844 = vadd.f32 0.0, %v1843
      %v1845 = vpop.f32.mrf.mxu0
      %v1846 = vpop.f32.mrf.mxu0
      %v1847 = vadd.f32 0.0, %v1846
      %v1848 = vpop.f32.mrf.mxu0
      %1849 = vmatprep.mubr.bf16.mxu0 0
      %1850 = vmatmul.mubr.bf16.gmra.mxu0 %v1745
      %v1851 = vpop.f32.mrf.mxu0
      %v1852 = vadd.f32 0.0, %v1851
      %v1853 = vpop.f32.mrf.mxu0
      %v1854 = vpop.f32.mrf.mxu0
      %v1855 = vadd.f32 0.0, %v1854
      %v1856 = vpop.f32.mrf.mxu0
      %1857 = vmatprep.mubr.bf16.mxu0 0
      %1858 = vmatmul.mubr.bf16.gmra.mxu0 %v1748
      %v1859 = vpop.f32.mrf.mxu0
      %v1860 = vadd.f32 0.0, %v1859
      %v1861 = vpop.f32.mrf.mxu0
      %v1862 = vpop.f32.mrf.mxu0
      %v1863 = vadd.f32 0.0, %v1862
      %v1864 = vpop.f32.mrf.mxu0
      %1865 = vmatprep.mubr.bf16.mxu0 0
      %1866 = vmatmul.mubr.bf16.gmra.mxu0 %v1751
      %v1867 = vpop.f32.mrf.mxu0
      %v1868 = vadd.f32 0.0, %v1867
      %v1869 = vpop.f32.mrf.mxu0
      %v1870 = vpop.f32.mrf.mxu0
      %v1871 = vadd.f32 0.0, %v1870
      %v1872 = vpop.f32.mrf.mxu0
      %1873 = vdwg.mxu0
      %1874 = vmax.xlane.f32.xlu0 %v1812
      %v1875 = vpop.xlane.xlu0 %1874
      %1876 = vmax.xlane.f32.xlu0 %v1815
      %v1877 = vpop.xlane.xlu0 %1876
      %1878 = vmax.xlane.f32.xlu0 %v1820
      %v1879 = vpop.xlane.xlu0 %1878
      %1880 = vmax.xlane.f32.xlu0 %v1823
      %v1881 = vpop.xlane.xlu0 %1880
      %1882 = vmax.xlane.f32.xlu0 %v1828
      %v1883 = vpop.xlane.xlu0 %1882
      %1884 = vmax.xlane.f32.xlu0 %v1831
      %v1885 = vpop.xlane.xlu0 %1884
      %1886 = vmax.xlane.f32.xlu0 %v1836
      %v1887 = vpop.xlane.xlu0 %1886
      %1888 = vmax.xlane.f32.xlu0 %v1839
      %v1889 = vpop.xlane.xlu0 %1888
      %1890 = vmax.xlane.f32.xlu0 %v1844
      %v1891 = vpop.xlane.xlu0 %1890
      %1892 = vmax.xlane.f32.xlu0 %v1847
      %v1893 = vpop.xlane.xlu0 %1892
      %1894 = vmax.xlane.f32.xlu0 %v1852
      %v1895 = vpop.xlane.xlu0 %1894
      %1896 = vmax.xlane.f32.xlu0 %v1855
      %v1897 = vpop.xlane.xlu0 %1896
      %1898 = vmax.xlane.f32.xlu0 %v1860
      %v1899 = vpop.xlane.xlu0 %1898
      %1900 = vmax.xlane.f32.xlu0 %v1863
      %v1901 = vpop.xlane.xlu0 %1900
      %1902 = vmax.xlane.f32.xlu0 %v1868
      %v1903 = vpop.xlane.xlu0 %1902
      %1904 = vmax.xlane.f32.xlu0 %v1871
      %v1905 = vpop.xlane.xlu0 %1904
      %v1906 = vsub.f32 %v1812, %v1875
      %v1907 = vsub.f32 %v1815, %v1877
      %v1908 = vsub.f32 %v1820, %v1879
      %v1909 = vsub.f32 %v1823, %v1881
      %v1910 = vsub.f32 %v1828, %v1883
      %v1911 = vsub.f32 %v1831, %v1885
      %v1912 = vsub.f32 %v1836, %v1887
      %v1913 = vsub.f32 %v1839, %v1889
      %v1914 = vsub.f32 %v1844, %v1891
      %v1915 = vsub.f32 %v1847, %v1893
      %v1916 = vsub.f32 %v1852, %v1895
      %v1917 = vsub.f32 %v1855, %v1897
      %v1918 = vsub.f32 %v1860, %v1899
      %v1919 = vsub.f32 %v1863, %v1901
      %v1920 = vsub.f32 %v1868, %v1903
      %v1921 = vsub.f32 %v1871, %v1905
      %v1922 = vmul.f32 %v1906, 1.442695
      %v1923 = vpow.pop %v1922
      %v1924 = vmul.f32 %v1907, 1.442695
      %v1925 = vpow.pop %v1924
      %v1926 = vmul.f32 %v1908, 1.442695
      %v1927 = vpow.pop %v1926
      %v1928 = vmul.f32 %v1909, 1.442695
      %v1929 = vpow.pop %v1928
      %v1930 = vmul.f32 %v1910, 1.442695
      %v1931 = vpow.pop %v1930
      %v1932 = vmul.f32 %v1911, 1.442695
      %v1933 = vpow.pop %v1932
      %v1934 = vmul.f32 %v1912, 1.442695
      %v1935 = vpow.pop %v1934
      %v1936 = vmul.f32 %v1913, 1.442695
      %v1937 = vpow.pop %v1936
      %v1938 = vmul.f32 %v1914, 1.442695
      %v1939 = vpow.pop %v1938
      %v1940 = vmul.f32 %v1915, 1.442695
      %v1941 = vpow.pop %v1940
      %v1942 = vmul.f32 %v1916, 1.442695
      %v1943 = vpow.pop %v1942
      %v1944 = vmul.f32 %v1917, 1.442695
      %v1945 = vpow.pop %v1944
      %v1946 = vmul.f32 %v1918, 1.442695
      %v1947 = vpow.pop %v1946
      %v1948 = vmul.f32 %v1919, 1.442695
      %v1949 = vpow.pop %v1948
      %v1950 = vmul.f32 %v1920, 1.442695
      %v1951 = vpow.pop %v1950
      %v1952 = vmul.f32 %v1921, 1.442695
      %v1953 = vpow.pop %v1952
      %1954 = vadd.xlane.f32.xlu0 %v1923
      %v1955 = vpop.xlane.xlu0 %1954
      %1956 = vadd.xlane.f32.xlu0 %v1925
      %v1957 = vpop.xlane.xlu0 %1956
      %1958 = vadd.xlane.f32.xlu0 %v1927
      %v1959 = vpop.xlane.xlu0 %1958
      %1960 = vadd.xlane.f32.xlu0 %v1929
      %v1961 = vpop.xlane.xlu0 %1960
      %1962 = vadd.xlane.f32.xlu0 %v1931
      %v1963 = vpop.xlane.xlu0 %1962
      %1964 = vadd.xlane.f32.xlu0 %v1933
      %v1965 = vpop.xlane.xlu0 %1964
      %1966 = vadd.xlane.f32.xlu0 %v1935
      %v1967 = vpop.xlane.xlu0 %1966
      %1968 = vadd.xlane.f32.xlu0 %v1937
      %v1969 = vpop.xlane.xlu0 %1968
      %1970 = vadd.xlane.f32.xlu0 %v1939
      %v1971 = vpop.xlane.xlu0 %1970
      %1972 = vadd.xlane.f32.xlu0 %v1941
      %v1973 = vpop.xlane.xlu0 %1972
      %1974 = vadd.xlane.f32.xlu0 %v1943
      %v1975 = vpop.xlane.xlu0 %1974
      %1976 = vadd.xlane.f32.xlu0 %v1945
      %v1977 = vpop.xlane.xlu0 %1976
      %1978 = vadd.xlane.f32.xlu0 %v1947
      %v1979 = vpop.xlane.xlu0 %1978
      %1980 = vadd.xlane.f32.xlu0 %v1949
      %v1981 = vpop.xlane.xlu0 %1980
      %1982 = vadd.xlane.f32.xlu0 %v1951
      %v1983 = vpop.xlane.xlu0 %1982
      %1984 = vadd.xlane.f32.xlu0 %v1953
      %v1985 = vpop.xlane.xlu0 %1984
      %v1986 = vrcp.pop %v1955
      %v1987 = vrcp.pop %v1957
      %v1988 = vrcp.pop %v1959
      %v1989 = vrcp.pop %v1961
      %v1990 = vrcp.pop %v1963
      %v1991 = vrcp.pop %v1965
      %v1992 = vrcp.pop %v1967
      %v1993 = vrcp.pop %v1969
      %v1994 = vrcp.pop %v1971
      %v1995 = vrcp.pop %v1973
      %v1996 = vrcp.pop %v1975
      %v1997 = vrcp.pop %v1977
      %v1998 = vrcp.pop %v1979
      %v1999 = vrcp.pop %v1981
      %v2000 = vrcp.pop %v1983
      %v2001 = vrcp.pop %v1985
      %v2002 = vmul.f32 %v1923, %v1986
      %v2003 = vmul.f32 %v1925, %v1987
      %v2004 = vmul.f32 %v1927, %v1988
      %v2005 = vmul.f32 %v1929, %v1989
      %v2006 = vmul.f32 %v1931, %v1990
      %v2007 = vmul.f32 %v1933, %v1991
      %v2008 = vmul.f32 %v1935, %v1992
      %v2009 = vmul.f32 %v1937, %v1993
      %v2010 = vmul.f32 %v1939, %v1994
      %v2011 = vmul.f32 %v1941, %v1995
      %v2012 = vmul.f32 %v1943, %v1996
      %v2013 = vmul.f32 %v1945, %v1997
      %v2014 = vmul.f32 %v1947, %v1998
      %v2015 = vmul.f32 %v1949, %v1999
      %v2016 = vmul.f32 %v1951, %v2000
      %v2017 = vmul.f32 %v1953, %v2001
      %v2018 = vpack.c.bf16 %v2003, %v2002
      %v2019 = vpack.c.bf16 %v2005, %v2004
      %v2020 = vpack.c.bf16 %v2007, %v2006
      %v2021 = vpack.c.bf16 %v2009, %v2008
      %v2022 = vpack.c.bf16 %v2011, %v2010
      %v2023 = vpack.c.bf16 %v2013, %v2012
      %v2024 = vpack.c.bf16 %v2015, %v2014
      %v2025 = vpack.c.bf16 %v2017, %v2016
      %2026 = vrot.lane.b32.xlu0 %v723, 64
      %v2027 = vpop.permute.xlu0 %2026
      %2028 = vrot.lane.b32.xlu0 %v724, 64
      %v2029 = vpop.permute.xlu0 %2028
      %2030 = vrot.lane.b32.xlu0 %v725, 64
      %v2031 = vpop.permute.xlu0 %2030
      %2032 = vrot.lane.b32.xlu0 %v726, 64
      %v2033 = vpop.permute.xlu0 %2032
      %2034 = vrot.lane.b32.xlu0 %v727, 64
      %v2035 = vpop.permute.xlu0 %2034
      %2036 = vrot.lane.b32.xlu0 %v728, 64
      %v2037 = vpop.permute.xlu0 %2036
      %2038 = vrot.lane.b32.xlu0 %v729, 64
      %v2039 = vpop.permute.xlu0 %2038
      %2040 = vrot.lane.b32.xlu0 %v730, 64
      %v2041 = vpop.permute.xlu0 %2040
      %2050 = vmatprep.subr.bf16.mxu0 0
      %2051 = vmatpush1.bf16.msra.mxu0 %v2041
      %2052 = vmatprep.subr.bf16.mxu0 0
      %2053 = vmatpush1.bf16.msra.mxu0 %v2039
      %2054 = vmatprep.subr.bf16.mxu0 0
      %2055 = vmatpush1.bf16.msra.mxu0 %v2037
      %2056 = vmatprep.subr.bf16.mxu0 0
      %2057 = vmatpush1.bf16.msra.mxu0 %v2035
      %2058 = vmatprep.subr.bf16.mxu0 0
      %2059 = vmatpush1.bf16.msra.mxu0 %v2033
      %2060 = vmatprep.subr.bf16.mxu0 0
      %2061 = vmatpush1.bf16.msra.mxu0 %v2031
      %2062 = vmatprep.subr.bf16.mxu0 0
      %2063 = vmatpush1.bf16.msra.mxu0 %v2029
      %2064 = vmatprep.subr.bf16.mxu0 0
      %2065 = vmatpush1.bf16.msra.mxu0 %v2027
      %2066 = vmatprep.subr.bf16.mxu0 0
      %2067 = vmatpush2.bf16.msra.mxu0 0
      %2068 = vmatprep.subr.bf16.mxu0 0
      %2069 = vmatpush2.bf16.msra.mxu0 0
      %2070 = vmatprep.subr.bf16.mxu0 0
      %2071 = vmatpush2.bf16.msra.mxu0 0
      %2072 = vmatprep.subr.bf16.mxu0 0
      %2073 = vmatpush2.bf16.msra.mxu0 0
      %2074 = vmatprep.subr.bf16.mxu0 0
      %2075 = vmatpush2.bf16.msra.mxu0 0
      %2076 = vmatprep.subr.bf16.mxu0 0
      %2077 = vmatpush2.bf16.msra.mxu0 0
      %2078 = vmatprep.subr.bf16.mxu0 0
      %2079 = vmatpush2.bf16.msra.mxu0 0
      %2080 = vmatprep.subr.bf16.mxu0 0
      %2081 = vmatpush2.bf16.msra.mxu0 0
      %2082 = vmatprep.mubr.bf16.mxu0 0
      %2083 = vmatmul.mubr.bf16.gmra.mxu0 %v2018
      %v2084 = vpop.f32.mrf.mxu0
      %v2085 = vadd.f32 0.0, %v2084
      %v2086 = vpop.f32.mrf.mxu0
      %v2087 = vpop.f32.mrf.mxu0
      %v2088 = vadd.f32 0.0, %v2087
      %v2089 = vpop.f32.mrf.mxu0
      %2090 = vmatprep.mubr.bf16.mxu0 0
      %2091 = vmatmul.mubr.bf16.gmra.mxu0 %v2019
      %v2092 = vpop.f32.mrf.mxu0
      %v2093 = vadd.f32 0.0, %v2092
      %v2094 = vpop.f32.mrf.mxu0
      %v2095 = vpop.f32.mrf.mxu0
      %v2096 = vadd.f32 0.0, %v2095
      %v2097 = vpop.f32.mrf.mxu0
      %2098 = vmatprep.mubr.bf16.mxu0 0
      %2099 = vmatmul.mubr.bf16.gmra.mxu0 %v2020
      %v2100 = vpop.f32.mrf.mxu0
      %v2101 = vadd.f32 0.0, %v2100
      %v2102 = vpop.f32.mrf.mxu0
      %v2103 = vpop.f32.mrf.mxu0
      %v2104 = vadd.f32 0.0, %v2103
      %v2105 = vpop.f32.mrf.mxu0
      %2106 = vmatprep.mubr.bf16.mxu0 0
      %2107 = vmatmul.mubr.bf16.gmra.mxu0 %v2021
      %v2108 = vpop.f32.mrf.mxu0
      %v2109 = vadd.f32 0.0, %v2108
      %v2110 = vpop.f32.mrf.mxu0
      %v2111 = vpop.f32.mrf.mxu0
      %v2112 = vadd.f32 0.0, %v2111
      %v2113 = vpop.f32.mrf.mxu0
      %2114 = vmatprep.mubr.bf16.mxu0 0
      %2115 = vmatmul.mubr.bf16.gmra.mxu0 %v2022
      %v2116 = vpop.f32.mrf.mxu0
      %v2117 = vadd.f32 0.0, %v2116
      %v2118 = vpop.f32.mrf.mxu0
      %v2119 = vpop.f32.mrf.mxu0
      %v2120 = vadd.f32 0.0, %v2119
      %v2121 = vpop.f32.mrf.mxu0
      %2122 = vmatprep.mubr.bf16.mxu0 0
      %2123 = vmatmul.mubr.bf16.gmra.mxu0 %v2023
      %v2124 = vpop.f32.mrf.mxu0
      %v2125 = vadd.f32 0.0, %v2124
      %v2126 = vpop.f32.mrf.mxu0
      %v2127 = vpop.f32.mrf.mxu0
      %v2128 = vadd.f32 0.0, %v2127
      %v2129 = vpop.f32.mrf.mxu0
      %2130 = vmatprep.mubr.bf16.mxu0 0
      %2131 = vmatmul.mubr.bf16.gmra.mxu0 %v2024
      %v2132 = vpop.f32.mrf.mxu0
      %v2133 = vadd.f32 0.0, %v2132
      %v2134 = vpop.f32.mrf.mxu0
      %v2135 = vpop.f32.mrf.mxu0
      %v2136 = vadd.f32 0.0, %v2135
      %v2137 = vpop.f32.mrf.mxu0
      %2138 = vmatprep.mubr.bf16.mxu0 0
      %2139 = vmatmul.mubr.bf16.gmra.mxu0 %v2025
      %v2140 = vpop.f32.mrf.mxu0
      %v2141 = vadd.f32 0.0, %v2140
      %v2142 = vpop.f32.mrf.mxu0
      %v2143 = vpop.f32.mrf.mxu0
      %v2144 = vadd.f32 0.0, %v2143
      %v2145 = vpop.f32.mrf.mxu0
      %2146 = vdwg.mxu0
      %2163 = vrot.lane.b32.xlu0 %v2085, 64
      %v2164 = vpop.permute.xlu0 %2163
      %2165 = vrot.lane.b32.xlu0 %v2088, 64
      %v2166 = vpop.permute.xlu0 %2165
      %2167 = vrot.lane.b32.xlu0 %v2093, 64
      %v2168 = vpop.permute.xlu0 %2167
      %2169 = vrot.lane.b32.xlu0 %v2096, 64
      %v2170 = vpop.permute.xlu0 %2169
      %2171 = vrot.lane.b32.xlu0 %v2101, 64
      %v2172 = vpop.permute.xlu0 %2171
      %2173 = vrot.lane.b32.xlu0 %v2104, 64
      %v2174 = vpop.permute.xlu0 %2173
      %2175 = vrot.lane.b32.xlu0 %v2109, 64
      %v2176 = vpop.permute.xlu0 %2175
      %2177 = vrot.lane.b32.xlu0 %v2112, 64
      %v2178 = vpop.permute.xlu0 %2177
      %2179 = vrot.lane.b32.xlu0 %v2117, 64
      %v2180 = vpop.permute.xlu0 %2179
      %2181 = vrot.lane.b32.xlu0 %v2120, 64
      %v2182 = vpop.permute.xlu0 %2181
      %2183 = vrot.lane.b32.xlu0 %v2125, 64
      %v2184 = vpop.permute.xlu0 %2183
      %2185 = vrot.lane.b32.xlu0 %v2128, 64
      %v2186 = vpop.permute.xlu0 %2185
      %2187 = vrot.lane.b32.xlu0 %v2133, 64
      %v2188 = vpop.permute.xlu0 %2187
      %2189 = vrot.lane.b32.xlu0 %v2136, 64
      %v2190 = vpop.permute.xlu0 %2189
      %2191 = vrot.lane.b32.xlu0 %v2141, 64
      %v2192 = vpop.permute.xlu0 %2191
      %2193 = vrot.lane.b32.xlu0 %v2144, 64
      %v2194 = vpop.permute.xlu0 %2193
      %vm2211 = vcmask 785920
      %2212 = vst.msk [vmem:[#allocation2] sm:$0xff] %vm2211, %v2164
      %2213 = vst.msk [vmem:[#allocation2 + $0x8] sm:$0xff] %vm2211, %v2166
      %2214 = vst.msk [vmem:[#allocation2 + $0x10] sm:$0xff] %vm2211, %v2168
      %2215 = vst.msk [vmem:[#allocation2 + $0x18] sm:$0xff] %vm2211, %v2170
      %2216 = vst.msk [vmem:[#allocation2 + $0x20] sm:$0xff] %vm2211, %v2172
      %2217 = vst.msk [vmem:[#allocation2 + $0x28] sm:$0xff] %vm2211, %v2174
      %2218 = vst.msk [vmem:[#allocation2 + $0x30] sm:$0xff] %vm2211, %v2176
      %2219 = vst.msk [vmem:[#allocation2 + $0x38] sm:$0xff] %vm2211, %v2178
      %2220 = vst.msk [vmem:[#allocation2 + $0x40] sm:$0xff] %vm2211, %v2180
      %2221 = vst.msk [vmem:[#allocation2 + $0x48] sm:$0xff] %vm2211, %v2182
      %2222 = vst.msk [vmem:[#allocation2 + $0x50] sm:$0xff] %vm2211, %v2184
      %2223 = vst.msk [vmem:[#allocation2 + $0x58] sm:$0xff] %vm2211, %v2186
      %2224 = vst.msk [vmem:[#allocation2 + $0x60] sm:$0xff] %vm2211, %v2188
      %2225 = vst.msk [vmem:[#allocation2 + $0x68] sm:$0xff] %vm2211, %v2190
      %2226 = vst.msk [vmem:[#allocation2 + $0x70] sm:$0xff] %vm2211, %v2192
      %2227 = vst.msk [vmem:[#allocation2 + $0x78] sm:$0xff] %vm2211, %v2194
      %2228 = vrot.lane.b32.xlu0 %v707, 32
      %v2229 = vpop.permute.xlu0 %2228
      %2230 = vrot.lane.b32.xlu0 %v708, 32
      %v2231 = vpop.permute.xlu0 %2230
      %2232 = vrot.lane.b32.xlu0 %v709, 32
      %v2233 = vpop.permute.xlu0 %2232
      %2234 = vrot.lane.b32.xlu0 %v710, 32
      %v2235 = vpop.permute.xlu0 %2234
      %2236 = vrot.lane.b32.xlu0 %v711, 32
      %v2237 = vpop.permute.xlu0 %2236
      %2238 = vrot.lane.b32.xlu0 %v712, 32
      %v2239 = vpop.permute.xlu0 %2238
      %2240 = vrot.lane.b32.xlu0 %v713, 32
      %v2241 = vpop.permute.xlu0 %2240
      %2242 = vrot.lane.b32.xlu0 %v714, 32
      %v2243 = vpop.permute.xlu0 %2242
      %2244 = vrot.lane.b32.xlu0 %v715, 32
      %v2245 = vpop.permute.xlu0 %2244
      %2246 = vrot.lane.b32.xlu0 %v716, 32
      %v2247 = vpop.permute.xlu0 %2246
      %2248 = vrot.lane.b32.xlu0 %v717, 32
      %v2249 = vpop.permute.xlu0 %2248
      %2250 = vrot.lane.b32.xlu0 %v718, 32
      %v2251 = vpop.permute.xlu0 %2250
      %2252 = vrot.lane.b32.xlu0 %v719, 32
      %v2253 = vpop.permute.xlu0 %2252
      %2254 = vrot.lane.b32.xlu0 %v720, 32
      %v2255 = vpop.permute.xlu0 %2254
      %2256 = vrot.lane.b32.xlu0 %v721, 32
      %v2257 = vpop.permute.xlu0 %2256
      %2258 = vrot.lane.b32.xlu0 %v722, 32
      %v2259 = vpop.permute.xlu0 %2258
      %v2261 = vsel %vm731, %v2229, 0
      %v2264 = vsel %vm731, %v2231, 0
      %v2267 = vsel %vm731, %v2233, 0
      %v2270 = vsel %vm731, %v2235, 0
      %v2273 = vsel %vm731, %v2237, 0
      %v2276 = vsel %vm731, %v2239, 0
      %v2279 = vsel %vm731, %v2241, 0
      %v2282 = vsel %vm731, %v2243, 0
      %v2285 = vsel %vm731, %v2245, 0
      %v2288 = vsel %vm731, %v2247, 0
      %v2291 = vsel %vm731, %v2249, 0
      %v2294 = vsel %vm731, %v2251, 0
      %v2297 = vsel %vm731, %v2253, 0
      %v2300 = vsel %vm731, %v2255, 0
      %v2303 = vsel %vm731, %v2257, 0
      %v2306 = vsel %vm731, %v2259, 0
      %2308 = vmatprep.subr.bf16.mxu0 0
      %2309 = vmatpush1.bf16.xpose.msra.mxu0 %v2306
      %2310 = vmatprep.subr.bf16.mxu0 0
      %2311 = vmatpush1.bf16.xpose.msra.mxu0 %v2303
      %2312 = vmatprep.subr.bf16.mxu0 0
      %2313 = vmatpush1.bf16.xpose.msra.mxu0 %v2300
      %2314 = vmatprep.subr.bf16.mxu0 0
      %2315 = vmatpush1.bf16.xpose.msra.mxu0 %v2297
      %2316 = vmatprep.subr.bf16.mxu0 0
      %2317 = vmatpush1.bf16.xpose.msra.mxu0 %v2294
      %2318 = vmatprep.subr.bf16.mxu0 0
      %2319 = vmatpush1.bf16.xpose.msra.mxu0 %v2291
      %2320 = vmatprep.subr.bf16.mxu0 0
      %2321 = vmatpush1.bf16.xpose.msra.mxu0 %v2288
      %2322 = vmatprep.subr.bf16.mxu0 0
      %2323 = vmatpush1.bf16.xpose.msra.mxu0 %v2285
      %2324 = vmatprep.subr.bf16.mxu0 0
      %2325 = vmatpush2.bf16.xpose.msra.mxu0 0
      %2326 = vmatprep.subr.bf16.mxu0 0
      %2327 = vmatpush2.bf16.xpose.msra.mxu0 0
      %2328 = vmatprep.subr.bf16.mxu0 0
      %2329 = vmatpush2.bf16.xpose.msra.mxu0 0
      %2330 = vmatprep.subr.bf16.mxu0 0
      %2331 = vmatpush2.bf16.xpose.msra.mxu0 0
      %2332 = vmatprep.subr.bf16.mxu0 0
      %2333 = vmatpush2.bf16.xpose.msra.mxu0 0
      %2334 = vmatprep.subr.bf16.mxu0 0
      %2335 = vmatpush2.bf16.xpose.msra.mxu0 0
      %2336 = vmatprep.subr.bf16.mxu0 0
      %2337 = vmatpush2.bf16.xpose.msra.mxu0 0
      %2338 = vmatprep.subr.bf16.mxu0 0
      %2339 = vmatpush2.bf16.xpose.msra.mxu0 0
      %2340 = vmatprep.mubr.bf16.mxu0 0
      %2341 = vmatmul.mubr.bf16.gmra.mxu0 %v2261
      %v2342 = vpop.f32.mrf.mxu0
      %v2343 = vadd.f32 0.0, %v2342
      %v2344 = vpop.f32.mrf.mxu0
      %v2345 = vpop.f32.mrf.mxu0
      %v2346 = vadd.f32 0.0, %v2345
      %v2347 = vpop.f32.mrf.mxu0
      %2348 = vmatprep.mubr.bf16.mxu0 0
      %2349 = vmatmul.mubr.bf16.gmra.mxu0 %v2264
      %v2350 = vpop.f32.mrf.mxu0
      %v2351 = vadd.f32 0.0, %v2350
      %v2352 = vpop.f32.mrf.mxu0
      %v2353 = vpop.f32.mrf.mxu0
      %v2354 = vadd.f32 0.0, %v2353
      %v2355 = vpop.f32.mrf.mxu0
      %2356 = vmatprep.mubr.bf16.mxu0 0
      %2357 = vmatmul.mubr.bf16.gmra.mxu0 %v2267
      %v2358 = vpop.f32.mrf.mxu0
      %v2359 = vadd.f32 0.0, %v2358
      %v2360 = vpop.f32.mrf.mxu0
      %v2361 = vpop.f32.mrf.mxu0
      %v2362 = vadd.f32 0.0, %v2361
      %v2363 = vpop.f32.mrf.mxu0
      %2364 = vmatprep.mubr.bf16.mxu0 0
      %2365 = vmatmul.mubr.bf16.gmra.mxu0 %v2270
      %v2366 = vpop.f32.mrf.mxu0
      %v2367 = vadd.f32 0.0, %v2366
      %v2368 = vpop.f32.mrf.mxu0
      %v2369 = vpop.f32.mrf.mxu0
      %v2370 = vadd.f32 0.0, %v2369
      %v2371 = vpop.f32.mrf.mxu0
      %2372 = vmatprep.mubr.bf16.mxu0 0
      %2373 = vmatmul.mubr.bf16.gmra.mxu0 %v2273
      %v2374 = vpop.f32.mrf.mxu0
      %v2375 = vadd.f32 0.0, %v2374
      %v2376 = vpop.f32.mrf.mxu0
      %v2377 = vpop.f32.mrf.mxu0
      %v2378 = vadd.f32 0.0, %v2377
      %v2379 = vpop.f32.mrf.mxu0
      %2380 = vmatprep.mubr.bf16.mxu0 0
      %2381 = vmatmul.mubr.bf16.gmra.mxu0 %v2276
      %v2382 = vpop.f32.mrf.mxu0
      %v2383 = vadd.f32 0.0, %v2382
      %v2384 = vpop.f32.mrf.mxu0
      %v2385 = vpop.f32.mrf.mxu0
      %v2386 = vadd.f32 0.0, %v2385
      %v2387 = vpop.f32.mrf.mxu0
      %2388 = vmatprep.mubr.bf16.mxu0 0
      %2389 = vmatmul.mubr.bf16.gmra.mxu0 %v2279
      %v2390 = vpop.f32.mrf.mxu0
      %v2391 = vadd.f32 0.0, %v2390
      %v2392 = vpop.f32.mrf.mxu0
      %v2393 = vpop.f32.mrf.mxu0
      %v2394 = vadd.f32 0.0, %v2393
      %v2395 = vpop.f32.mrf.mxu0
      %2396 = vmatprep.mubr.bf16.mxu0 0
      %2397 = vmatmul.mubr.bf16.gmra.mxu0 %v2282
      %v2398 = vpop.f32.mrf.mxu0
      %v2399 = vadd.f32 0.0, %v2398
      %v2400 = vpop.f32.mrf.mxu0
      %v2401 = vpop.f32.mrf.mxu0
      %v2402 = vadd.f32 0.0, %v2401
      %v2403 = vpop.f32.mrf.mxu0
      %2404 = vdwg.mxu0
      %2405 = vmax.xlane.f32.xlu0 %v2343
      %v2406 = vpop.xlane.xlu0 %2405
      %2407 = vmax.xlane.f32.xlu0 %v2346
      %v2408 = vpop.xlane.xlu0 %2407
      %2409 = vmax.xlane.f32.xlu0 %v2351
      %v2410 = vpop.xlane.xlu0 %2409
      %2411 = vmax.xlane.f32.xlu0 %v2354
      %v2412 = vpop.xlane.xlu0 %2411
      %2413 = vmax.xlane.f32.xlu0 %v2359
      %v2414 = vpop.xlane.xlu0 %2413
      %2415 = vmax.xlane.f32.xlu0 %v2362
      %v2416 = vpop.xlane.xlu0 %2415
      %2417 = vmax.xlane.f32.xlu0 %v2367
      %v2418 = vpop.xlane.xlu0 %2417
      %2419 = vmax.xlane.f32.xlu0 %v2370
      %v2420 = vpop.xlane.xlu0 %2419
      %2421 = vmax.xlane.f32.xlu0 %v2375
      %v2422 = vpop.xlane.xlu0 %2421
      %2423 = vmax.xlane.f32.xlu0 %v2378
      %v2424 = vpop.xlane.xlu0 %2423
      %2425 = vmax.xlane.f32.xlu0 %v2383
      %v2426 = vpop.xlane.xlu0 %2425
      %2427 = vmax.xlane.f32.xlu0 %v2386
      %v2428 = vpop.xlane.xlu0 %2427
      %2429 = vmax.xlane.f32.xlu0 %v2391
      %v2430 = vpop.xlane.xlu0 %2429
      %2431 = vmax.xlane.f32.xlu0 %v2394
      %v2432 = vpop.xlane.xlu0 %2431
      %2433 = vmax.xlane.f32.xlu0 %v2399
      %v2434 = vpop.xlane.xlu0 %2433
      %2435 = vmax.xlane.f32.xlu0 %v2402
      %v2436 = vpop.xlane.xlu0 %2435
      %v2437 = vsub.f32 %v2343, %v2406
      %v2438 = vsub.f32 %v2346, %v2408
      %v2439 = vsub.f32 %v2351, %v2410
      %v2440 = vsub.f32 %v2354, %v2412
      %v2441 = vsub.f32 %v2359, %v2414
      %v2442 = vsub.f32 %v2362, %v2416
      %v2443 = vsub.f32 %v2367, %v2418
      %v2444 = vsub.f32 %v2370, %v2420
      %v2445 = vsub.f32 %v2375, %v2422
      %v2446 = vsub.f32 %v2378, %v2424
      %v2447 = vsub.f32 %v2383, %v2426
      %v2448 = vsub.f32 %v2386, %v2428
      %v2449 = vsub.f32 %v2391, %v2430
      %v2450 = vsub.f32 %v2394, %v2432
      %v2451 = vsub.f32 %v2399, %v2434
      %v2452 = vsub.f32 %v2402, %v2436
      %v2453 = vmul.f32 %v2437, 1.442695
      %v2454 = vpow.pop %v2453
      %v2455 = vmul.f32 %v2438, 1.442695
      %v2456 = vpow.pop %v2455
      %v2457 = vmul.f32 %v2439, 1.442695
      %v2458 = vpow.pop %v2457
      %v2459 = vmul.f32 %v2440, 1.442695
      %v2460 = vpow.pop %v2459
      %v2461 = vmul.f32 %v2441, 1.442695
      %v2462 = vpow.pop %v2461
      %v2463 = vmul.f32 %v2442, 1.442695
      %v2464 = vpow.pop %v2463
      %v2465 = vmul.f32 %v2443, 1.442695
      %v2466 = vpow.pop %v2465
      %v2467 = vmul.f32 %v2444, 1.442695
      %v2468 = vpow.pop %v2467
      %v2469 = vmul.f32 %v2445, 1.442695
      %v2470 = vpow.pop %v2469
      %v2471 = vmul.f32 %v2446, 1.442695
      %v2472 = vpow.pop %v2471
      %v2473 = vmul.f32 %v2447, 1.442695
      %v2474 = vpow.pop %v2473
      %v2475 = vmul.f32 %v2448, 1.442695
      %v2476 = vpow.pop %v2475
      %v2477 = vmul.f32 %v2449, 1.442695
      %v2478 = vpow.pop %v2477
      %v2479 = vmul.f32 %v2450, 1.442695
      %v2480 = vpow.pop %v2479
      %v2481 = vmul.f32 %v2451, 1.442695
      %v2482 = vpow.pop %v2481
      %v2483 = vmul.f32 %v2452, 1.442695
      %v2484 = vpow.pop %v2483
      %2485 = vadd.xlane.f32.xlu0 %v2454
      %v2486 = vpop.xlane.xlu0 %2485
      %2487 = vadd.xlane.f32.xlu0 %v2456
      %v2488 = vpop.xlane.xlu0 %2487
      %2489 = vadd.xlane.f32.xlu0 %v2458
      %v2490 = vpop.xlane.xlu0 %2489
      %2491 = vadd.xlane.f32.xlu0 %v2460
      %v2492 = vpop.xlane.xlu0 %2491
      %2493 = vadd.xlane.f32.xlu0 %v2462
      %v2494 = vpop.xlane.xlu0 %2493
      %2495 = vadd.xlane.f32.xlu0 %v2464
      %v2496 = vpop.xlane.xlu0 %2495
      %2497 = vadd.xlane.f32.xlu0 %v2466
      %v2498 = vpop.xlane.xlu0 %2497
      %2499 = vadd.xlane.f32.xlu0 %v2468
      %v2500 = vpop.xlane.xlu0 %2499
      %2501 = vadd.xlane.f32.xlu0 %v2470
      %v2502 = vpop.xlane.xlu0 %2501
      %2503 = vadd.xlane.f32.xlu0 %v2472
      %v2504 = vpop.xlane.xlu0 %2503
      %2505 = vadd.xlane.f32.xlu0 %v2474
      %v2506 = vpop.xlane.xlu0 %2505
      %2507 = vadd.xlane.f32.xlu0 %v2476
      %v2508 = vpop.xlane.xlu0 %2507
      %2509 = vadd.xlane.f32.xlu0 %v2478
      %v2510 = vpop.xlane.xlu0 %2509
      %2511 = vadd.xlane.f32.xlu0 %v2480
      %v2512 = vpop.xlane.xlu0 %2511
      %2513 = vadd.xlane.f32.xlu0 %v2482
      %v2514 = vpop.xlane.xlu0 %2513
      %2515 = vadd.xlane.f32.xlu0 %v2484
      %v2516 = vpop.xlane.xlu0 %2515
      %v2517 = vrcp.pop %v2486
      %v2518 = vrcp.pop %v2488
      %v2519 = vrcp.pop %v2490
      %v2520 = vrcp.pop %v2492
      %v2521 = vrcp.pop %v2494
      %v2522 = vrcp.pop %v2496
      %v2523 = vrcp.pop %v2498
      %v2524 = vrcp.pop %v2500
      %v2525 = vrcp.pop %v2502
      %v2526 = vrcp.pop %v2504
      %v2527 = vrcp.pop %v2506
      %v2528 = vrcp.pop %v2508
      %v2529 = vrcp.pop %v2510
      %v2530 = vrcp.pop %v2512
      %v2531 = vrcp.pop %v2514
      %v2532 = vrcp.pop %v2516
      %v2533 = vmul.f32 %v2454, %v2517
      %v2534 = vmul.f32 %v2456, %v2518
      %v2535 = vmul.f32 %v2458, %v2519
      %v2536 = vmul.f32 %v2460, %v2520
      %v2537 = vmul.f32 %v2462, %v2521
      %v2538 = vmul.f32 %v2464, %v2522
      %v2539 = vmul.f32 %v2466, %v2523
      %v2540 = vmul.f32 %v2468, %v2524
      %v2541 = vmul.f32 %v2470, %v2525
      %v2542 = vmul.f32 %v2472, %v2526
      %v2543 = vmul.f32 %v2474, %v2527
      %v2544 = vmul.f32 %v2476, %v2528
      %v2545 = vmul.f32 %v2478, %v2529
      %v2546 = vmul.f32 %v2480, %v2530
      %v2547 = vmul.f32 %v2482, %v2531
      %v2548 = vmul.f32 %v2484, %v2532
      %v2549 = vpack.c.bf16 %v2534, %v2533
      %v2550 = vpack.c.bf16 %v2536, %v2535
      %v2551 = vpack.c.bf16 %v2538, %v2537
      %v2552 = vpack.c.bf16 %v2540, %v2539
      %v2553 = vpack.c.bf16 %v2542, %v2541
      %v2554 = vpack.c.bf16 %v2544, %v2543
      %v2555 = vpack.c.bf16 %v2546, %v2545
      %v2556 = vpack.c.bf16 %v2548, %v2547
      %2557 = vrot.lane.b32.xlu0 %v723, 32
      %v2558 = vpop.permute.xlu0 %2557
      %2559 = vrot.lane.b32.xlu0 %v724, 32
      %v2560 = vpop.permute.xlu0 %2559
      %2561 = vrot.lane.b32.xlu0 %v725, 32
      %v2562 = vpop.permute.xlu0 %2561
      %2563 = vrot.lane.b32.xlu0 %v726, 32
      %v2564 = vpop.permute.xlu0 %2563
      %2565 = vrot.lane.b32.xlu0 %v727, 32
      %v2566 = vpop.permute.xlu0 %2565
      %2567 = vrot.lane.b32.xlu0 %v728, 32
      %v2568 = vpop.permute.xlu0 %2567
      %2569 = vrot.lane.b32.xlu0 %v729, 32
      %v2570 = vpop.permute.xlu0 %2569
      %2571 = vrot.lane.b32.xlu0 %v730, 32
      %v2572 = vpop.permute.xlu0 %2571
      %2581 = vmatprep.subr.bf16.mxu0 0
      %2582 = vmatpush1.bf16.msra.mxu0 %v2572
      %2583 = vmatprep.subr.bf16.mxu0 0
      %2584 = vmatpush1.bf16.msra.mxu0 %v2570
      %2585 = vmatprep.subr.bf16.mxu0 0
      %2586 = vmatpush1.bf16.msra.mxu0 %v2568
      %2587 = vmatprep.subr.bf16.mxu0 0
      %2588 = vmatpush1.bf16.msra.mxu0 %v2566
      %2589 = vmatprep.subr.bf16.mxu0 0
      %2590 = vmatpush1.bf16.msra.mxu0 %v2564
      %2591 = vmatprep.subr.bf16.mxu0 0
      %2592 = vmatpush1.bf16.msra.mxu0 %v2562
      %2593 = vmatprep.subr.bf16.mxu0 0
      %2594 = vmatpush1.bf16.msra.mxu0 %v2560
      %2595 = vmatprep.subr.bf16.mxu0 0
      %2596 = vmatpush1.bf16.msra.mxu0 %v2558
      %2597 = vmatprep.subr.bf16.mxu0 0
      %2598 = vmatpush2.bf16.msra.mxu0 0
      %2599 = vmatprep.subr.bf16.mxu0 0
      %2600 = vmatpush2.bf16.msra.mxu0 0
      %2601 = vmatprep.subr.bf16.mxu0 0
      %2602 = vmatpush2.bf16.msra.mxu0 0
      %2603 = vmatprep.subr.bf16.mxu0 0
      %2604 = vmatpush2.bf16.msra.mxu0 0
      %2605 = vmatprep.subr.bf16.mxu0 0
      %2606 = vmatpush2.bf16.msra.mxu0 0
      %2607 = vmatprep.subr.bf16.mxu0 0
      %2608 = vmatpush2.bf16.msra.mxu0 0
      %2609 = vmatprep.subr.bf16.mxu0 0
      %2610 = vmatpush2.bf16.msra.mxu0 0
      %2611 = vmatprep.subr.bf16.mxu0 0
      %2612 = vmatpush2.bf16.msra.mxu0 0
      %2613 = vmatprep.mubr.bf16.mxu0 0
      %2614 = vmatmul.mubr.bf16.gmra.mxu0 %v2549
      %v2615 = vpop.f32.mrf.mxu0
      %v2616 = vadd.f32 0.0, %v2615
      %v2617 = vpop.f32.mrf.mxu0
      %v2618 = vpop.f32.mrf.mxu0
      %v2619 = vadd.f32 0.0, %v2618
      %v2620 = vpop.f32.mrf.mxu0
      %2621 = vmatprep.mubr.bf16.mxu0 0
      %2622 = vmatmul.mubr.bf16.gmra.mxu0 %v2550
      %v2623 = vpop.f32.mrf.mxu0
      %v2624 = vadd.f32 0.0, %v2623
      %v2625 = vpop.f32.mrf.mxu0
      %v2626 = vpop.f32.mrf.mxu0
      %v2627 = vadd.f32 0.0, %v2626
      %v2628 = vpop.f32.mrf.mxu0
      %2629 = vmatprep.mubr.bf16.mxu0 0
      %2630 = vmatmul.mubr.bf16.gmra.mxu0 %v2551
      %v2631 = vpop.f32.mrf.mxu0
      %v2632 = vadd.f32 0.0, %v2631
      %v2633 = vpop.f32.mrf.mxu0
      %v2634 = vpop.f32.mrf.mxu0
      %v2635 = vadd.f32 0.0, %v2634
      %v2636 = vpop.f32.mrf.mxu0
      %2637 = vmatprep.mubr.bf16.mxu0 0
      %2638 = vmatmul.mubr.bf16.gmra.mxu0 %v2552
      %v2639 = vpop.f32.mrf.mxu0
      %v2640 = vadd.f32 0.0, %v2639
      %v2641 = vpop.f32.mrf.mxu0
      %v2642 = vpop.f32.mrf.mxu0
      %v2643 = vadd.f32 0.0, %v2642
      %v2644 = vpop.f32.mrf.mxu0
      %2645 = vmatprep.mubr.bf16.mxu0 0
      %2646 = vmatmul.mubr.bf16.gmra.mxu0 %v2553
      %v2647 = vpop.f32.mrf.mxu0
      %v2648 = vadd.f32 0.0, %v2647
      %v2649 = vpop.f32.mrf.mxu0
      %v2650 = vpop.f32.mrf.mxu0
      %v2651 = vadd.f32 0.0, %v2650
      %v2652 = vpop.f32.mrf.mxu0
      %2653 = vmatprep.mubr.bf16.mxu0 0
      %2654 = vmatmul.mubr.bf16.gmra.mxu0 %v2554
      %v2655 = vpop.f32.mrf.mxu0
      %v2656 = vadd.f32 0.0, %v2655
      %v2657 = vpop.f32.mrf.mxu0
      %v2658 = vpop.f32.mrf.mxu0
      %v2659 = vadd.f32 0.0, %v2658
      %v2660 = vpop.f32.mrf.mxu0
      %2661 = vmatprep.mubr.bf16.mxu0 0
      %2662 = vmatmul.mubr.bf16.gmra.mxu0 %v2555
      %v2663 = vpop.f32.mrf.mxu0
      %v2664 = vadd.f32 0.0, %v2663
      %v2665 = vpop.f32.mrf.mxu0
      %v2666 = vpop.f32.mrf.mxu0
      %v2667 = vadd.f32 0.0, %v2666
      %v2668 = vpop.f32.mrf.mxu0
      %2669 = vmatprep.mubr.bf16.mxu0 0
      %2670 = vmatmul.mubr.bf16.gmra.mxu0 %v2556
      %v2671 = vpop.f32.mrf.mxu0
      %v2672 = vadd.f32 0.0, %v2671
      %v2673 = vpop.f32.mrf.mxu0
      %v2674 = vpop.f32.mrf.mxu0
      %v2675 = vadd.f32 0.0, %v2674
      %v2676 = vpop.f32.mrf.mxu0
      %2677 = vdwg.mxu0
      %2694 = vrot.lane.b32.xlu0 %v2616, 96
      %v2695 = vpop.permute.xlu0 %2694
      %2696 = vrot.lane.b32.xlu0 %v2619, 96
      %v2697 = vpop.permute.xlu0 %2696
      %2698 = vrot.lane.b32.xlu0 %v2624, 96
      %v2699 = vpop.permute.xlu0 %2698
      %2700 = vrot.lane.b32.xlu0 %v2627, 96
      %v2701 = vpop.permute.xlu0 %2700
      %2702 = vrot.lane.b32.xlu0 %v2632, 96
      %v2703 = vpop.permute.xlu0 %2702
      %2704 = vrot.lane.b32.xlu0 %v2635, 96
      %v2705 = vpop.permute.xlu0 %2704
      %2706 = vrot.lane.b32.xlu0 %v2640, 96
      %v2707 = vpop.permute.xlu0 %2706
      %2708 = vrot.lane.b32.xlu0 %v2643, 96
      %v2709 = vpop.permute.xlu0 %2708
      %2710 = vrot.lane.b32.xlu0 %v2648, 96
      %v2711 = vpop.permute.xlu0 %2710
      %2712 = vrot.lane.b32.xlu0 %v2651, 96
      %v2713 = vpop.permute.xlu0 %2712
      %2714 = vrot.lane.b32.xlu0 %v2656, 96
      %v2715 = vpop.permute.xlu0 %2714
      %2716 = vrot.lane.b32.xlu0 %v2659, 96
      %v2717 = vpop.permute.xlu0 %2716
      %2718 = vrot.lane.b32.xlu0 %v2664, 96
      %v2719 = vpop.permute.xlu0 %2718
      %2720 = vrot.lane.b32.xlu0 %v2667, 96
      %v2721 = vpop.permute.xlu0 %2720
      %2722 = vrot.lane.b32.xlu0 %v2672, 96
      %v2723 = vpop.permute.xlu0 %2722
      %2724 = vrot.lane.b32.xlu0 %v2675, 96
      %v2725 = vpop.permute.xlu0 %2724
      %vm2742 = vcmask 1048320
      %2743 = vst.msk [vmem:[#allocation2] sm:$0xff] %vm2742, %v2695
      %2744 = vst.msk [vmem:[#allocation2 + $0x8] sm:$0xff] %vm2742, %v2697
      %2745 = vst.msk [vmem:[#allocation2 + $0x10] sm:$0xff] %vm2742, %v2699
      %2746 = vst.msk [vmem:[#allocation2 + $0x18] sm:$0xff] %vm2742, %v2701
      %2747 = vst.msk [vmem:[#allocation2 + $0x20] sm:$0xff] %vm2742, %v2703
      %2748 = vst.msk [vmem:[#allocation2 + $0x28] sm:$0xff] %vm2742, %v2705
      %2749 = vst.msk [vmem:[#allocation2 + $0x30] sm:$0xff] %vm2742, %v2707
      %2750 = vst.msk [vmem:[#allocation2 + $0x38] sm:$0xff] %vm2742, %v2709
      %2751 = vst.msk [vmem:[#allocation2 + $0x40] sm:$0xff] %vm2742, %v2711
      %2752 = vst.msk [vmem:[#allocation2 + $0x48] sm:$0xff] %vm2742, %v2713
      %2753 = vst.msk [vmem:[#allocation2 + $0x50] sm:$0xff] %vm2742, %v2715
      %2754 = vst.msk [vmem:[#allocation2 + $0x58] sm:$0xff] %vm2742, %v2717
      %2755 = vst.msk [vmem:[#allocation2 + $0x60] sm:$0xff] %vm2742, %v2719
      %2756 = vst.msk [vmem:[#allocation2 + $0x68] sm:$0xff] %vm2742, %v2721
      %2757 = vst.msk [vmem:[#allocation2 + $0x70] sm:$0xff] %vm2742, %v2723
      %2758 = vst.msk [vmem:[#allocation2 + $0x78] sm:$0xff] %vm2742, %v2725
      %v2759 = vld [vmem:[#allocation2] sm:$0xff]
      %v2760 = vld [vmem:[#allocation2 + $0x8] sm:$0xff]
      %v2761 = vld [vmem:[#allocation2 + $0x10] sm:$0xff]
      %v2762 = vld [vmem:[#allocation2 + $0x18] sm:$0xff]
      %v2763 = vld [vmem:[#allocation2 + $0x20] sm:$0xff]
      %v2764 = vld [vmem:[#allocation2 + $0x28] sm:$0xff]
      %v2765 = vld [vmem:[#allocation2 + $0x30] sm:$0xff]
      %v2766 = vld [vmem:[#allocation2 + $0x38] sm:$0xff]
      %v2767 = vld [vmem:[#allocation2 + $0x40] sm:$0xff]
      %v2768 = vld [vmem:[#allocation2 + $0x48] sm:$0xff]
      %v2769 = vld [vmem:[#allocation2 + $0x50] sm:$0xff]
      %v2770 = vld [vmem:[#allocation2 + $0x58] sm:$0xff]
      %v2771 = vld [vmem:[#allocation2 + $0x60] sm:$0xff]
      %v2772 = vld [vmem:[#allocation2 + $0x68] sm:$0xff]
      %v2773 = vld [vmem:[#allocation2 + $0x70] sm:$0xff]
      %v2774 = vld [vmem:[#allocation2 + $0x78] sm:$0xff]
      %v2775 = vpack.c.bf16 %v2760, %v2759
      %v2776 = vpack.c.bf16 %v2762, %v2761
      %v2777 = vpack.c.bf16 %v2764, %v2763
      %v2778 = vpack.c.bf16 %v2766, %v2765
      %v2779 = vpack.c.bf16 %v2768, %v2767
      %v2780 = vpack.c.bf16 %v2770, %v2769
      %v2781 = vpack.c.bf16 %v2772, %v2771
      %v2782 = vpack.c.bf16 %v2774, %v2773
      %v2783 = vld [vmem:[%s3] sm:$0xf]
      %v2784 = vld [vmem:[%s3 + $0x4] sm:$0xf]
      %v2785 = vld [vmem:[%s3 + $0x8] sm:$0xf]
      %v2786 = vld [vmem:[%s3 + $0xc] sm:$0xf]
      %v2787 = vld [vmem:[%s3 + $0x10] sm:$0xf]
      %v2788 = vld [vmem:[%s3 + $0x14] sm:$0xf]
      %v2789 = vld [vmem:[%s3 + $0x18] sm:$0xf]
      %v2790 = vld [vmem:[%s3 + $0x1c] sm:$0xf]
      %v2791 = vld [vmem:[%s3 + $0x20] sm:$0xf]
      %v2792 = vld [vmem:[%s3 + $0x24] sm:$0xf]
      %v2793 = vld [vmem:[%s3 + $0x28] sm:$0xf]
      %v2794 = vld [vmem:[%s3 + $0x2c] sm:$0xf]
      %v2795 = vld [vmem:[%s3 + $0x30] sm:$0xf]
      %v2796 = vld [vmem:[%s3 + $0x34] sm:$0xf]
      %v2797 = vld [vmem:[%s3 + $0x38] sm:$0xf]
      %v2798 = vld [vmem:[%s3 + $0x3c] sm:$0xf]
      %v2799 = vld [vmem:[%s4] sm:$0x1]
      %v2801 = vlaneseq
      %v2802 = vshrl.u32 %v2801, 7
      %v2803 = vsub.s32 0, %v2802
      %v2804 = vrot.slane %v2799, %v2803
      %v2822 = vunpack.c.l.b16 %v2783
      %v2823 = vunpack.c.l.b16 %v2784
      %v2824 = vunpack.c.l.b16 %v2785
      %v2825 = vunpack.c.l.b16 %v2786
      %v2826 = vunpack.c.l.b16 %v2787
      %v2827 = vunpack.c.l.b16 %v2788
      %v2828 = vunpack.c.l.b16 %v2789
      %v2829 = vunpack.c.l.b16 %v2790
      %v2830 = vunpack.c.l.b16 %v2791
      %v2831 = vunpack.c.l.b16 %v2792
      %v2832 = vunpack.c.l.b16 %v2793
      %v2833 = vunpack.c.l.b16 %v2794
      %v2834 = vunpack.c.l.b16 %v2795
      %v2835 = vunpack.c.l.b16 %v2796
      %v2836 = vunpack.c.l.b16 %v2797
      %v2837 = vunpack.c.l.b16 %v2798
      %v2838 = vpack.c.b16 %v2823, %v2822
      %v2839 = vpack.c.b16 %v2825, %v2824
      %v2840 = vpack.c.b16 %v2827, %v2826
      %v2841 = vpack.c.b16 %v2829, %v2828
      %v2842 = vpack.c.b16 %v2831, %v2830
      %v2843 = vpack.c.b16 %v2833, %v2832
      %v2844 = vpack.c.b16 %v2835, %v2834
      %v2845 = vpack.c.b16 %v2837, %v2836
      %2854 = vmatprep.subr.bf16.mxu0 0
      %2855 = vmatpush1.bf16.msra.mxu0 %v2845
      %2856 = vmatprep.subr.bf16.mxu0 0
      %2857 = vmatpush1.bf16.msra.mxu0 %v2844
      %2858 = vmatprep.subr.bf16.mxu0 0
      %2859 = vmatpush1.bf16.msra.mxu0 %v2843
      %2860 = vmatprep.subr.bf16.mxu0 0
      %2861 = vmatpush1.bf16.msra.mxu0 %v2842
      %2862 = vmatprep.subr.bf16.mxu0 0
      %2863 = vmatpush1.bf16.msra.mxu0 %v2841
      %2864 = vmatprep.subr.bf16.mxu0 0
      %2865 = vmatpush1.bf16.msra.mxu0 %v2840
      %2866 = vmatprep.subr.bf16.mxu0 0
      %2867 = vmatpush1.bf16.msra.mxu0 %v2839
      %2868 = vmatprep.subr.bf16.mxu0 0
      %2869 = vmatpush1.bf16.msra.mxu0 %v2838
      %2870 = vmatprep.subr.bf16.mxu0 0
      %2871 = vmatpush2.bf16.msra.mxu0 0
      %2872 = vmatprep.subr.bf16.mxu0 0
      %2873 = vmatpush2.bf16.msra.mxu0 0
      %2874 = vmatprep.subr.bf16.mxu0 0
      %2875 = vmatpush2.bf16.msra.mxu0 0
      %2876 = vmatprep.subr.bf16.mxu0 0
      %2877 = vmatpush2.bf16.msra.mxu0 0
      %2878 = vmatprep.subr.bf16.mxu0 0
      %2879 = vmatpush2.bf16.msra.mxu0 0
      %2880 = vmatprep.subr.bf16.mxu0 0
      %2881 = vmatpush2.bf16.msra.mxu0 0
      %2882 = vmatprep.subr.bf16.mxu0 0
      %2883 = vmatpush2.bf16.msra.mxu0 0
      %2884 = vmatprep.subr.bf16.mxu0 0
      %2885 = vmatpush2.bf16.msra.mxu0 0
      %2886 = vmatprep.mubr.bf16.mxu0 0
      %2887 = vmatmul.mubr.bf16.gmra.mxu0 %v2775
      %v2888 = vpop.f32.mrf.mxu0
      %v2889 = vadd.f32 %v2804, %v2888
      %v2890 = vpop.f32.mrf.mxu0
      %v2891 = vpop.f32.mrf.mxu0
      %v2892 = vadd.f32 %v2804, %v2891
      %v2893 = vpop.f32.mrf.mxu0
      %2894 = vmatprep.mubr.bf16.mxu0 0
      %2895 = vmatmul.mubr.bf16.gmra.mxu0 %v2776
      %v2896 = vpop.f32.mrf.mxu0
      %v2897 = vadd.f32 %v2804, %v2896
      %v2898 = vpop.f32.mrf.mxu0
      %v2899 = vpop.f32.mrf.mxu0
      %v2900 = vadd.f32 %v2804, %v2899
      %v2901 = vpop.f32.mrf.mxu0
      %2902 = vmatprep.mubr.bf16.mxu0 0
      %2903 = vmatmul.mubr.bf16.gmra.mxu0 %v2777
      %v2904 = vpop.f32.mrf.mxu0
      %v2905 = vadd.f32 %v2804, %v2904
      %v2906 = vpop.f32.mrf.mxu0
      %v2907 = vpop.f32.mrf.mxu0
      %v2908 = vadd.f32 %v2804, %v2907
      %v2909 = vpop.f32.mrf.mxu0
      %2910 = vmatprep.mubr.bf16.mxu0 0
      %2911 = vmatmul.mubr.bf16.gmra.mxu0 %v2778
      %v2912 = vpop.f32.mrf.mxu0
      %v2913 = vadd.f32 %v2804, %v2912
      %v2914 = vpop.f32.mrf.mxu0
      %v2915 = vpop.f32.mrf.mxu0
      %v2916 = vadd.f32 %v2804, %v2915
      %v2917 = vpop.f32.mrf.mxu0
      %2918 = vmatprep.mubr.bf16.mxu0 0
      %2919 = vmatmul.mubr.bf16.gmra.mxu0 %v2779
      %v2920 = vpop.f32.mrf.mxu0
      %v2921 = vadd.f32 %v2804, %v2920
      %v2922 = vpop.f32.mrf.mxu0
      %v2923 = vpop.f32.mrf.mxu0
      %v2924 = vadd.f32 %v2804, %v2923
      %v2925 = vpop.f32.mrf.mxu0
      %2926 = vmatprep.mubr.bf16.mxu0 0
      %2927 = vmatmul.mubr.bf16.gmra.mxu0 %v2780
      %v2928 = vpop.f32.mrf.mxu0
      %v2929 = vadd.f32 %v2804, %v2928
      %v2930 = vpop.f32.mrf.mxu0
      %v2931 = vpop.f32.mrf.mxu0
      %v2932 = vadd.f32 %v2804, %v2931
      %v2933 = vpop.f32.mrf.mxu0
      %2934 = vmatprep.mubr.bf16.mxu0 0
      %2935 = vmatmul.mubr.bf16.gmra.mxu0 %v2781
      %v2936 = vpop.f32.mrf.mxu0
      %v2937 = vadd.f32 %v2804, %v2936
      %v2938 = vpop.f32.mrf.mxu0
      %v2939 = vpop.f32.mrf.mxu0
      %v2940 = vadd.f32 %v2804, %v2939
      %v2941 = vpop.f32.mrf.mxu0
      %2942 = vmatprep.mubr.bf16.mxu0 0
      %2943 = vmatmul.mubr.bf16.gmra.mxu0 %v2782
      %v2944 = vpop.f32.mrf.mxu0
      %v2945 = vadd.f32 %v2804, %v2944
      %v2946 = vpop.f32.mrf.mxu0
      %v2947 = vpop.f32.mrf.mxu0
      %v2948 = vadd.f32 %v2804, %v2947
      %v2949 = vpop.f32.mrf.mxu0
      %2950 = vdwg.mxu0
      %v2951 = vpack.c.bf16 %v2892, %v2889
      %v2952 = vpack.c.bf16 %v2900, %v2897
      %v2953 = vpack.c.bf16 %v2908, %v2905
      %v2954 = vpack.c.bf16 %v2916, %v2913
      %v2955 = vpack.c.bf16 %v2924, %v2921
      %v2956 = vpack.c.bf16 %v2932, %v2929
      %v2957 = vpack.c.bf16 %v2940, %v2937
      %v2958 = vpack.c.bf16 %v2948, %v2945
      %v2959 = vld [vmem:[%s5] sm:$0xff]
      %v2960 = vld [vmem:[%s5 + $0x8] sm:$0xff]
      %v2961 = vld [vmem:[%s5 + $0x10] sm:$0xff]
      %v2962 = vld [vmem:[%s5 + $0x18] sm:$0xff]
      %v2963 = vld [vmem:[%s5 + $0x20] sm:$0xff]
      %v2964 = vld [vmem:[%s5 + $0x28] sm:$0xff]
      %v2965 = vld [vmem:[%s5 + $0x30] sm:$0xff]
      %v2966 = vld [vmem:[%s5 + $0x38] sm:$0xff]
      %v2967 = vld [vmem:[%s5 + $0x40] sm:$0xff]
      %v2968 = vld [vmem:[%s5 + $0x48] sm:$0xff]
      %v2969 = vld [vmem:[%s5 + $0x50] sm:$0xff]
      %v2970 = vld [vmem:[%s5 + $0x58] sm:$0xff]
      %v2971 = vld [vmem:[%s5 + $0x60] sm:$0xff]
      %v2972 = vld [vmem:[%s5 + $0x68] sm:$0xff]
      %v2973 = vld [vmem:[%s5 + $0x70] sm:$0xff]
      %v2974 = vld [vmem:[%s5 + $0x78] sm:$0xff]
      %v2975 = vld [vmem:[%s6] sm:$0x3]
      %v2977 = vlaneseq
      %v2978 = vshrl.u32 %v2977, 7
      %v2979 = vsub.s32 0, %v2978
      %v2980 = vrot.slane %v2975, %v2979
      %v2981 = vlaneseq
      %v2982 = vshrl.u32 %v2981, 7
      %v2983 = vsub.s32 1, %v2982
      %v2984 = vrot.slane %v2975, %v2983
      %v3003 = vunpack.c.l.b16 %v2959
      %v3004 = vunpack.c.h.b16 %v2959
      %v3005 = vunpack.c.l.b16 %v2960
      %v3006 = vunpack.c.h.b16 %v2960
      %v3007 = vunpack.c.l.b16 %v2961
      %v3008 = vunpack.c.h.b16 %v2961
      %v3009 = vunpack.c.l.b16 %v2962
      %v3010 = vunpack.c.h.b16 %v2962
      %v3011 = vunpack.c.l.b16 %v2963
      %v3012 = vunpack.c.h.b16 %v2963
      %v3013 = vunpack.c.l.b16 %v2964
      %v3014 = vunpack.c.h.b16 %v2964
      %v3015 = vunpack.c.l.b16 %v2965
      %v3016 = vunpack.c.h.b16 %v2965
      %v3017 = vunpack.c.l.b16 %v2966
      %v3018 = vunpack.c.h.b16 %v2966
      %v3019 = vunpack.c.l.b16 %v2967
      %v3020 = vunpack.c.h.b16 %v2967
      %v3021 = vunpack.c.l.b16 %v2968
      %v3022 = vunpack.c.h.b16 %v2968
      %v3023 = vunpack.c.l.b16 %v2969
      %v3024 = vunpack.c.h.b16 %v2969
      %v3025 = vunpack.c.l.b16 %v2970
      %v3026 = vunpack.c.h.b16 %v2970
      %v3027 = vunpack.c.l.b16 %v2971
      %v3028 = vunpack.c.h.b16 %v2971
      %v3029 = vunpack.c.l.b16 %v2972
      %v3030 = vunpack.c.h.b16 %v2972
      %v3031 = vunpack.c.l.b16 %v2973
      %v3032 = vunpack.c.h.b16 %v2973
      %v3033 = vunpack.c.l.b16 %v2974
      %v3034 = vunpack.c.h.b16 %v2974
      %v3035 = vpack.c.b16 %v3005, %v3003
      %v3036 = vpack.c.b16 %v3006, %v3004
      %v3037 = vpack.c.b16 %v3009, %v3007
      %v3038 = vpack.c.b16 %v3010, %v3008
      %v3039 = vpack.c.b16 %v3013, %v3011
      %v3040 = vpack.c.b16 %v3014, %v3012
      %v3041 = vpack.c.b16 %v3017, %v3015
      %v3042 = vpack.c.b16 %v3018, %v3016
      %v3043 = vpack.c.b16 %v3021, %v3019
      %v3044 = vpack.c.b16 %v3022, %v3020
      %v3045 = vpack.c.b16 %v3025, %v3023
      %v3046 = vpack.c.b16 %v3026, %v3024
      %v3047 = vpack.c.b16 %v3029, %v3027
      %v3048 = vpack.c.b16 %v3030, %v3028
      %v3049 = vpack.c.b16 %v3033, %v3031
      %v3050 = vpack.c.b16 %v3034, %v3032
      %3067 = vmatprep.subr.bf16.mxu0 %v3050
      %3068 = vmatpush1.bf16.msra.mxu0 %v3049
      %3069 = vmatprep.subr.bf16.mxu0 %v3048
      %3070 = vmatpush1.bf16.msra.mxu0 %v3047
      %3071 = vmatprep.subr.bf16.mxu0 %v3046
      %3072 = vmatpush1.bf16.msra.mxu0 %v3045
      %3073 = vmatprep.subr.bf16.mxu0 %v3044
      %3074 = vmatpush1.bf16.msra.mxu0 %v3043
      %3075 = vmatprep.subr.bf16.mxu0 %v3042
      %3076 = vmatpush1.bf16.msra.mxu0 %v3041
      %3077 = vmatprep.subr.bf16.mxu0 %v3040
      %3078 = vmatpush1.bf16.msra.mxu0 %v3039
      %3079 = vmatprep.subr.bf16.mxu0 %v3038
      %3080 = vmatpush1.bf16.msra.mxu0 %v3037
      %3081 = vmatprep.subr.bf16.mxu0 %v3036
      %3082 = vmatpush1.bf16.msra.mxu0 %v3035
      %3083 = vmatprep.subr.bf16.mxu0 0
      %3084 = vmatpush2.bf16.msra.mxu0 0
      %3085 = vmatprep.subr.bf16.mxu0 0
      %3086 = vmatpush2.bf16.msra.mxu0 0
      %3087 = vmatprep.subr.bf16.mxu0 0
      %3088 = vmatpush2.bf16.msra.mxu0 0
      %3089 = vmatprep.subr.bf16.mxu0 0
      %3090 = vmatpush2.bf16.msra.mxu0 0
      %3091 = vmatprep.subr.bf16.mxu0 0
      %3092 = vmatpush2.bf16.msra.mxu0 0
      %3093 = vmatprep.subr.bf16.mxu0 0
      %3094 = vmatpush2.bf16.msra.mxu0 0
      %3095 = vmatprep.subr.bf16.mxu0 0
      %3096 = vmatpush2.bf16.msra.mxu0 0
      %3097 = vmatprep.subr.bf16.mxu0 0
      %3098 = vmatpush2.bf16.msra.mxu0 0
      %3099 = vmatprep.mubr.bf16.mxu0 0
      %3100 = vmatmul.mubr.bf16.gmra.mxu0 %v2951
      %v3101 = vpop.f32.mrf.mxu0
      %v3102 = vadd.f32 %v2980, %v3101
      %v3103 = vpop.f32.mrf.mxu0
      %v3104 = vadd.f32 %v2984, %v3103
      %v3105 = vpop.f32.mrf.mxu0
      %v3106 = vadd.f32 %v2980, %v3105
      %v3107 = vpop.f32.mrf.mxu0
      %v3108 = vadd.f32 %v2984, %v3107
      %3109 = vmatprep.mubr.bf16.mxu0 0
      %3110 = vmatmul.mubr.bf16.gmra.mxu0 %v2952
      %v3111 = vpop.f32.mrf.mxu0
      %v3112 = vadd.f32 %v2980, %v3111
      %v3113 = vpop.f32.mrf.mxu0
      %v3114 = vadd.f32 %v2984, %v3113
      %v3115 = vpop.f32.mrf.mxu0
      %v3116 = vadd.f32 %v2980, %v3115
      %v3117 = vpop.f32.mrf.mxu0
      %v3118 = vadd.f32 %v2984, %v3117
      %3119 = vmatprep.mubr.bf16.mxu0 0
      %3120 = vmatmul.mubr.bf16.gmra.mxu0 %v2953
      %v3121 = vpop.f32.mrf.mxu0
      %v3122 = vadd.f32 %v2980, %v3121
      %v3123 = vpop.f32.mrf.mxu0
      %v3124 = vadd.f32 %v2984, %v3123
      %v3125 = vpop.f32.mrf.mxu0
      %v3126 = vadd.f32 %v2980, %v3125
      %v3127 = vpop.f32.mrf.mxu0
      %v3128 = vadd.f32 %v2984, %v3127
      %3129 = vmatprep.mubr.bf16.mxu0 0
      %3130 = vmatmul.mubr.bf16.gmra.mxu0 %v2954
      %v3131 = vpop.f32.mrf.mxu0
      %v3132 = vadd.f32 %v2980, %v3131
      %v3133 = vpop.f32.mrf.mxu0
      %v3134 = vadd.f32 %v2984, %v3133
      %v3135 = vpop.f32.mrf.mxu0
      %v3136 = vadd.f32 %v2980, %v3135
      %v3137 = vpop.f32.mrf.mxu0
      %v3138 = vadd.f32 %v2984, %v3137
      %3139 = vmatprep.mubr.bf16.mxu0 0
      %3140 = vmatmul.mubr.bf16.gmra.mxu0 %v2955
      %v3141 = vpop.f32.mrf.mxu0
      %v3142 = vadd.f32 %v2980, %v3141
      %v3143 = vpop.f32.mrf.mxu0
      %v3144 = vadd.f32 %v2984, %v3143
      %v3145 = vpop.f32.mrf.mxu0
      %v3146 = vadd.f32 %v2980, %v3145
      %v3147 = vpop.f32.mrf.mxu0
      %v3148 = vadd.f32 %v2984, %v3147
      %3149 = vmatprep.mubr.bf16.mxu0 0
      %3150 = vmatmul.mubr.bf16.gmra.mxu0 %v2956
      %v3151 = vpop.f32.mrf.mxu0
      %v3152 = vadd.f32 %v2980, %v3151
      %v3153 = vpop.f32.mrf.mxu0
      %v3154 = vadd.f32 %v2984, %v3153
      %v3155 = vpop.f32.mrf.mxu0
      %v3156 = vadd.f32 %v2980, %v3155
      %v3157 = vpop.f32.mrf.mxu0
      %v3158 = vadd.f32 %v2984, %v3157
      %3159 = vmatprep.mubr.bf16.mxu0 0
      %3160 = vmatmul.mubr.bf16.gmra.mxu0 %v2957
      %v3161 = vpop.f32.mrf.mxu0
      %v3162 = vadd.f32 %v2980, %v3161
      %v3163 = vpop.f32.mrf.mxu0
      %v3164 = vadd.f32 %v2984, %v3163
      %v3165 = vpop.f32.mrf.mxu0
      %v3166 = vadd.f32 %v2980, %v3165
      %v3167 = vpop.f32.mrf.mxu0
      %v3168 = vadd.f32 %v2984, %v3167
      %3169 = vmatprep.mubr.bf16.mxu0 0
      %3170 = vmatmul.mubr.bf16.gmra.mxu0 %v2958
      %v3171 = vpop.f32.mrf.mxu0
      %v3172 = vadd.f32 %v2980, %v3171
      %v3173 = vpop.f32.mrf.mxu0
      %v3174 = vadd.f32 %v2984, %v3173
      %v3175 = vpop.f32.mrf.mxu0
      %v3176 = vadd.f32 %v2980, %v3175
      %v3177 = vpop.f32.mrf.mxu0
      %v3178 = vadd.f32 %v2984, %v3177
      %3179 = vdwg.mxu0
      %v3180 = vxor.u32 %v3102, 2147483648
      %v3181 = vxor.u32 %v3104, 2147483648
      %v3182 = vxor.u32 %v3106, 2147483648
      %v3183 = vxor.u32 %v3108, 2147483648
      %v3184 = vxor.u32 %v3112, 2147483648
      %v3185 = vxor.u32 %v3114, 2147483648
      %v3186 = vxor.u32 %v3116, 2147483648
      %v3187 = vxor.u32 %v3118, 2147483648
      %v3188 = vxor.u32 %v3122, 2147483648
      %v3189 = vxor.u32 %v3124, 2147483648
      %v3190 = vxor.u32 %v3126, 2147483648
      %v3191 = vxor.u32 %v3128, 2147483648
      %v3192 = vxor.u32 %v3132, 2147483648
      %v3193 = vxor.u32 %v3134, 2147483648
      %v3194 = vxor.u32 %v3136, 2147483648
      %v3195 = vxor.u32 %v3138, 2147483648
      %v3196 = vxor.u32 %v3142, 2147483648
      %v3197 = vxor.u32 %v3144, 2147483648
      %v3198 = vxor.u32 %v3146, 2147483648
      %v3199 = vxor.u32 %v3148, 2147483648
      %v3200 = vxor.u32 %v3152, 2147483648
      %v3201 = vxor.u32 %v3154, 2147483648
      %v3202 = vxor.u32 %v3156, 2147483648
      %v3203 = vxor.u32 %v3158, 2147483648
      %v3204 = vxor.u32 %v3162, 2147483648
      %v3205 = vxor.u32 %v3164, 2147483648
      %v3206 = vxor.u32 %v3166, 2147483648
      %v3207 = vxor.u32 %v3168, 2147483648
      %v3208 = vxor.u32 %v3172, 2147483648
      %v3209 = vxor.u32 %v3174, 2147483648
      %v3210 = vxor.u32 %v3176, 2147483648
      %v3211 = vxor.u32 %v3178, 2147483648
      %v3212 = vmul.f32 %v3180, 1.442695
      %v3213 = vpow.pop %v3212
      %v3214 = vmul.f32 %v3181, 1.442695
      %v3215 = vpow.pop %v3214
      %v3216 = vmul.f32 %v3182, 1.442695
      %v3217 = vpow.pop %v3216
      %v3218 = vmul.f32 %v3183, 1.442695
      %v3219 = vpow.pop %v3218
      %v3220 = vmul.f32 %v3184, 1.442695
      %v3221 = vpow.pop %v3220
      %v3222 = vmul.f32 %v3185, 1.442695
      %v3223 = vpow.pop %v3222
      %v3224 = vmul.f32 %v3186, 1.442695
      %v3225 = vpow.pop %v3224
      %v3226 = vmul.f32 %v3187, 1.442695
      %v3227 = vpow.pop %v3226
      %v3228 = vmul.f32 %v3188, 1.442695
      %v3229 = vpow.pop %v3228
      %v3230 = vmul.f32 %v3189, 1.442695
      %v3231 = vpow.pop %v3230
      %v3232 = vmul.f32 %v3190, 1.442695
      %v3233 = vpow.pop %v3232
      %v3234 = vmul.f32 %v3191, 1.442695
      %v3235 = vpow.pop %v3234
      %v3236 = vmul.f32 %v3192, 1.442695
      %v3237 = vpow.pop %v3236
      %v3238 = vmul.f32 %v3193, 1.442695
      %v3239 = vpow.pop %v3238
      %v3240 = vmul.f32 %v3194, 1.442695
      %v3241 = vpow.pop %v3240
      %v3242 = vmul.f32 %v3195, 1.442695
      %v3243 = vpow.pop %v3242
      %v3244 = vmul.f32 %v3196, 1.442695
      %v3245 = vpow.pop %v3244
      %v3246 = vmul.f32 %v3197, 1.442695
      %v3247 = vpow.pop %v3246
      %v3248 = vmul.f32 %v3198, 1.442695
      %v3249 = vpow.pop %v3248
      %v3250 = vmul.f32 %v3199, 1.442695
      %v3251 = vpow.pop %v3250
      %v3252 = vmul.f32 %v3200, 1.442695
      %v3253 = vpow.pop %v3252
      %v3254 = vmul.f32 %v3201, 1.442695
      %v3255 = vpow.pop %v3254
      %v3256 = vmul.f32 %v3202, 1.442695
      %v3257 = vpow.pop %v3256
      %v3258 = vmul.f32 %v3203, 1.442695
      %v3259 = vpow.pop %v3258
      %v3260 = vmul.f32 %v3204, 1.442695
      %v3261 = vpow.pop %v3260
      %v3262 = vmul.f32 %v3205, 1.442695
      %v3263 = vpow.pop %v3262
      %v3264 = vmul.f32 %v3206, 1.442695
      %v3265 = vpow.pop %v3264
      %v3266 = vmul.f32 %v3207, 1.442695
      %v3267 = vpow.pop %v3266
      %v3268 = vmul.f32 %v3208, 1.442695
      %v3269 = vpow.pop %v3268
      %v3270 = vmul.f32 %v3209, 1.442695
      %v3271 = vpow.pop %v3270
      %v3272 = vmul.f32 %v3210, 1.442695
      %v3273 = vpow.pop %v3272
      %v3274 = vmul.f32 %v3211, 1.442695
      %v3275 = vpow.pop %v3274
      %v3276 = vadd.f32 %v3213, 1.0
      %v3277 = vadd.f32 %v3215, 1.0
      %v3278 = vadd.f32 %v3217, 1.0
      %v3279 = vadd.f32 %v3219, 1.0
      %v3280 = vadd.f32 %v3221, 1.0
      %v3281 = vadd.f32 %v3223, 1.0
      %v3282 = vadd.f32 %v3225, 1.0
      %v3283 = vadd.f32 %v3227, 1.0
      %v3284 = vadd.f32 %v3229, 1.0
      %v3285 = vadd.f32 %v3231, 1.0
      %v3286 = vadd.f32 %v3233, 1.0
      %v3287 = vadd.f32 %v3235, 1.0
      %v3288 = vadd.f32 %v3237, 1.0
      %v3289 = vadd.f32 %v3239, 1.0
      %v3290 = vadd.f32 %v3241, 1.0
      %v3291 = vadd.f32 %v3243, 1.0
      %v3292 = vadd.f32 %v3245, 1.0
      %v3293 = vadd.f32 %v3247, 1.0
      %v3294 = vadd.f32 %v3249, 1.0
      %v3295 = vadd.f32 %v3251, 1.0
      %v3296 = vadd.f32 %v3253, 1.0
      %v3297 = vadd.f32 %v3255, 1.0
      %v3298 = vadd.f32 %v3257, 1.0
      %v3299 = vadd.f32 %v3259, 1.0
      %v3300 = vadd.f32 %v3261, 1.0
      %v3301 = vadd.f32 %v3263, 1.0
      %v3302 = vadd.f32 %v3265, 1.0
      %v3303 = vadd.f32 %v3267, 1.0
      %v3304 = vadd.f32 %v3269, 1.0
      %v3305 = vadd.f32 %v3271, 1.0
      %v3306 = vadd.f32 %v3273, 1.0
      %v3307 = vadd.f32 %v3275, 1.0
      %v3308 = vrcp.pop %v3276
      %v3309 = vmul.f32 1.0, %v3308
      %v3310 = vrcp.pop %v3277
      %v3311 = vmul.f32 1.0, %v3310
      %v3312 = vrcp.pop %v3278
      %v3313 = vmul.f32 1.0, %v3312
      %v3314 = vrcp.pop %v3279
      %v3315 = vmul.f32 1.0, %v3314
      %v3316 = vrcp.pop %v3280
      %v3317 = vmul.f32 1.0, %v3316
      %v3318 = vrcp.pop %v3281
      %v3319 = vmul.f32 1.0, %v3318
      %v3320 = vrcp.pop %v3282
      %v3321 = vmul.f32 1.0, %v3320
      %v3322 = vrcp.pop %v3283
      %v3323 = vmul.f32 1.0, %v3322
      %v3324 = vrcp.pop %v3284
      %v3325 = vmul.f32 1.0, %v3324
      %v3326 = vrcp.pop %v3285
      %v3327 = vmul.f32 1.0, %v3326
      %v3328 = vrcp.pop %v3286
      %v3329 = vmul.f32 1.0, %v3328
      %v3330 = vrcp.pop %v3287
      %v3331 = vmul.f32 1.0, %v3330
      %v3332 = vrcp.pop %v3288
      %v3333 = vmul.f32 1.0, %v3332
      %v3334 = vrcp.pop %v3289
      %v3335 = vmul.f32 1.0, %v3334
      %v3336 = vrcp.pop %v3290
      %v3337 = vmul.f32 1.0, %v3336
      %v3338 = vrcp.pop %v3291
      %v3339 = vmul.f32 1.0, %v3338
      %v3340 = vrcp.pop %v3292
      %v3341 = vmul.f32 1.0, %v3340
      %v3342 = vrcp.pop %v3293
      %v3343 = vmul.f32 1.0, %v3342
      %v3344 = vrcp.pop %v3294
      %v3345 = vmul.f32 1.0, %v3344
      %v3346 = vrcp.pop %v3295
      %v3347 = vmul.f32 1.0, %v3346
      %v3348 = vrcp.pop %v3296
      %v3349 = vmul.f32 1.0, %v3348
      %v3350 = vrcp.pop %v3297
      %v3351 = vmul.f32 1.0, %v3350
      %v3352 = vrcp.pop %v3298
      %v3353 = vmul.f32 1.0, %v3352
      %v3354 = vrcp.pop %v3299
      %v3355 = vmul.f32 1.0, %v3354
      %v3356 = vrcp.pop %v3300
      %v3357 = vmul.f32 1.0, %v3356
      %v3358 = vrcp.pop %v3301
      %v3359 = vmul.f32 1.0, %v3358
      %v3360 = vrcp.pop %v3302
      %v3361 = vmul.f32 1.0, %v3360
      %v3362 = vrcp.pop %v3303
      %v3363 = vmul.f32 1.0, %v3362
      %v3364 = vrcp.pop %v3304
      %v3365 = vmul.f32 1.0, %v3364
      %v3366 = vrcp.pop %v3305
      %v3367 = vmul.f32 1.0, %v3366
      %v3368 = vrcp.pop %v3306
      %v3369 = vmul.f32 1.0, %v3368
      %v3370 = vrcp.pop %v3307
      %v3371 = vmul.f32 1.0, %v3370
      %3372 = vst [vmem:[%s278] sm:$0xff] %v3309
      %3373 = vst [vmem:[%s278 + $0x8] sm:$0xff] %v3311
      %3374 = vst [vmem:[%s278 + $0x10] sm:$0xff] %v3313
      %3375 = vst [vmem:[%s278 + $0x18] sm:$0xff] %v3315
      %3376 = vst [vmem:[%s278 + $0x20] sm:$0xff] %v3317
      %3377 = vst [vmem:[%s278 + $0x28] sm:$0xff] %v3319
      %3378 = vst [vmem:[%s278 + $0x30] sm:$0xff] %v3321
      %3379 = vst [vmem:[%s278 + $0x38] sm:$0xff] %v3323
      %3380 = vst [vmem:[%s278 + $0x40] sm:$0xff] %v3325
      %3381 = vst [vmem:[%s278 + $0x48] sm:$0xff] %v3327
      %3382 = vst [vmem:[%s278 + $0x50] sm:$0xff] %v3329
      %3383 = vst [vmem:[%s278 + $0x58] sm:$0xff] %v3331
      %3384 = vst [vmem:[%s278 + $0x60] sm:$0xff] %v3333
      %3385 = vst [vmem:[%s278 + $0x68] sm:$0xff] %v3335
      %3386 = vst [vmem:[%s278 + $0x70] sm:$0xff] %v3337
      %3387 = vst [vmem:[%s278 + $0x78] sm:$0xff] %v3339
      %3388 = vst [vmem:[%s278 + $0x80] sm:$0xff] %v3341
      %3389 = vst [vmem:[%s278 + $0x88] sm:$0xff] %v3343
      %3390 = vst [vmem:[%s278 + $0x90] sm:$0xff] %v3345
      %3391 = vst [vmem:[%s278 + $0x98] sm:$0xff] %v3347
      %3392 = vst [vmem:[%s278 + $0xa0] sm:$0xff] %v3349
      %3393 = vst [vmem:[%s278 + $0xa8] sm:$0xff] %v3351
      %3394 = vst [vmem:[%s278 + $0xb0] sm:$0xff] %v3353
      %3395 = vst [vmem:[%s278 + $0xb8] sm:$0xff] %v3355
      %3396 = vst [vmem:[%s278 + $0xc0] sm:$0xff] %v3357
      %3397 = vst [vmem:[%s278 + $0xc8] sm:$0xff] %v3359
      %3398 = vst [vmem:[%s278 + $0xd0] sm:$0xff] %v3361
      %3399 = vst [vmem:[%s278 + $0xd8] sm:$0xff] %v3363
      %3400 = vst [vmem:[%s278 + $0xe0] sm:$0xff] %v3365
      %3401 = vst [vmem:[%s278 + $0xe8] sm:$0xff] %v3367
      %3402 = vst [vmem:[%s278 + $0xf0] sm:$0xff] %v3369
      %3403 = vst [vmem:[%s278 + $0xf8] sm:$0xff] %v3371
      %p3404 = scmp.lt.s32.totalorder %s18, 1
      %s3405 = scalar_select %p3404, %s18, 1
      %s3406 = smul.addr %s3405, 32
      %s3407 = smul.addr %s3406, 8
      %s3408 = scalar_lea.vmem %s7, %s3407
      // Predicated region
      $region49: #{decoder_forward.3} parent=47 // pred_check
        %p3409 = pneg %p188
      $region50: #{decoder_forward.3} parent=47 // pred_check_branch
        %3411 = sbr.rel (%p3409) target = $region52
      $region51: #{decoder_forward.3} parent=47 // pred_region
        _
      $region52: #{decoder_forward.3} parent=47 // pred_fallthru
        _
    $region48: #{decoder_forward.3} parent=5 // pred_fallthru
      _
    %p3412 = scmp.le.s32.totalorder 2, %s13
    // Predicated region
    $region53: #{decoder_forward.3} parent=5 // pred_check
      %p3413 = pneg %p3412
    $region54: #{decoder_forward.3} parent=5 // pred_check_branch
      %3415 = sbr.rel (%p3413) target = $region56
    $region55: #{decoder_forward.3} parent=5 // pred_region
      %s3416 = ssub.s32 %s13, 2
      // Predicated region
      $region57: #{decoder_forward.3} parent=55 // pred_check
        %p3417 = pneg %p194
      $region58: #{decoder_forward.3} parent=55 // pred_check_branch
        %3419 = sbr.rel (%p3417) target = $region60
      $region59: #{decoder_forward.3} parent=55 // pred_region
        %p3420 = scmp.lt.s32.totalorder %s19, 1
        %s3421 = scalar_select %p3420, %s19, 1
        %s3422 = smul.addr %s3421, 32
        %s3423 = smul.addr %s3422, 8
        %s3424 = scalar_lea.vmem %s7, %s3423
      $region60: #{decoder_forward.3} parent=55 // pred_fallthru
        _
    $region56: #{decoder_forward.3} parent=5 // pred_fallthru
      _
  $region6: #{decoder_forward.3} parent=0 // loop_footer
    %s17 = sadd.s32 1, %s13
  $region7: #{decoder_forward.3} parent=0 // loop_footer_branch
    %12 = sbr.rel target = $region3
  $region8: #{decoder_forward.3} parent=0 // loop_exit
    _

</llo_original>
